<compile_context>
chip_gen: v5e
topology: v5e:2x2
jax: 0.10.0
libtpu: 0.0.40
codegen_flags: <defaults>
</compile_context>

<pallas_src>
import functools

import jax
import jax.numpy as jnp
from jax import lax
from jax.experimental import pallas as pl
from jax.experimental.pallas import tpu as pltpu

# model sizes from size_dict['small'] = [1024, 512, 256], n_classes = 2
L_IN, L_HID, L_ATT, N_CLASSES = 1024, 512, 256, 2


def _bmil_kernel(h_ref, w1_ref, b1_ref, wab_ref, bab_ref,
                 wc_ref, bc_ref, wcls_ref, bcls_ref,
                 logits_ref, probs_ref, attn_ref,
                 m_sc, l_sc, acc_sc,
                 *, n_valid, tile_n):
    k = pl.program_id(0)

    # init online-softmax state
    @pl.when(k == 0)
    def _():
        m_sc[...] = jnp.full_like(m_sc, -jnp.inf)
        l_sc[...] = jnp.zeros_like(l_sc)
        acc_sc[...] = jnp.zeros_like(acc_sc)

    # fc: Linear(1024 -> 512) + ReLU   (bf16 inputs, f32 accumulation)
    x = jnp.dot(h_ref[...], w1_ref[...],
                preferred_element_type=jnp.float32) + b1_ref[...]
    x = jnp.maximum(x, 0.0)                                          # [TN, 512] f32
    xb = x.astype(jnp.bfloat16)                                      # shared bf16 copy

    # gated attention, fused projection: [TN,512] @ [512,512] -> tanh/sigmoid halves
    ag = jnp.dot(xb, wab_ref[...],
                 preferred_element_type=jnp.float32) + bab_ref[...]  # [TN, 512] f32
    a = jnp.tanh(ag[:, :L_ATT])
    g = jax.nn.sigmoid(ag[:, L_ATT:])
    ab = a * g                                                       # [TN, 256] f32

    # attention_c: lane-dense score row [1, TN], transpose-free (contract last dims)
    scores = lax.dot_general(
        wc_ref[...], ab,
        dimension_numbers=(((1,), (1,)), ((), ())),
        preferred_element_type=jnp.float32) + bc_ref[...]            # [1, TN]

    # mask padded instances out of the softmax
    col = lax.broadcasted_iota(jnp.int32, (1, tile_n), 1) + k * tile_n
    scores = jnp.where(col < n_valid, scores, -1e30)

    # stash raw scores into the resident [1, N_pad] attention buffer
    attn_ref[:, pl.ds(pl.multiple_of(k * tile_n, 128), tile_n)] = scores

    # online-softmax accumulation of M = sum_i softmax(s)_i * x_i
    m_prev = m_sc[...]
    m_new = jnp.maximum(m_prev, jnp.max(scores, axis=-1, keepdims=True))
    alpha = jnp.exp(m_prev - m_new)
    p = jnp.exp(scores - m_new)                                      # [1, TN] f32
    l_sc[...] = alpha * l_sc[...] + jnp.sum(p, axis=-1, keepdims=True)
    acc_sc[...] = alpha * acc_sc[...] + jnp.dot(
        p.astype(jnp.bfloat16), xb, preferred_element_type=jnp.float32)
    m_sc[...] = m_new

    # finalize: normalize attention, pooled feature, classifier, class softmax
    @pl.when(k == pl.num_programs(0) - 1)
    def _():
        inv_l = 1.0 / l_sc[...]                        # exact (runs once; removes bias)
        attn_ref[...] = jnp.exp(attn_ref[...] - m_sc[...]) * inv_l   # softmax(A^T, dim=1)
        M = acc_sc[...] * inv_l                                       # [1, 512]
        logits = jnp.dot(M, wcls_ref[...],
                         preferred_element_type=jnp.float32) + bcls_ref[...]
        logits_ref[...] = logits                                      # [1, 2]
        lm = jnp.max(logits, axis=-1, keepdims=True)
        le = jnp.exp(logits - lm)
        probs_ref[...] = le / jnp.sum(le, axis=-1, keepdims=True)     # [1, 2] exact


def _round_up(x, m):
    return ((x + m - 1) // m) * m


def bmil_forward(h, params):
    """probabilistic_MIL_Bayes forward pass for one bag h: [N, 1024] float32."""
    N = h.shape[0]
    # 1024-row tiles: fewer grid steps for big bags; fits the v7x 64 MiB VMEM budget.
    tile_n = min(1024, _round_up(N, 128))         # multiple of 128 -> aligned lane writes
    num_tiles = (N + tile_n - 1) // tile_n
    n_pad = num_tiles * tile_n

    h_bf = jnp.pad(h.astype(jnp.bfloat16), ((0, n_pad - N), (0, 0)))

    const = lambda k: (0, 0)
    in_specs = [
        pl.BlockSpec((tile_n, L_IN), lambda k: (k, 0)),   # h tile (pipelined over N)
        pl.BlockSpec((L_IN, L_HID), const),               # w1   (resident)
        pl.BlockSpec((1, L_HID), const),                  # b1
        pl.BlockSpec((L_HID, 2 * L_ATT), const),          # wab = [wa | wb] fused
        pl.BlockSpec((1, 2 * L_ATT), const),              # bab = [ba | bb]
        pl.BlockSpec((1, L_ATT), const),                  # wc (row form)
        pl.BlockSpec((1, 1), const),                      # bc
        pl.BlockSpec((L_HID, N_CLASSES), const),          # wcls
        pl.BlockSpec((1, N_CLASSES), const),              # bcls
    ]
    out_specs = (
        pl.BlockSpec((1, N_CLASSES), const),              # logits
        pl.BlockSpec((1, N_CLASSES), const),              # softmax(logits)
        pl.BlockSpec((1, n_pad), const),                  # attention row (lane-dense, resident)
    )
    out_shape = (
        jax.ShapeDtypeStruct((1, N_CLASSES), jnp.float32),
        jax.ShapeDtypeStruct((1, N_CLASSES), jnp.float32),
        jax.ShapeDtypeStruct((1, n_pad), jnp.float32),
    )

    flops = (2 * n_pad * L_IN * L_HID            # fc
             + 2 * n_pad * L_HID * (2 * L_ATT)   # fused gated-attention projection
             + 2 * n_pad * L_ATT                 # scores
             + 2 * n_pad * L_HID                 # p @ x accumulation
             + 2 * L_HID * N_CLASSES)            # classifier
    transcendentals = 2 * n_pad * L_ATT + 2 * n_pad + 2 * N_CLASSES
    bytes_accessed = (n_pad * L_IN * 2                                   # h (bf16)
                      + (L_IN * L_HID + L_HID * 2 * L_ATT) * 2           # big weights (bf16)
                      + (L_HID + 2 * L_ATT + L_ATT + 1
                         + L_HID * N_CLASSES + N_CLASSES) * 4            # small f32 params
                      + (2 * N_CLASSES + n_pad) * 4)                     # outputs

    kernel = functools.partial(_bmil_kernel, n_valid=N, tile_n=tile_n)

    logits, probs, attn_row = pl.pallas_call(
        kernel,
        out_shape=out_shape,
        grid_spec=pltpu.PrefetchScalarGridSpec(
            num_scalar_prefetch=0,
            grid=(num_tiles,),
            in_specs=in_specs,
            out_specs=out_specs,
            scratch_shapes=[
                pltpu.VMEM((1, 1), jnp.float32),       # running max m
                pltpu.VMEM((1, 1), jnp.float32),       # running sum l
                pltpu.VMEM((1, L_HID), jnp.float32),   # running weighted sum (pooled M)
            ],
        ),
        compiler_params=pltpu.CompilerParams(
            dimension_semantics=("arbitrary",),         # reduction over instance tiles
            vmem_limit_bytes=48 * 1024 * 1024),         # safe on v5e/v6e/v7x; > v5e 16 MiB default
        cost_estimate=pl.CostEstimate(
            flops=flops, transcendentals=transcendentals,
            bytes_accessed=bytes_accessed),
    )(h_bf,
      params["w1"], params["b1"],
      params["wab"], params["bab"],
      params["wc"], params["bc"],
      params["wcls"], params["bcls"])

    A = attn_row[:, :N]                   # [1, N] softmax-normalized attention (lane-dense)
    y_probs = probs                       # [1, 2]

    # top_k=1 over y_probs[:, 1]: there is a single bag-level row, so the top index is 0
    # and top_instance == logits, Y_prob == y_probs (glue, not the hot path).
    top_instance = logits                 # [1, 2]
    Y_prob = y_probs                      # [1, 2]
    Y_hat = jnp.argmax(top_instance, axis=1).reshape(1, 1)
    return top_instance, Y_prob, Y_hat, y_probs, A


def init_params(key):
    ks = jax.random.split(key, 5)

    def lin(k, fan_in, fan_out):
        scale = 1.0 / jnp.sqrt(jnp.float32(fan_in))
        return scale * jax.random.normal(k, (fan_in, fan_out), jnp.float32)

    wa = lin(ks[1], L_HID, L_ATT)
    wb = lin(ks[2], L_HID, L_ATT)
    return {
        # big weights stored bf16 for the HBM->VMEM path (matmuls accumulate in f32)
        "w1":   lin(ks[0], L_IN, L_HID).astype(jnp.bfloat16),
        "b1":   jnp.zeros((1, L_HID), jnp.float32),
        # fused gated-attention projection: [wa | wb] -> one [512, 512] matmul
        "wab":  jnp.concatenate([wa, wb], axis=1).astype(jnp.bfloat16),
        "bab":  jnp.zeros((1, 2 * L_ATT), jnp.float32),
        # attention_c weight as a lane-dense [1, 256] row (torch: Linear(256, 1))
        "wc":   lin(ks[3], L_ATT, 1).T,
        "bc":   jnp.zeros((1, 1), jnp.float32),
        "wcls": lin(ks[4], L_HID, N_CLASSES),             # tiny -> keep f32
        "bcls": jnp.zeros((1, N_CLASSES), jnp.float32),
    }


if __name__ == "__main__":
    key = jax.random.PRNGKey(0)
    k_h, k_p = jax.random.split(key)

    N = 64  # number of instances in the bag
    h = jax.random.normal(k_h, (N, L_IN), jnp.float32)
    params = init_params(k_p)

    fwd = jax.jit(bmil_forward)
    top_instance, Y_prob, Y_hat, y_probs, A = fwd(h, params)
    jax.block_until_ready((top_instance, Y_prob, Y_hat, y_probs, A))

    assert top_instance.shape == (1, N_CLASSES)
    assert Y_prob.shape == (1, N_CLASSES)
    assert Y_hat.shape == (1, 1)
    assert y_probs.shape == (1, N_CLASSES)
    assert A.shape == (1, N)
    assert bool(jnp.all(jnp.isfinite(A)))
    assert abs(float(jnp.sum(A)) - 1.0) < 1e-3          # attention softmax over instances
    assert abs(float(jnp.sum(Y_prob)) - 1.0) < 1e-3     # class softmax

    print("KERNEL_OK")
</pallas_src>

<mosaic_0001>
module attributes {stable_mosaic.version = 11 : i64} {
  func.func @_bmil_kernel(%arg0: i32, %arg1: memref<128x1024xbf16, #tpu.memory_space<vmem>>, %arg2: memref<1024x512xbf16, #tpu.memory_space<vmem>>, %arg3: memref<1x512xf32, #tpu.memory_space<vmem>>, %arg4: memref<512x512xbf16, #tpu.memory_space<vmem>>, %arg5: memref<1x512xf32, #tpu.memory_space<vmem>>, %arg6: memref<1x256xf32, #tpu.memory_space<vmem>>, %arg7: memref<1x1xf32, #tpu.memory_space<vmem>>, %arg8: memref<512x2xf32, #tpu.memory_space<vmem>>, %arg9: memref<1x2xf32, #tpu.memory_space<vmem>>, %arg10: memref<1x2xf32, #tpu.memory_space<vmem>>, %arg11: memref<1x2xf32, #tpu.memory_space<vmem>>, %arg12: memref<1x128xf32, #tpu.memory_space<vmem>>, %arg13: memref<1x1xf32, #tpu.memory_space<vmem>>, %arg14: memref<1x1xf32, #tpu.memory_space<vmem>>, %arg15: memref<1x512xf32, #tpu.memory_space<vmem>>) attributes {dimension_semantics = [#tpu.dimension_semantics<arbitrary>], iteration_bounds = array<i64: 1>, scalar_prefetch = 0 : i64, scratch_operands = 3 : i64, tpu.core_type = #tpu.core_type<tc>, window_params = [{transform_indices = @transform_0, window_bounds = array<i64: 128, 1024>}, {pipeline_mode = #tpu.pipeline_mode<synchronous>, transform_indices = @transform_1, window_bounds = array<i64: 1024, 512>}, {pipeline_mode = #tpu.pipeline_mode<synchronous>, transform_indices = @transform_2, window_bounds = array<i64: 1, 512>}, {pipeline_mode = #tpu.pipeline_mode<synchronous>, transform_indices = @transform_3, window_bounds = array<i64: 512, 512>}, {pipeline_mode = #tpu.pipeline_mode<synchronous>, transform_indices = @transform_4, window_bounds = array<i64: 1, 512>}, {pipeline_mode = #tpu.pipeline_mode<synchronous>, transform_indices = @transform_5, window_bounds = array<i64: 1, 256>}, {pipeline_mode = #tpu.pipeline_mode<synchronous>, transform_indices = @transform_6, window_bounds = array<i64: 1, 1>}, {pipeline_mode = #tpu.pipeline_mode<synchronous>, transform_indices = @transform_7, window_bounds = array<i64: 512, 2>}, {pipeline_mode = #tpu.pipeline_mode<synchronous>, transform_indices = @transform_8, window_bounds = array<i64: 1, 2>}, {pipeline_mode = #tpu.pipeline_mode<synchronous>, transform_indices = @transform_9, window_bounds = array<i64: 1, 2>}, {pipeline_mode = #tpu.pipeline_mode<synchronous>, transform_indices = @transform_10, window_bounds = array<i64: 1, 2>}, {pipeline_mode = #tpu.pipeline_mode<synchronous>, transform_indices = @transform_11, window_bounds = array<i64: 1, 128>}]} {
    %c0_i32 = arith.constant 0 : i32
    %0 = arith.cmpi eq, %arg0, %c0_i32 : i32
    %1 = arith.extui %0 : i1 to i32
    %c0_i32_0 = arith.constant 0 : i32
    %2 = arith.cmpi ne, %1, %c0_i32_0 : i32
    scf.if %2 {
      %cst_38 = arith.constant 0xFF800000 : f32
      %69 = vector.broadcast %cst_38 : f32 to vector<1x1xf32>
      %c0_39 = arith.constant 0 : index
      %c0_40 = arith.constant 0 : index
      %70 = vector.load %arg13[%c0_39, %c0_40] : memref<1x1xf32, #tpu.memory_space<vmem>>, vector<1x1xf32>
      tpu.vector_store %arg13[%c0_39, %c0_40], %69 {strides = array<i32>} : memref<1x1xf32, #tpu.memory_space<vmem>>, vector<1x1xf32>,
      %cst_41 = arith.constant 0.000000e+00 : f32
      %71 = vector.broadcast %cst_41 : f32 to vector<1x1xf32>
      %c0_42 = arith.constant 0 : index
      %c0_43 = arith.constant 0 : index
      %72 = vector.load %arg14[%c0_42, %c0_43] : memref<1x1xf32, #tpu.memory_space<vmem>>, vector<1x1xf32>
      tpu.vector_store %arg14[%c0_42, %c0_43], %71 {strides = array<i32>} : memref<1x1xf32, #tpu.memory_space<vmem>>, vector<1x1xf32>,
      %cst_44 = arith.constant 0.000000e+00 : f32
      %73 = vector.broadcast %cst_44 : f32 to vector<1x512xf32>
      %c0_45 = arith.constant 0 : index
      %c0_46 = arith.constant 0 : index
      %74 = vector.load %arg15[%c0_45, %c0_46] : memref<1x512xf32, #tpu.memory_space<vmem>>, vector<1x512xf32>
      tpu.vector_store %arg15[%c0_45, %c0_46], %73 {strides = array<i32>} : memref<1x512xf32, #tpu.memory_space<vmem>>, vector<1x512xf32>,
    } else {
    }
    %c0 = arith.constant 0 : index
    %c0_1 = arith.constant 0 : index
    %3 = vector.load %arg1[%c0, %c0_1] : memref<128x1024xbf16, #tpu.memory_space<vmem>>, vector<128x1024xbf16>
    %c0_2 = arith.constant 0 : index
    %c0_3 = arith.constant 0 : index
    %4 = vector.load %arg2[%c0_2, %c0_3] : memref<1024x512xbf16, #tpu.memory_space<vmem>>, vector<1024x512xbf16>
    %cst = arith.constant dense<0.000000e+00> : vector<128x512xf32>
    %5 = tpu.matmul %3, %4, %cst {dimension_numbers = #tpu.dot_dimension_numbers<[1], [0], [0], [1], [0, 0, 1, 1], [], []>} : vector<128x1024xbf16>, vector<1024x512xbf16>, vector<128x512xf32> -> vector<128x512xf32>
    %c0_4 = arith.constant 0 : index
    %c0_5 = arith.constant 0 : index
    %6 = vector.load %arg3[%c0_4, %c0_5] : memref<1x512xf32, #tpu.memory_space<vmem>>, vector<1x512xf32>
    %7 = vector.broadcast %6 : vector<1x512xf32> to vector<128x512xf32>
    %8 = arith.addf %5, %7 : vector<128x512xf32>
    %cst_6 = arith.constant 0.000000e+00 : f32
    %9 = vector.broadcast %cst_6 : f32 to vector<128x512xf32>
    %10 = arith.maximumf %8, %9 : vector<128x512xf32>
    %11 = arith.truncf %10 : vector<128x512xf32> to vector<128x512xbf16>
    %c0_7 = arith.constant 0 : index
    %c0_8 = arith.constant 0 : index
    %12 = vector.load %arg4[%c0_7, %c0_8] : memref<512x512xbf16, #tpu.memory_space<vmem>>, vector<512x512xbf16>
    %cst_9 = arith.constant dense<0.000000e+00> : vector<128x512xf32>
    %13 = tpu.matmul %11, %12, %cst_9 {dimension_numbers = #tpu.dot_dimension_numbers<[1], [0], [0], [1], [0, 0, 1, 1], [], []>} : vector<128x512xbf16>, vector<512x512xbf16>, vector<128x512xf32> -> vector<128x512xf32>
    %c0_10 = arith.constant 0 : index
    %c0_11 = arith.constant 0 : index
    %14 = vector.load %arg5[%c0_10, %c0_11] : memref<1x512xf32, #tpu.memory_space<vmem>>, vector<1x512xf32>
    %15 = vector.broadcast %14 : vector<1x512xf32> to vector<128x512xf32>
    %16 = arith.addf %13, %15 : vector<128x512xf32>
    %17 = vector.extract_strided_slice %16 {offsets = [0, 0], sizes = [128, 256], strides = [1, 1]} : vector<128x512xf32> to vector<128x256xf32>
    %18 = math.tanh %17 : vector<128x256xf32>
    %19 = vector.extract_strided_slice %16 {offsets = [0, 256], sizes = [128, 256], strides = [1, 1]} : vector<128x512xf32> to vector<128x256xf32>
    %20 = arith.negf %19 : vector<128x256xf32>
    %21 = math.exp %20 : vector<128x256xf32>
    %cst_12 = arith.constant 1.000000e+00 : f32
    %22 = vector.broadcast %cst_12 : f32 to vector<128x256xf32>
    %23 = arith.addf %22, %21 : vector<128x256xf32>
    %24 = arith.divf %22, %23 : vector<128x256xf32>
    %25 = arith.mulf %18, %24 : vector<128x256xf32>
    %c0_13 = arith.constant 0 : index
    %c0_14 = arith.constant 0 : index
    %26 = vector.load %arg6[%c0_13, %c0_14] : memref<1x256xf32, #tpu.memory_space<vmem>>, vector<1x256xf32>
    %cst_15 = arith.constant dense<0.000000e+00> : vector<1x128xf32>
    %27 = tpu.matmul %26, %25, %cst_15 {dimension_numbers = #tpu.dot_dimension_numbers<[1], [1], [0], [0], [0, 0, 1, 0], [], []>} : vector<1x256xf32>, vector<128x256xf32>, vector<1x128xf32> -> vector<1x128xf32>
    %c0_16 = arith.constant 0 : index
    %c0_17 = arith.constant 0 : index
    %28 = vector.load %arg7[%c0_16, %c0_17] : memref<1x1xf32, #tpu.memory_space<vmem>>, vector<1x1xf32>
    %29 = vector.broadcast %28 : vector<1x1xf32> to vector<1x128xf32>
    %30 = arith.addf %27, %29 : vector<1x128xf32>
    %31 = tpu.iota {dimensions = array<i32: 1>} : vector<1x128xi32>
    %c128_i32 = arith.constant 128 : i32
    %32 = arith.muli %arg0, %c128_i32 : i32
    %33 = vector.broadcast %32 : i32 to vector<1x128xi32>
    %34 = arith.addi %31, %33 : vector<1x128xi32>
    %c64_i32 = arith.constant 64 : i32
    %35 = vector.broadcast %c64_i32 : i32 to vector<1x128xi32>
    %36 = arith.cmpi slt, %34, %35 : vector<1x128xi32>
    %cst_18 = arith.constant -1.000000e+30 : f32
    %37 = vector.broadcast %cst_18 : f32 to vector<1x128xf32>
    %38 = arith.select %36, %30, %37 : vector<1x128xi1>, vector<1x128xf32>
    %c128_i32_19 = arith.constant 128 : i32
    %39 = arith.muli %arg0, %c128_i32_19 : i32
    %40 = tpu.assume_multiple %39, 128 : i32
    %c0_20 = arith.constant 0 : index
    %41 = arith.index_cast %40 : i32 to index
    %42 = vector.load %arg12[%c0_20, %41] : memref<1x128xf32, #tpu.memory_space<vmem>>, vector<1x128xf32>
    tpu.vector_store %arg12[%c0_20, %41], %38 {strides = array<i32>} : memref<1x128xf32, #tpu.memory_space<vmem>>, vector<1x128xf32>,
    %c0_21 = arith.constant 0 : index
    %c0_22 = arith.constant 0 : index
    %43 = vector.load %arg13[%c0_21, %c0_22] : memref<1x1xf32, #tpu.memory_space<vmem>>, vector<1x1xf32>
    %cst_23 = arith.constant dense<0xFF800000> : vector<1xf32>
    %44 = vector.multi_reduction <maximumf>, %38, %cst_23 [1] : vector<1x128xf32> to vector<1xf32>
    %45 = vector.shape_cast %44 : vector<1xf32> to vector<1x1xf32>
    %46 = arith.maximumf %43, %45 : vector<1x1xf32>
    %47 = arith.subf %43, %46 : vector<1x1xf32>
    %48 = math.exp %47 : vector<1x1xf32>
    %49 = vector.broadcast %46 : vector<1x1xf32> to vector<1x128xf32>
    %50 = arith.subf %38, %49 : vector<1x128xf32>
    %51 = math.exp %50 : vector<1x128xf32>
    %c0_24 = arith.constant 0 : index
    %c0_25 = arith.constant 0 : index
    %52 = vector.load %arg14[%c0_24, %c0_25] : memref<1x1xf32, #tpu.memory_space<vmem>>, vector<1x1xf32>
    %53 = arith.mulf %48, %52 : vector<1x1xf32>
    %cst_26 = arith.constant dense<0.000000e+00> : vector<1xf32>
    %54 = vector.multi_reduction <add>, %51, %cst_26 [1] : vector<1x128xf32> to vector<1xf32>
    %55 = vector.shape_cast %54 : vector<1xf32> to vector<1x1xf32>
    %56 = arith.addf %53, %55 : vector<1x1xf32>
    %c0_27 = arith.constant 0 : index
    %c0_28 = arith.constant 0 : index
    %57 = vector.load %arg14[%c0_27, %c0_28] : memref<1x1xf32, #tpu.memory_space<vmem>>, vector<1x1xf32>
    tpu.vector_store %arg14[%c0_27, %c0_28], %56 {strides = array<i32>} : memref<1x1xf32, #tpu.memory_space<vmem>>, vector<1x1xf32>,
    %c0_29 = arith.constant 0 : index
    %c0_30 = arith.constant 0 : index
    %58 = vector.load %arg15[%c0_29, %c0_30] : memref<1x512xf32, #tpu.memory_space<vmem>>, vector<1x512xf32>
    %59 = vector.broadcast %48 : vector<1x1xf32> to vector<1x512xf32>
    %60 = arith.mulf %59, %58 : vector<1x512xf32>
    %61 = arith.truncf %51 : vector<1x128xf32> to vector<1x128xbf16>
    %cst_31 = arith.constant dense<0.000000e+00> : vector<1x512xf32>
    %62 = tpu.matmul %61, %11, %cst_31 {dimension_numbers = #tpu.dot_dimension_numbers<[1], [0], [0], [1], [0, 0, 1, 1], [], []>} : vector<1x128xbf16>, vector<128x512xbf16>, vector<1x512xf32> -> vector<1x512xf32>
    %63 = arith.addf %60, %62 : vector<1x512xf32>
    %c0_32 = arith.constant 0 : index
    %c0_33 = arith.constant 0 : index
    %64 = vector.load %arg15[%c0_32, %c0_33] : memref<1x512xf32, #tpu.memory_space<vmem>>, vector<1x512xf32>
    tpu.vector_store %arg15[%c0_32, %c0_33], %63 {strides = array<i32>} : memref<1x512xf32, #tpu.memory_space<vmem>>, vector<1x512xf32>,
    %c0_34 = arith.constant 0 : index
    %c0_35 = arith.constant 0 : index
    %65 = vector.load %arg13[%c0_34, %c0_35] : memref<1x1xf32, #tpu.memory_space<vmem>>, vector<1x1xf32>
    tpu.vector_store %arg13[%c0_34, %c0_35], %46 {strides = array<i32>} : memref<1x1xf32, #tpu.memory_space<vmem>>, vector<1x1xf32>,
    %c0_i32_36 = arith.constant 0 : i32
    %66 = arith.cmpi eq, %arg0, %c0_i32_36 : i32
    %67 = arith.extui %66 : i1 to i32
    %c0_i32_37 = arith.constant 0 : i32
    %68 = arith.cmpi ne, %67, %c0_i32_37 : i32
    scf.if %68 {
      %c0_38 = arith.constant 0 : index
      %c0_39 = arith.constant 0 : index
      %69 = vector.load %arg14[%c0_38, %c0_39] : memref<1x1xf32, #tpu.memory_space<vmem>>, vector<1x1xf32>
      %cst_40 = arith.constant 1.000000e+00 : f32
      %70 = vector.broadcast %cst_40 : f32 to vector<1x1xf32>
      %71 = arith.divf %70, %69 : vector<1x1xf32>
      %c0_41 = arith.constant 0 : index
      %c0_42 = arith.constant 0 : index
      %72 = vector.load %arg12[%c0_41, %c0_42] : memref<1x128xf32, #tpu.memory_space<vmem>>, vector<1x128xf32>
      %c0_43 = arith.constant 0 : index
      %c0_44 = arith.constant 0 : index
      %73 = vector.load %arg13[%c0_43, %c0_44] : memref<1x1xf32, #tpu.memory_space<vmem>>, vector<1x1xf32>
      %74 = vector.broadcast %73 : vector<1x1xf32> to vector<1x128xf32>
      %75 = arith.subf %72, %74 : vector<1x128xf32>
      %76 = math.exp %75 : vector<1x128xf32>
      %77 = vector.broadcast %71 : vector<1x1xf32> to vector<1x128xf32>
      %78 = arith.mulf %76, %77 : vector<1x128xf32>
      %c0_45 = arith.constant 0 : index
      %c0_46 = arith.constant 0 : index
      %79 = vector.load %arg12[%c0_45, %c0_46] : memref<1x128xf32, #tpu.memory_space<vmem>>, vector<1x128xf32>
      tpu.vector_store %arg12[%c0_45, %c0_46], %78 {strides = array<i32>} : memref<1x128xf32, #tpu.memory_space<vmem>>, vector<1x128xf32>,
      %c0_47 = arith.constant 0 : index
      %c0_48 = arith.constant 0 : index
      %80 = vector.load %arg15[%c0_47, %c0_48] : memref<1x512xf32, #tpu.memory_space<vmem>>, vector<1x512xf32>
      %81 = vector.broadcast %71 : vector<1x1xf32> to vector<1x512xf32>
      %82 = arith.mulf %80, %81 : vector<1x512xf32>
      %c0_49 = arith.constant 0 : index
      %c0_50 = arith.constant 0 : index
      %83 = vector.load %arg8[%c0_49, %c0_50] : memref<512x2xf32, #tpu.memory_space<vmem>>, vector<512x2xf32>
      %cst_51 = arith.constant dense<0.000000e+00> : vector<1x2xf32>
      %84 = tpu.matmul %82, %83, %cst_51 {dimension_numbers = #tpu.dot_dimension_numbers<[1], [0], [0], [1], [0, 0, 1, 1], [], []>} : vector<1x512xf32>, vector<512x2xf32>, vector<1x2xf32> -> vector<1x2xf32>
      %c0_52 = arith.constant 0 : index
      %c0_53 = arith.constant 0 : index
      %85 = vector.load %arg9[%c0_52, %c0_53] : memref<1x2xf32, #tpu.memory_space<vmem>>, vector<1x2xf32>
      %86 = arith.addf %84, %85 : vector<1x2xf32>
      %c0_54 = arith.constant 0 : index
      %c0_55 = arith.constant 0 : index
      %87 = vector.load %arg10[%c0_54, %c0_55] : memref<1x2xf32, #tpu.memory_space<vmem>>, vector<1x2xf32>
      tpu.vector_store %arg10[%c0_54, %c0_55], %86 {strides = array<i32>} : memref<1x2xf32, #tpu.memory_space<vmem>>, vector<1x2xf32>,
      %cst_56 = arith.constant dense<0xFF800000> : vector<1xf32>
      %88 = vector.multi_reduction <maximumf>, %86, %cst_56 [1] : vector<1x2xf32> to vector<1xf32>
      %89 = vector.shape_cast %88 : vector<1xf32> to vector<1x1xf32>
      %90 = vector.broadcast %89 : vector<1x1xf32> to vector<1x2xf32>
      %91 = arith.subf %86, %90 : vector<1x2xf32>
      %92 = math.exp %91 : vector<1x2xf32>
      %cst_57 = arith.constant dense<0.000000e+00> : vector<1xf32>
      %93 = vector.multi_reduction <add>, %92, %cst_57 [1] : vector<1x2xf32> to vector<1xf32>
      %94 = vector.shape_cast %93 : vector<1xf32> to vector<1x1xf32>
      %95 = vector.broadcast %94 : vector<1x1xf32> to vector<1x2xf32>
      %96 = arith.divf %92, %95 : vector<1x2xf32>
      %c0_58 = arith.constant 0 : index
      %c0_59 = arith.constant 0 : index
      %97 = vector.load %arg11[%c0_58, %c0_59] : memref<1x2xf32, #tpu.memory_space<vmem>>, vector<1x2xf32>
      tpu.vector_store %arg11[%c0_58, %c0_59], %96 {strides = array<i32>} : memref<1x2xf32, #tpu.memory_space<vmem>>, vector<1x2xf32>,
    } else {
    }
    return
  }
  func.func @transform_0(%arg0: i32) -> (i32, i32) {
    %c0_i32 = arith.constant 0 : i32
    %c0_i32_0 = arith.constant 0 : i32
    return %arg0, %c0_i32 : i32, i32
  }
  func.func @transform_1(%arg0: i32) -> (i32, i32) {
    %c0_i32 = arith.constant 0 : i32
    %c0_i32_0 = arith.constant 0 : i32
    %c0_i32_1 = arith.constant 0 : i32
    return %c0_i32, %c0_i32_0 : i32, i32
  }
  func.func @transform_2(%arg0: i32) -> (i32, i32) {
    %c0_i32 = arith.constant 0 : i32
    %c0_i32_0 = arith.constant 0 : i32
    %c0_i32_1 = arith.constant 0 : i32
    return %c0_i32, %c0_i32_0 : i32, i32
  }
  func.func @transform_3(%arg0: i32) -> (i32, i32) {
    %c0_i32 = arith.constant 0 : i32
    %c0_i32_0 = arith.constant 0 : i32
    %c0_i32_1 = arith.constant 0 : i32
    return %c0_i32, %c0_i32_0 : i32, i32
  }
  func.func @transform_4(%arg0: i32) -> (i32, i32) {
    %c0_i32 = arith.constant 0 : i32
    %c0_i32_0 = arith.constant 0 : i32
    %c0_i32_1 = arith.constant 0 : i32
    return %c0_i32, %c0_i32_0 : i32, i32
  }
  func.func @transform_5(%arg0: i32) -> (i32, i32) {
    %c0_i32 = arith.constant 0 : i32
    %c0_i32_0 = arith.constant 0 : i32
    %c0_i32_1 = arith.constant 0 : i32
    return %c0_i32, %c0_i32_0 : i32, i32
  }
  func.func @transform_6(%arg0: i32) -> (i32, i32) {
    %c0_i32 = arith.constant 0 : i32
    %c0_i32_0 = arith.constant 0 : i32
    %c0_i32_1 = arith.constant 0 : i32
    return %c0_i32, %c0_i32_0 : i32, i32
  }
  func.func @transform_7(%arg0: i32) -> (i32, i32) {
    %c0_i32 = arith.constant 0 : i32
    %c0_i32_0 = arith.constant 0 : i32
    %c0_i32_1 = arith.constant 0 : i32
    return %c0_i32, %c0_i32_0 : i32, i32
  }
  func.func @transform_8(%arg0: i32) -> (i32, i32) {
    %c0_i32 = arith.constant 0 : i32
    %c0_i32_0 = arith.constant 0 : i32
    %c0_i32_1 = arith.constant 0 : i32
    return %c0_i32, %c0_i32_0 : i32, i32
  }
  func.func @transform_9(%arg0: i32) -> (i32, i32) {
    %c0_i32 = arith.constant 0 : i32
    %c0_i32_0 = arith.constant 0 : i32
    %c0_i32_1 = arith.constant 0 : i32
    return %c0_i32, %c0_i32_0 : i32, i32
  }
  func.func @transform_10(%arg0: i32) -> (i32, i32) {
    %c0_i32 = arith.constant 0 : i32
    %c0_i32_0 = arith.constant 0 : i32
    %c0_i32_1 = arith.constant 0 : i32
    return %c0_i32, %c0_i32_0 : i32, i32
  }
  func.func @transform_11(%arg0: i32) -> (i32, i32) {
    %c0_i32 = arith.constant 0 : i32
    %c0_i32_0 = arith.constant 0 : i32
    %c0_i32_1 = arith.constant 0 : i32
    return %c0_i32, %c0_i32_0 : i32, i32
  }
}

</mosaic_0001>

<llo_original>
// kernel: bmil_forward.1
$region0: #{bmil_forward.1}
  #allocation0 [shape = 'u32[]', space=smem, size = 0x4, offset = 0x4, fixed_abs, tag = 'smem constant byte address 0x4 - core index']
  #allocation1 [shape = 'u32[72,128]{1,0:T(1,128)}', space=vmem, size = 0x9000, scoped, tag = 'internal scratch']
  #allocation2 [shape = 'f32[1,1]{1,0:T(1,128)}', space=vmem, size = 0x200, scoped, tag = 'scratch operand']
  #allocation3 [shape = 'f32[1,1]{1,0:T(1,128)}', space=vmem, size = 0x200, scoped, tag = 'scratch operand']
  #allocation4 [shape = 'f32[1,512]{1,0:T(1,128)}', space=vmem, size = 0x800, scoped, tag = 'scratch operand']
  #allocation5 [shape = 'f32[1,1]{1,0:T(1,128)S(1)}', space=vmem, size = 0x200, scoped, tag = 'scoped memory for bmil_forward.1']
  %s0 = inlined_call_operand.vmem [shape: bf16[128,1024], index: 0, kind: input, shape index: {}]
  %s1 = inlined_call_operand.vmem [shape: bf16[1024,512], index: 1, kind: input, shape index: {}]
  %s2 = inlined_call_operand.vmem [shape: f32[1,512], index: 2, kind: input, shape index: {}]
  %s3 = inlined_call_operand.hbm [shape: bf16[512,512], index: 3, kind: input, shape index: {}]
  %s4 = inlined_call_operand.vmem [shape: f32[1,512], index: 4, kind: input, shape index: {}]
  %s5 = inlined_call_operand.vmem [shape: f32[1,256], index: 5, kind: input, shape index: {}]
  %s6 = inlined_call_operand.<no memory space> [shape: f32[1,1], index: 6, kind: input, shape index: {}]
  %s7 = inlined_call_operand.vmem [shape: f32[512,2], index: 7, kind: input, shape index: {}]
  %s8 = inlined_call_operand.vmem [shape: f32[1,2], index: 8, kind: input, shape index: {}]
  %s9 = inlined_call_operand.vmem [shape: f32[1,2], index: 9, kind: output, shape index: {0}]
  %s10 = inlined_call_operand.vmem [shape: f32[1,2], index: 10, kind: output, shape index: {1}]
  %s11 = inlined_call_operand.hbm [shape: f32[1,128], index: 11, kind: output, shape index: {2}]
  %12 = xla_tuple %s9, %s10, %s11
  %s13 = sld [smem:[#allocation0]]
  $region74: #{bmil_forward.1} parent=0
    _
  %s15 = ssub.s32 1, %s13
  %s16 = scalar_select 0, %s15, %s13
  %v17 = vstv %s6
  %18 = vst [vmem:[#allocation5] sm:$0x1] %v17
  $region1: #{bmil_forward.1} parent=0
    #allocation6 [shape = 'u8[524288]{0}', space=vmem, size = 0x80000, scoped, tag = 'input window, operand 3, single buffered']
    #allocation7 [shape = 's32[1]{0}', space=sflag, size = 0x4, scoped, tag = 'scoped memory for bmil_forward.1']
    #allocation8 [shape = 's32[1]{0}', space=sflag, size = 0x4, scoped, tag = 'scoped memory for bmil_forward.1']
    #allocation9 [shape = 'u8[512]{0}', space=vmem, size = 0x400, scoped, tag = 'output window, operand 2, single buffered']
    %19 = vsyncpa [#allocation7], 0
    %20 = vsyncpa [#allocation8], 0
    // Predicated region
    $region2: #{bmil_forward.1} parent=1 // pred_check
      _
    $region3: #{bmil_forward.1} parent=1 // pred_check_branch
      %22 = sbr.rel (0) target = $region5
    $region4: #{bmil_forward.1} parent=1 // pred_region
      _
    $region5: #{bmil_forward.1} parent=1 // pred_fallthru
      _
    // Predicated region
    $region6: #{bmil_forward.1} parent=1 // pred_check
      _
    $region7: #{bmil_forward.1} parent=1 // pred_check_branch
      %24 = sbr.rel (0) target = $region9
    $region8: #{bmil_forward.1} parent=1 // pred_region
      _
    $region9: #{bmil_forward.1} parent=1 // pred_fallthru
      _
    // Predicated region
    $region10: #{bmil_forward.1} parent=1 // pred_check
      _
    $region11: #{bmil_forward.1} parent=1 // pred_check_branch
      %26 = sbr.rel (0) target = $region13
    $region12: #{bmil_forward.1} parent=1 // pred_region
      _
    $region13: #{bmil_forward.1} parent=1 // pred_fallthru
      _
    // Predicated region
    $region14: #{bmil_forward.1} parent=1 // pred_check
      _
    $region15: #{bmil_forward.1} parent=1 // pred_check_branch
      %28 = sbr.rel (0) target = $region17
    $region16: #{bmil_forward.1} parent=1 // pred_region
      %30 = vsyncadd [#allocation7], 0
      %s31 = sshll.u32 %s3, 4
      %s32 = int_to_ptr.hbm [resolvable:$true] %s31
      %s33 = sshll.u32 [#allocation6], 4
      %s34 = int_to_ptr.vmem [resolvable:$true] %s33
      %39 = dma.hbm_to_vmem [thread:$0]  %s32, 16384, %s34, [#allocation7], 256, 256, 16
    $region17: #{bmil_forward.1} parent=1 // pred_fallthru
      _
    // Predicated region
    $region18: #{bmil_forward.1} parent=1 // pred_check
      _
    $region19: #{bmil_forward.1} parent=1 // pred_check_branch
      %41 = sbr.rel (0) target = $region21
    $region20: #{bmil_forward.1} parent=1 // pred_region
      _
    $region21: #{bmil_forward.1} parent=1 // pred_fallthru
      _
    // Predicated region
    $region22: #{bmil_forward.1} parent=1 // pred_check
      _
    $region23: #{bmil_forward.1} parent=1 // pred_check_branch
      %43 = sbr.rel (0) target = $region25
    $region24: #{bmil_forward.1} parent=1 // pred_region
      _
    $region25: #{bmil_forward.1} parent=1 // pred_fallthru
      _
    // Predicated region
    $region26: #{bmil_forward.1} parent=1 // pred_check
      _
    $region27: #{bmil_forward.1} parent=1 // pred_check_branch
      %45 = sbr.rel (0) target = $region29
    $region28: #{bmil_forward.1} parent=1 // pred_region
      _
    $region29: #{bmil_forward.1} parent=1 // pred_fallthru
      _
    // Predicated region
    $region30: #{bmil_forward.1} parent=1 // pred_check
      _
    $region31: #{bmil_forward.1} parent=1 // pred_check_branch
      %47 = sbr.rel (0) target = $region33
    $region32: #{bmil_forward.1} parent=1 // pred_region
      _
    $region33: #{bmil_forward.1} parent=1 // pred_fallthru
      _
    // Predicated region
    $region34: #{bmil_forward.1} parent=1 // pred_check
      _
    $region35: #{bmil_forward.1} parent=1 // pred_check_branch
      %49 = sbr.rel (0) target = $region37
    $region36: #{bmil_forward.1} parent=1 // pred_region
      _
    $region37: #{bmil_forward.1} parent=1 // pred_fallthru
      _
    // Predicated region
    $region38: #{bmil_forward.1} parent=1 // pred_check
      _
    $region39: #{bmil_forward.1} parent=1 // pred_check_branch
      %51 = sbr.rel (0) target = $region41
    $region40: #{bmil_forward.1} parent=1 // pred_region
      %53 = dma.done [#allocation7], 16384
    $region41: #{bmil_forward.1} parent=1 // pred_fallthru
      _
    %p54 = scmp.eq.s32.totalorder 0, 0
    // Predicated region
    $region42: #{bmil_forward.1} parent=1 // pred_check
      %p55 = pneg %p54
    $region43: #{bmil_forward.1} parent=1 // pred_check_branch
      %57 = sbr.rel (%p55) target = $region45
    $region44: #{bmil_forward.1} parent=1 // pred_region
      %vm58 = vcmask 0
      %59 = vst.msk [vmem:[#allocation2] sm:$0x1] %vm58, -inf
      %60 = vst.msk [vmem:[#allocation3] sm:$0x1] %vm58, 0.0
      %v61 = vlaneseq
      %vm62 = vcmp.ge.s32.totalorder %v61, 0
      %vm63 = vcmp.lt.s32.totalorder %v61, 512
      %vm64 = vmand %vm62, %vm63
      %65 = vst.msk [vmem:[#allocation4] sm:$0xf] %vm64, 0.0
    $region45: #{bmil_forward.1} parent=1 // pred_fallthru
      _
    %v66 = vld [vmem:[%s0] sm:$0xff]
    %v67 = vld [vmem:[%s0 + $0x8] sm:$0xff]
    %v68 = vld [vmem:[%s0 + $0x10] sm:$0xff]
    %v69 = vld [vmem:[%s0 + $0x18] sm:$0xff]
    %v70 = vld [vmem:[%s0 + $0x20] sm:$0xff]
    %v71 = vld [vmem:[%s0 + $0x28] sm:$0xff]
    %v72 = vld [vmem:[%s0 + $0x30] sm:$0xff]
    %v73 = vld [vmem:[%s0 + $0x38] sm:$0xff]
    %v74 = vld [vmem:[%s0 + $0x40] sm:$0xff]
    %v75 = vld [vmem:[%s0 + $0x48] sm:$0xff]
    %v76 = vld [vmem:[%s0 + $0x50] sm:$0xff]
    %v77 = vld [vmem:[%s0 + $0x58] sm:$0xff]
    %v78 = vld [vmem:[%s0 + $0x60] sm:$0xff]
    %v79 = vld [vmem:[%s0 + $0x68] sm:$0xff]
    %v80 = vld [vmem:[%s0 + $0x70] sm:$0xff]
    %v81 = vld [vmem:[%s0 + $0x78] sm:$0xff]
    %v82 = vld [vmem:[%s0 + $0x80] sm:$0xff]
    %v83 = vld [vmem:[%s0 + $0x88] sm:$0xff]
    %v84 = vld [vmem:[%s0 + $0x90] sm:$0xff]
    %v85 = vld [vmem:[%s0 + $0x98] sm:$0xff]
    %v86 = vld [vmem:[%s0 + $0xa0] sm:$0xff]
    %v87 = vld [vmem:[%s0 + $0xa8] sm:$0xff]
    %v88 = vld [vmem:[%s0 + $0xb0] sm:$0xff]
    %v89 = vld [vmem:[%s0 + $0xb8] sm:$0xff]
    %v90 = vld [vmem:[%s0 + $0xc0] sm:$0xff]
    %v91 = vld [vmem:[%s0 + $0xc8] sm:$0xff]
    %v92 = vld [vmem:[%s0 + $0xd0] sm:$0xff]
    %v93 = vld [vmem:[%s0 + $0xd8] sm:$0xff]
    %v94 = vld [vmem:[%s0 + $0xe0] sm:$0xff]
    %v95 = vld [vmem:[%s0 + $0xe8] sm:$0xff]
    %v96 = vld [vmem:[%s0 + $0xf0] sm:$0xff]
    %v97 = vld [vmem:[%s0 + $0xf8] sm:$0xff]
    %v98 = vld [vmem:[%s0 + $0x100] sm:$0xff]
    %v99 = vld [vmem:[%s0 + $0x108] sm:$0xff]
    %v100 = vld [vmem:[%s0 + $0x110] sm:$0xff]
    %v101 = vld [vmem:[%s0 + $0x118] sm:$0xff]
    %v102 = vld [vmem:[%s0 + $0x120] sm:$0xff]
    %v103 = vld [vmem:[%s0 + $0x128] sm:$0xff]
    %v104 = vld [vmem:[%s0 + $0x130] sm:$0xff]
    %v105 = vld [vmem:[%s0 + $0x138] sm:$0xff]
    %v106 = vld [vmem:[%s0 + $0x140] sm:$0xff]
    %v107 = vld [vmem:[%s0 + $0x148] sm:$0xff]
    %v108 = vld [vmem:[%s0 + $0x150] sm:$0xff]
    %v109 = vld [vmem:[%s0 + $0x158] sm:$0xff]
    %v110 = vld [vmem:[%s0 + $0x160] sm:$0xff]
    %v111 = vld [vmem:[%s0 + $0x168] sm:$0xff]
    %v112 = vld [vmem:[%s0 + $0x170] sm:$0xff]
    %v113 = vld [vmem:[%s0 + $0x178] sm:$0xff]
    %v114 = vld [vmem:[%s0 + $0x180] sm:$0xff]
    %v115 = vld [vmem:[%s0 + $0x188] sm:$0xff]
    %v116 = vld [vmem:[%s0 + $0x190] sm:$0xff]
    %v117 = vld [vmem:[%s0 + $0x198] sm:$0xff]
    %v118 = vld [vmem:[%s0 + $0x1a0] sm:$0xff]
    %v119 = vld [vmem:[%s0 + $0x1a8] sm:$0xff]
    %v120 = vld [vmem:[%s0 + $0x1b0] sm:$0xff]
    %v121 = vld [vmem:[%s0 + $0x1b8] sm:$0xff]
    %v122 = vld [vmem:[%s0 + $0x1c0] sm:$0xff]
    %v123 = vld [vmem:[%s0 + $0x1c8] sm:$0xff]
    %v124 = vld [vmem:[%s0 + $0x1d0] sm:$0xff]
    %v125 = vld [vmem:[%s0 + $0x1d8] sm:$0xff]
    %v126 = vld [vmem:[%s0 + $0x1e0] sm:$0xff]
    %v127 = vld [vmem:[%s0 + $0x1e8] sm:$0xff]
    %v128 = vld [vmem:[%s0 + $0x1f0] sm:$0xff]
    %v129 = vld [vmem:[%s0 + $0x1f8] sm:$0xff]
    %v130 = vld [vmem:[%s1] sm:$0xff]
    %v131 = vld [vmem:[%s1 + $0x8] sm:$0xff]
    %v132 = vld [vmem:[%s1 + $0x10] sm:$0xff]
    %v133 = vld [vmem:[%s1 + $0x18] sm:$0xff]
    %v134 = vld [vmem:[%s1 + $0x20] sm:$0xff]
    %v135 = vld [vmem:[%s1 + $0x28] sm:$0xff]
    %v136 = vld [vmem:[%s1 + $0x30] sm:$0xff]
    %v137 = vld [vmem:[%s1 + $0x38] sm:$0xff]
    %v138 = vld [vmem:[%s1 + $0x40] sm:$0xff]
    %v139 = vld [vmem:[%s1 + $0x48] sm:$0xff]
    %v140 = vld [vmem:[%s1 + $0x50] sm:$0xff]
    %v141 = vld [vmem:[%s1 + $0x58] sm:$0xff]
    %v142 = vld [vmem:[%s1 + $0x60] sm:$0xff]
    %v143 = vld [vmem:[%s1 + $0x68] sm:$0xff]
    %v144 = vld [vmem:[%s1 + $0x70] sm:$0xff]
    %v145 = vld [vmem:[%s1 + $0x78] sm:$0xff]
    %v146 = vld [vmem:[%s1 + $0x80] sm:$0xff]
    %v147 = vld [vmem:[%s1 + $0x88] sm:$0xff]
    %v148 = vld [vmem:[%s1 + $0x90] sm:$0xff]
    %v149 = vld [vmem:[%s1 + $0x98] sm:$0xff]
    %v150 = vld [vmem:[%s1 + $0xa0] sm:$0xff]
    %v151 = vld [vmem:[%s1 + $0xa8] sm:$0xff]
    %v152 = vld [vmem:[%s1 + $0xb0] sm:$0xff]
    %v153 = vld [vmem:[%s1 + $0xb8] sm:$0xff]
    %v154 = vld [vmem:[%s1 + $0xc0] sm:$0xff]
    %v155 = vld [vmem:[%s1 + $0xc8] sm:$0xff]
    %v156 = vld [vmem:[%s1 + $0xd0] sm:$0xff]
    %v157 = vld [vmem:[%s1 + $0xd8] sm:$0xff]
    %v158 = vld [vmem:[%s1 + $0xe0] sm:$0xff]
    %v159 = vld [vmem:[%s1 + $0xe8] sm:$0xff]
    %v160 = vld [vmem:[%s1 + $0xf0] sm:$0xff]
    %v161 = vld [vmem:[%s1 + $0xf8] sm:$0xff]
    %v162 = vld [vmem:[%s1 + $0x100] sm:$0xff]
    %v163 = vld [vmem:[%s1 + $0x108] sm:$0xff]
    %v164 = vld [vmem:[%s1 + $0x110] sm:$0xff]
    %v165 = vld [vmem:[%s1 + $0x118] sm:$0xff]
    %v166 = vld [vmem:[%s1 + $0x120] sm:$0xff]
    %v167 = vld [vmem:[%s1 + $0x128] sm:$0xff]
    %v168 = vld [vmem:[%s1 + $0x130] sm:$0xff]
    %v169 = vld [vmem:[%s1 + $0x138] sm:$0xff]
    %v170 = vld [vmem:[%s1 + $0x140] sm:$0xff]
    %v171 = vld [vmem:[%s1 + $0x148] sm:$0xff]
    %v172 = vld [vmem:[%s1 + $0x150] sm:$0xff]
    %v173 = vld [vmem:[%s1 + $0x158] sm:$0xff]
    %v174 = vld [vmem:[%s1 + $0x160] sm:$0xff]
    %v175 = vld [vmem:[%s1 + $0x168] sm:$0xff]
    %v176 = vld [vmem:[%s1 + $0x170] sm:$0xff]
    %v177 = vld [vmem:[%s1 + $0x178] sm:$0xff]
    %v178 = vld [vmem:[%s1 + $0x180] sm:$0xff]
    %v179 = vld [vmem:[%s1 + $0x188] sm:$0xff]
    %v180 = vld [vmem:[%s1 + $0x190] sm:$0xff]
    %v181 = vld [vmem:[%s1 + $0x198] sm:$0xff]
    %v182 = vld [vmem:[%s1 + $0x1a0] sm:$0xff]
    %v183 = vld [vmem:[%s1 + $0x1a8] sm:$0xff]
    %v184 = vld [vmem:[%s1 + $0x1b0] sm:$0xff]
    %v185 = vld [vmem:[%s1 + $0x1b8] sm:$0xff]
    %v186 = vld [vmem:[%s1 + $0x1c0] sm:$0xff]
    %v187 = vld [vmem:[%s1 + $0x1c8] sm:$0xff]
    %v188 = vld [vmem:[%s1 + $0x1d0] sm:$0xff]
    %v189 = vld [vmem:[%s1 + $0x1d8] sm:$0xff]
    %v190 = vld [vmem:[%s1 + $0x1e0] sm:$0xff]
    %v191 = vld [vmem:[%s1 + $0x1e8] sm:$0xff]
    %v192 = vld [vmem:[%s1 + $0x1f0] sm:$0xff]
    %v193 = vld [vmem:[%s1 + $0x1f8] sm:$0xff]
    %v194 = vld [vmem:[%s1 + $0x200] sm:$0xff]
    %v195 = vld [vmem:[%s1 + $0x208] sm:$0xff]
    %v196 = vld [vmem:[%s1 + $0x210] sm:$0xff]
    %v197 = vld [vmem:[%s1 + $0x218] sm:$0xff]
    %v198 = vld [vmem:[%s1 + $0x220] sm:$0xff]
    %v199 = vld [vmem:[%s1 + $0x228] sm:$0xff]
    %v200 = vld [vmem:[%s1 + $0x230] sm:$0xff]
    %v201 = vld [vmem:[%s1 + $0x238] sm:$0xff]
    %v202 = vld [vmem:[%s1 + $0x240] sm:$0xff]
    %v203 = vld [vmem:[%s1 + $0x248] sm:$0xff]
    %v204 = vld [vmem:[%s1 + $0x250] sm:$0xff]
    %v205 = vld [vmem:[%s1 + $0x258] sm:$0xff]
    %v206 = vld [vmem:[%s1 + $0x260] sm:$0xff]
    %v207 = vld [vmem:[%s1 + $0x268] sm:$0xff]
    %v208 = vld [vmem:[%s1 + $0x270] sm:$0xff]
    %v209 = vld [vmem:[%s1 + $0x278] sm:$0xff]
    %v210 = vld [vmem:[%s1 + $0x280] sm:$0xff]
    %v211 = vld [vmem:[%s1 + $0x288] sm:$0xff]
    %v212 = vld [vmem:[%s1 + $0x290] sm:$0xff]
    %v213 = vld [vmem:[%s1 + $0x298] sm:$0xff]
    %v214 = vld [vmem:[%s1 + $0x2a0] sm:$0xff]
    %v215 = vld [vmem:[%s1 + $0x2a8] sm:$0xff]
    %v216 = vld [vmem:[%s1 + $0x2b0] sm:$0xff]
    %v217 = vld [vmem:[%s1 + $0x2b8] sm:$0xff]
    %v218 = vld [vmem:[%s1 + $0x2c0] sm:$0xff]
    %v219 = vld [vmem:[%s1 + $0x2c8] sm:$0xff]
    %v220 = vld [vmem:[%s1 + $0x2d0] sm:$0xff]
    %v221 = vld [vmem:[%s1 + $0x2d8] sm:$0xff]
    %v222 = vld [vmem:[%s1 + $0x2e0] sm:$0xff]
    %v223 = vld [vmem:[%s1 + $0x2e8] sm:$0xff]
    %v224 = vld [vmem:[%s1 + $0x2f0] sm:$0xff]
    %v225 = vld [vmem:[%s1 + $0x2f8] sm:$0xff]
    %v226 = vld [vmem:[%s1 + $0x300] sm:$0xff]
    %v227 = vld [vmem:[%s1 + $0x308] sm:$0xff]
    %v228 = vld [vmem:[%s1 + $0x310] sm:$0xff]
    %v229 = vld [vmem:[%s1 + $0x318] sm:$0xff]
    %v230 = vld [vmem:[%s1 + $0x320] sm:$0xff]
    %v231 = vld [vmem:[%s1 + $0x328] sm:$0xff]
    %v232 = vld [vmem:[%s1 + $0x330] sm:$0xff]
    %v233 = vld [vmem:[%s1 + $0x338] sm:$0xff]
    %v234 = vld [vmem:[%s1 + $0x340] sm:$0xff]
    %v235 = vld [vmem:[%s1 + $0x348] sm:$0xff]
    %v236 = vld [vmem:[%s1 + $0x350] sm:$0xff]
    %v237 = vld [vmem:[%s1 + $0x358] sm:$0xff]
    %v238 = vld [vmem:[%s1 + $0x360] sm:$0xff]
    %v239 = vld [vmem:[%s1 + $0x368] sm:$0xff]
    %v240 = vld [vmem:[%s1 + $0x370] sm:$0xff]
    %v241 = vld [vmem:[%s1 + $0x378] sm:$0xff]
    %v242 = vld [vmem:[%s1 + $0x380] sm:$0xff]
    %v243 = vld [vmem:[%s1 + $0x388] sm:$0xff]
    %v244 = vld [vmem:[%s1 + $0x390] sm:$0xff]
    %v245 = vld [vmem:[%s1 + $0x398] sm:$0xff]
    %v246 = vld [vmem:[%s1 + $0x3a0] sm:$0xff]
    %v247 = vld [vmem:[%s1 + $0x3a8] sm:$0xff]
    %v248 = vld [vmem:[%s1 + $0x3b0] sm:$0xff]
    %v249 = vld [vmem:[%s1 + $0x3b8] sm:$0xff]
    %v250 = vld [vmem:[%s1 + $0x3c0] sm:$0xff]
    %v251 = vld [vmem:[%s1 + $0x3c8] sm:$0xff]
    %v252 = vld [vmem:[%s1 + $0x3d0] sm:$0xff]
    %v253 = vld [vmem:[%s1 + $0x3d8] sm:$0xff]
    %v254 = vld [vmem:[%s1 + $0x3e0] sm:$0xff]
    %v255 = vld [vmem:[%s1 + $0x3e8] sm:$0xff]
    %v256 = vld [vmem:[%s1 + $0x3f0] sm:$0xff]
    %v257 = vld [vmem:[%s1 + $0x3f8] sm:$0xff]
    %v258 = vld [vmem:[%s1 + $0x400] sm:$0xff]
    %v259 = vld [vmem:[%s1 + $0x408] sm:$0xff]
    %v260 = vld [vmem:[%s1 + $0x410] sm:$0xff]
    %v261 = vld [vmem:[%s1 + $0x418] sm:$0xff]
    %v262 = vld [vmem:[%s1 + $0x420] sm:$0xff]
    %v263 = vld [vmem:[%s1 + $0x428] sm:$0xff]
    %v264 = vld [vmem:[%s1 + $0x430] sm:$0xff]
    %v265 = vld [vmem:[%s1 + $0x438] sm:$0xff]
    %v266 = vld [vmem:[%s1 + $0x440] sm:$0xff]
    %v267 = vld [vmem:[%s1 + $0x448] sm:$0xff]
    %v268 = vld [vmem:[%s1 + $0x450] sm:$0xff]
    %v269 = vld [vmem:[%s1 + $0x458] sm:$0xff]
    %v270 = vld [vmem:[%s1 + $0x460] sm:$0xff]
    %v271 = vld [vmem:[%s1 + $0x468] sm:$0xff]
    %v272 = vld [vmem:[%s1 + $0x470] sm:$0xff]
    %v273 = vld [vmem:[%s1 + $0x478] sm:$0xff]
    %v274 = vld [vmem:[%s1 + $0x480] sm:$0xff]
    %v275 = vld [vmem:[%s1 + $0x488] sm:$0xff]
    %v276 = vld [vmem:[%s1 + $0x490] sm:$0xff]
    %v277 = vld [vmem:[%s1 + $0x498] sm:$0xff]
    %v278 = vld [vmem:[%s1 + $0x4a0] sm:$0xff]
    %v279 = vld [vmem:[%s1 + $0x4a8] sm:$0xff]
    %v280 = vld [vmem:[%s1 + $0x4b0] sm:$0xff]
    %v281 = vld [vmem:[%s1 + $0x4b8] sm:$0xff]
    %v282 = vld [vmem:[%s1 + $0x4c0] sm:$0xff]
    %v283 = vld [vmem:[%s1 + $0x4c8] sm:$0xff]
    %v284 = vld [vmem:[%s1 + $0x4d0] sm:$0xff]
    %v285 = vld [vmem:[%s1 + $0x4d8] sm:$0xff]
    %v286 = vld [vmem:[%s1 + $0x4e0] sm:$0xff]
    %v287 = vld [vmem:[%s1 + $0x4e8] sm:$0xff]
    %v288 = vld [vmem:[%s1 + $0x4f0] sm:$0xff]
    %v289 = vld [vmem:[%s1 + $0x4f8] sm:$0xff]
    %v290 = vld [vmem:[%s1 + $0x500] sm:$0xff]
    %v291 = vld [vmem:[%s1 + $0x508] sm:$0xff]
    %v292 = vld [vmem:[%s1 + $0x510] sm:$0xff]
    %v293 = vld [vmem:[%s1 + $0x518] sm:$0xff]
    %v294 = vld [vmem:[%s1 + $0x520] sm:$0xff]
    %v295 = vld [vmem:[%s1 + $0x528] sm:$0xff]
    %v296 = vld [vmem:[%s1 + $0x530] sm:$0xff]
    %v297 = vld [vmem:[%s1 + $0x538] sm:$0xff]
    %v298 = vld [vmem:[%s1 + $0x540] sm:$0xff]
    %v299 = vld [vmem:[%s1 + $0x548] sm:$0xff]
    %v300 = vld [vmem:[%s1 + $0x550] sm:$0xff]
    %v301 = vld [vmem:[%s1 + $0x558] sm:$0xff]
    %v302 = vld [vmem:[%s1 + $0x560] sm:$0xff]
    %v303 = vld [vmem:[%s1 + $0x568] sm:$0xff]
    %v304 = vld [vmem:[%s1 + $0x570] sm:$0xff]
    %v305 = vld [vmem:[%s1 + $0x578] sm:$0xff]
    %v306 = vld [vmem:[%s1 + $0x580] sm:$0xff]
    %v307 = vld [vmem:[%s1 + $0x588] sm:$0xff]
    %v308 = vld [vmem:[%s1 + $0x590] sm:$0xff]
    %v309 = vld [vmem:[%s1 + $0x598] sm:$0xff]
    %v310 = vld [vmem:[%s1 + $0x5a0] sm:$0xff]
    %v311 = vld [vmem:[%s1 + $0x5a8] sm:$0xff]
    %v312 = vld [vmem:[%s1 + $0x5b0] sm:$0xff]
    %v313 = vld [vmem:[%s1 + $0x5b8] sm:$0xff]
    %v314 = vld [vmem:[%s1 + $0x5c0] sm:$0xff]
    %v315 = vld [vmem:[%s1 + $0x5c8] sm:$0xff]
    %v316 = vld [vmem:[%s1 + $0x5d0] sm:$0xff]
    %v317 = vld [vmem:[%s1 + $0x5d8] sm:$0xff]
    %v318 = vld [vmem:[%s1 + $0x5e0] sm:$0xff]
    %v319 = vld [vmem:[%s1 + $0x5e8] sm:$0xff]
    %v320 = vld [vmem:[%s1 + $0x5f0] sm:$0xff]
    %v321 = vld [vmem:[%s1 + $0x5f8] sm:$0xff]
    %v322 = vld [vmem:[%s1 + $0x600] sm:$0xff]
    %v323 = vld [vmem:[%s1 + $0x608] sm:$0xff]
    %v324 = vld [vmem:[%s1 + $0x610] sm:$0xff]
    %v325 = vld [vmem:[%s1 + $0x618] sm:$0xff]
    %v326 = vld [vmem:[%s1 + $0x620] sm:$0xff]
    %v327 = vld [vmem:[%s1 + $0x628] sm:$0xff]
    %v328 = vld [vmem:[%s1 + $0x630] sm:$0xff]
    %v329 = vld [vmem:[%s1 + $0x638] sm:$0xff]
    %v330 = vld [vmem:[%s1 + $0x640] sm:$0xff]
    %v331 = vld [vmem:[%s1 + $0x648] sm:$0xff]
    %v332 = vld [vmem:[%s1 + $0x650] sm:$0xff]
    %v333 = vld [vmem:[%s1 + $0x658] sm:$0xff]
    %v334 = vld [vmem:[%s1 + $0x660] sm:$0xff]
    %v335 = vld [vmem:[%s1 + $0x668] sm:$0xff]
    %v336 = vld [vmem:[%s1 + $0x670] sm:$0xff]
    %v337 = vld [vmem:[%s1 + $0x678] sm:$0xff]
    %v338 = vld [vmem:[%s1 + $0x680] sm:$0xff]
    %v339 = vld [vmem:[%s1 + $0x688] sm:$0xff]
    %v340 = vld [vmem:[%s1 + $0x690] sm:$0xff]
    %v341 = vld [vmem:[%s1 + $0x698] sm:$0xff]
    %v342 = vld [vmem:[%s1 + $0x6a0] sm:$0xff]
    %v343 = vld [vmem:[%s1 + $0x6a8] sm:$0xff]
    %v344 = vld [vmem:[%s1 + $0x6b0] sm:$0xff]
    %v345 = vld [vmem:[%s1 + $0x6b8] sm:$0xff]
    %v346 = vld [vmem:[%s1 + $0x6c0] sm:$0xff]
    %v347 = vld [vmem:[%s1 + $0x6c8] sm:$0xff]
    %v348 = vld [vmem:[%s1 + $0x6d0] sm:$0xff]
    %v349 = vld [vmem:[%s1 + $0x6d8] sm:$0xff]
    %v350 = vld [vmem:[%s1 + $0x6e0] sm:$0xff]
    %v351 = vld [vmem:[%s1 + $0x6e8] sm:$0xff]
    %v352 = vld [vmem:[%s1 + $0x6f0] sm:$0xff]
    %v353 = vld [vmem:[%s1 + $0x6f8] sm:$0xff]
    %v354 = vld [vmem:[%s1 + $0x700] sm:$0xff]
    %v355 = vld [vmem:[%s1 + $0x708] sm:$0xff]
    %v356 = vld [vmem:[%s1 + $0x710] sm:$0xff]
    %v357 = vld [vmem:[%s1 + $0x718] sm:$0xff]
    %v358 = vld [vmem:[%s1 + $0x720] sm:$0xff]
    %v359 = vld [vmem:[%s1 + $0x728] sm:$0xff]
    %v360 = vld [vmem:[%s1 + $0x730] sm:$0xff]
    %v361 = vld [vmem:[%s1 + $0x738] sm:$0xff]
    %v362 = vld [vmem:[%s1 + $0x740] sm:$0xff]
    %v363 = vld [vmem:[%s1 + $0x748] sm:$0xff]
    %v364 = vld [vmem:[%s1 + $0x750] sm:$0xff]
    %v365 = vld [vmem:[%s1 + $0x758] sm:$0xff]
    %v366 = vld [vmem:[%s1 + $0x760] sm:$0xff]
    %v367 = vld [vmem:[%s1 + $0x768] sm:$0xff]
    %v368 = vld [vmem:[%s1 + $0x770] sm:$0xff]
    %v369 = vld [vmem:[%s1 + $0x778] sm:$0xff]
    %v370 = vld [vmem:[%s1 + $0x780] sm:$0xff]
    %v371 = vld [vmem:[%s1 + $0x788] sm:$0xff]
    %v372 = vld [vmem:[%s1 + $0x790] sm:$0xff]
    %v373 = vld [vmem:[%s1 + $0x798] sm:$0xff]
    %v374 = vld [vmem:[%s1 + $0x7a0] sm:$0xff]
    %v375 = vld [vmem:[%s1 + $0x7a8] sm:$0xff]
    %v376 = vld [vmem:[%s1 + $0x7b0] sm:$0xff]
    %v377 = vld [vmem:[%s1 + $0x7b8] sm:$0xff]
    %v378 = vld [vmem:[%s1 + $0x7c0] sm:$0xff]
    %v379 = vld [vmem:[%s1 + $0x7c8] sm:$0xff]
    %v380 = vld [vmem:[%s1 + $0x7d0] sm:$0xff]
    %v381 = vld [vmem:[%s1 + $0x7d8] sm:$0xff]
    %v382 = vld [vmem:[%s1 + $0x7e0] sm:$0xff]
    %v383 = vld [vmem:[%s1 + $0x7e8] sm:$0xff]
    %v384 = vld [vmem:[%s1 + $0x7f0] sm:$0xff]
    %v385 = vld [vmem:[%s1 + $0x7f8] sm:$0xff]
    %v386 = vld [vmem:[%s2] sm:$0xf]
    %v388 = vperm.slane %v386, 0
    %v389 = vperm.slane %v386, 1
    %v390 = vperm.slane %v386, 2
    %v391 = vperm.slane %v386, 3
    %v460 = vunpack.c.l.b16 %v66
    %v461 = vunpack.c.h.b16 %v66
    %v462 = vunpack.c.l.b16 %v67
    %v463 = vunpack.c.h.b16 %v67
    %v464 = vunpack.c.l.b16 %v68
    %v465 = vunpack.c.h.b16 %v68
    %v466 = vunpack.c.l.b16 %v69
    %v467 = vunpack.c.h.b16 %v69
    %v468 = vunpack.c.l.b16 %v70
    %v469 = vunpack.c.h.b16 %v70
    %v470 = vunpack.c.l.b16 %v71
    %v471 = vunpack.c.h.b16 %v71
    %v472 = vunpack.c.l.b16 %v72
    %v473 = vunpack.c.h.b16 %v72
    %v474 = vunpack.c.l.b16 %v73
    %v475 = vunpack.c.h.b16 %v73
    %v476 = vunpack.c.l.b16 %v74
    %v477 = vunpack.c.h.b16 %v74
    %v478 = vunpack.c.l.b16 %v75
    %v479 = vunpack.c.h.b16 %v75
    %v480 = vunpack.c.l.b16 %v76
    %v481 = vunpack.c.h.b16 %v76
    %v482 = vunpack.c.l.b16 %v77
    %v483 = vunpack.c.h.b16 %v77
    %v484 = vunpack.c.l.b16 %v78
    %v485 = vunpack.c.h.b16 %v78
    %v486 = vunpack.c.l.b16 %v79
    %v487 = vunpack.c.h.b16 %v79
    %v488 = vunpack.c.l.b16 %v80
    %v489 = vunpack.c.h.b16 %v80
    %v490 = vunpack.c.l.b16 %v81
    %v491 = vunpack.c.h.b16 %v81
    %v492 = vunpack.c.l.b16 %v82
    %v493 = vunpack.c.h.b16 %v82
    %v494 = vunpack.c.l.b16 %v83
    %v495 = vunpack.c.h.b16 %v83
    %v496 = vunpack.c.l.b16 %v84
    %v497 = vunpack.c.h.b16 %v84
    %v498 = vunpack.c.l.b16 %v85
    %v499 = vunpack.c.h.b16 %v85
    %v500 = vunpack.c.l.b16 %v86
    %v501 = vunpack.c.h.b16 %v86
    %v502 = vunpack.c.l.b16 %v87
    %v503 = vunpack.c.h.b16 %v87
    %v504 = vunpack.c.l.b16 %v88
    %v505 = vunpack.c.h.b16 %v88
    %v506 = vunpack.c.l.b16 %v89
    %v507 = vunpack.c.h.b16 %v89
    %v508 = vunpack.c.l.b16 %v90
    %v509 = vunpack.c.h.b16 %v90
    %v510 = vunpack.c.l.b16 %v91
    %v511 = vunpack.c.h.b16 %v91
    %v512 = vunpack.c.l.b16 %v92
    %v513 = vunpack.c.h.b16 %v92
    %v514 = vunpack.c.l.b16 %v93
    %v515 = vunpack.c.h.b16 %v93
    %v516 = vunpack.c.l.b16 %v94
    %v517 = vunpack.c.h.b16 %v94
    %v518 = vunpack.c.l.b16 %v95
    %v519 = vunpack.c.h.b16 %v95
    %v520 = vunpack.c.l.b16 %v96
    %v521 = vunpack.c.h.b16 %v96
    %v522 = vunpack.c.l.b16 %v97
    %v523 = vunpack.c.h.b16 %v97
    %v524 = vunpack.c.l.b16 %v98
    %v525 = vunpack.c.h.b16 %v98
    %v526 = vunpack.c.l.b16 %v99
    %v527 = vunpack.c.h.b16 %v99
    %v528 = vunpack.c.l.b16 %v100
    %v529 = vunpack.c.h.b16 %v100
    %v530 = vunpack.c.l.b16 %v101
    %v531 = vunpack.c.h.b16 %v101
    %v532 = vunpack.c.l.b16 %v102
    %v533 = vunpack.c.h.b16 %v102
    %v534 = vunpack.c.l.b16 %v103
    %v535 = vunpack.c.h.b16 %v103
    %v536 = vunpack.c.l.b16 %v104
    %v537 = vunpack.c.h.b16 %v104
    %v538 = vunpack.c.l.b16 %v105
    %v539 = vunpack.c.h.b16 %v105
    %v540 = vunpack.c.l.b16 %v106
    %v541 = vunpack.c.h.b16 %v106
    %v542 = vunpack.c.l.b16 %v107
    %v543 = vunpack.c.h.b16 %v107
    %v544 = vunpack.c.l.b16 %v108
    %v545 = vunpack.c.h.b16 %v108
    %v546 = vunpack.c.l.b16 %v109
    %v547 = vunpack.c.h.b16 %v109
    %v548 = vunpack.c.l.b16 %v110
    %v549 = vunpack.c.h.b16 %v110
    %v550 = vunpack.c.l.b16 %v111
    %v551 = vunpack.c.h.b16 %v111
    %v552 = vunpack.c.l.b16 %v112
    %v553 = vunpack.c.h.b16 %v112
    %v554 = vunpack.c.l.b16 %v113
    %v555 = vunpack.c.h.b16 %v113
    %v556 = vunpack.c.l.b16 %v114
    %v557 = vunpack.c.h.b16 %v114
    %v558 = vunpack.c.l.b16 %v115
    %v559 = vunpack.c.h.b16 %v115
    %v560 = vunpack.c.l.b16 %v116
    %v561 = vunpack.c.h.b16 %v116
    %v562 = vunpack.c.l.b16 %v117
    %v563 = vunpack.c.h.b16 %v117
    %v564 = vunpack.c.l.b16 %v118
    %v565 = vunpack.c.h.b16 %v118
    %v566 = vunpack.c.l.b16 %v119
    %v567 = vunpack.c.h.b16 %v119
    %v568 = vunpack.c.l.b16 %v120
    %v569 = vunpack.c.h.b16 %v120
    %v570 = vunpack.c.l.b16 %v121
    %v571 = vunpack.c.h.b16 %v121
    %v572 = vunpack.c.l.b16 %v122
    %v573 = vunpack.c.h.b16 %v122
    %v574 = vunpack.c.l.b16 %v123
    %v575 = vunpack.c.h.b16 %v123
    %v576 = vunpack.c.l.b16 %v124
    %v577 = vunpack.c.h.b16 %v124
    %v578 = vunpack.c.l.b16 %v125
    %v579 = vunpack.c.h.b16 %v125
    %v580 = vunpack.c.l.b16 %v126
    %v581 = vunpack.c.h.b16 %v126
    %v582 = vunpack.c.l.b16 %v127
    %v583 = vunpack.c.h.b16 %v127
    %v584 = vunpack.c.l.b16 %v128
    %v585 = vunpack.c.h.b16 %v128
    %v586 = vunpack.c.l.b16 %v129
    %v587 = vunpack.c.h.b16 %v129
    %v588 = vpack.c.b16 %v468, %v460
    %v589 = vpack.c.b16 %v469, %v461
    %v590 = vpack.c.b16 %v470, %v462
    %v591 = vpack.c.b16 %v471, %v463
    %v592 = vpack.c.b16 %v472, %v464
    %v593 = vpack.c.b16 %v473, %v465
    %v594 = vpack.c.b16 %v474, %v466
    %v595 = vpack.c.b16 %v475, %v467
    %v596 = vpack.c.b16 %v484, %v476
    %v597 = vpack.c.b16 %v485, %v477
    %v598 = vpack.c.b16 %v486, %v478
    %v599 = vpack.c.b16 %v487, %v479
    %v600 = vpack.c.b16 %v488, %v480
    %v601 = vpack.c.b16 %v489, %v481
    %v602 = vpack.c.b16 %v490, %v482
    %v603 = vpack.c.b16 %v491, %v483
    %v604 = vpack.c.b16 %v500, %v492
    %v605 = vpack.c.b16 %v501, %v493
    %v606 = vpack.c.b16 %v502, %v494
    %v607 = vpack.c.b16 %v503, %v495
    %v608 = vpack.c.b16 %v504, %v496
    %v609 = vpack.c.b16 %v505, %v497
    %v610 = vpack.c.b16 %v506, %v498
    %v611 = vpack.c.b16 %v507, %v499
    %v612 = vpack.c.b16 %v516, %v508
    %v613 = vpack.c.b16 %v517, %v509
    %v614 = vpack.c.b16 %v518, %v510
    %v615 = vpack.c.b16 %v519, %v511
    %v616 = vpack.c.b16 %v520, %v512
    %v617 = vpack.c.b16 %v521, %v513
    %v618 = vpack.c.b16 %v522, %v514
    %v619 = vpack.c.b16 %v523, %v515
    %v620 = vpack.c.b16 %v532, %v524
    %v621 = vpack.c.b16 %v533, %v525
    %v622 = vpack.c.b16 %v534, %v526
    %v623 = vpack.c.b16 %v535, %v527
    %v624 = vpack.c.b16 %v536, %v528
    %v625 = vpack.c.b16 %v537, %v529
    %v626 = vpack.c.b16 %v538, %v530
    %v627 = vpack.c.b16 %v539, %v531
    %v628 = vpack.c.b16 %v548, %v540
    %v629 = vpack.c.b16 %v549, %v541
    %v630 = vpack.c.b16 %v550, %v542
    %v631 = vpack.c.b16 %v551, %v543
    %v632 = vpack.c.b16 %v552, %v544
    %v633 = vpack.c.b16 %v553, %v545
    %v634 = vpack.c.b16 %v554, %v546
    %v635 = vpack.c.b16 %v555, %v547
    %v636 = vpack.c.b16 %v564, %v556
    %v637 = vpack.c.b16 %v565, %v557
    %v638 = vpack.c.b16 %v566, %v558
    %v639 = vpack.c.b16 %v567, %v559
    %v640 = vpack.c.b16 %v568, %v560
    %v641 = vpack.c.b16 %v569, %v561
    %v642 = vpack.c.b16 %v570, %v562
    %v643 = vpack.c.b16 %v571, %v563
    %v644 = vpack.c.b16 %v580, %v572
    %v645 = vpack.c.b16 %v581, %v573
    %v646 = vpack.c.b16 %v582, %v574
    %v647 = vpack.c.b16 %v583, %v575
    %v648 = vpack.c.b16 %v584, %v576
    %v649 = vpack.c.b16 %v585, %v577
    %v650 = vpack.c.b16 %v586, %v578
    %v651 = vpack.c.b16 %v587, %v579
    %v972 = vunpack.c.l.b16 %v130
    %v973 = vunpack.c.h.b16 %v130
    %v974 = vunpack.c.l.b16 %v131
    %v975 = vunpack.c.h.b16 %v131
    %v976 = vunpack.c.l.b16 %v132
    %v977 = vunpack.c.h.b16 %v132
    %v978 = vunpack.c.l.b16 %v133
    %v979 = vunpack.c.h.b16 %v133
    %v980 = vunpack.c.l.b16 %v134
    %v981 = vunpack.c.h.b16 %v134
    %v982 = vunpack.c.l.b16 %v135
    %v983 = vunpack.c.h.b16 %v135
    %v984 = vunpack.c.l.b16 %v136
    %v985 = vunpack.c.h.b16 %v136
    %v986 = vunpack.c.l.b16 %v137
    %v987 = vunpack.c.h.b16 %v137
    %v988 = vunpack.c.l.b16 %v138
    %v989 = vunpack.c.h.b16 %v138
    %v990 = vunpack.c.l.b16 %v139
    %v991 = vunpack.c.h.b16 %v139
    %v992 = vunpack.c.l.b16 %v140
    %v993 = vunpack.c.h.b16 %v140
    %v994 = vunpack.c.l.b16 %v141
    %v995 = vunpack.c.h.b16 %v141
    %v996 = vunpack.c.l.b16 %v142
    %v997 = vunpack.c.h.b16 %v142
    %v998 = vunpack.c.l.b16 %v143
    %v999 = vunpack.c.h.b16 %v143
    %v1000 = vunpack.c.l.b16 %v144
    %v1001 = vunpack.c.h.b16 %v144
    %v1002 = vunpack.c.l.b16 %v145
    %v1003 = vunpack.c.h.b16 %v145
    %v1004 = vunpack.c.l.b16 %v146
    %v1005 = vunpack.c.h.b16 %v146
    %v1006 = vunpack.c.l.b16 %v147
    %v1007 = vunpack.c.h.b16 %v147
    %v1008 = vunpack.c.l.b16 %v148
    %v1009 = vunpack.c.h.b16 %v148
    %v1010 = vunpack.c.l.b16 %v149
    %v1011 = vunpack.c.h.b16 %v149
    %v1012 = vunpack.c.l.b16 %v150
    %v1013 = vunpack.c.h.b16 %v150
    %v1014 = vunpack.c.l.b16 %v151
    %v1015 = vunpack.c.h.b16 %v151
    %v1016 = vunpack.c.l.b16 %v152
    %v1017 = vunpack.c.h.b16 %v152
    %v1018 = vunpack.c.l.b16 %v153
    %v1019 = vunpack.c.h.b16 %v153
    %v1020 = vunpack.c.l.b16 %v154
    %v1021 = vunpack.c.h.b16 %v154
    %v1022 = vunpack.c.l.b16 %v155
    %v1023 = vunpack.c.h.b16 %v155
    %v1024 = vunpack.c.l.b16 %v156
    %v1025 = vunpack.c.h.b16 %v156
    %v1026 = vunpack.c.l.b16 %v157
    %v1027 = vunpack.c.h.b16 %v157
    %v1028 = vunpack.c.l.b16 %v158
    %v1029 = vunpack.c.h.b16 %v158
    %v1030 = vunpack.c.l.b16 %v159
    %v1031 = vunpack.c.h.b16 %v159
    %v1032 = vunpack.c.l.b16 %v160
    %v1033 = vunpack.c.h.b16 %v160
    %v1034 = vunpack.c.l.b16 %v161
    %v1035 = vunpack.c.h.b16 %v161
    %v1036 = vunpack.c.l.b16 %v162
    %v1037 = vunpack.c.h.b16 %v162
    %v1038 = vunpack.c.l.b16 %v163
    %v1039 = vunpack.c.h.b16 %v163
    %v1040 = vunpack.c.l.b16 %v164
    %v1041 = vunpack.c.h.b16 %v164
    %v1042 = vunpack.c.l.b16 %v165
    %v1043 = vunpack.c.h.b16 %v165
    %v1044 = vunpack.c.l.b16 %v166
    %v1045 = vunpack.c.h.b16 %v166
    %v1046 = vunpack.c.l.b16 %v167
    %v1047 = vunpack.c.h.b16 %v167
    %v1048 = vunpack.c.l.b16 %v168
    %v1049 = vunpack.c.h.b16 %v168
    %v1050 = vunpack.c.l.b16 %v169
    %v1051 = vunpack.c.h.b16 %v169
    %v1052 = vunpack.c.l.b16 %v170
    %v1053 = vunpack.c.h.b16 %v170
    %v1054 = vunpack.c.l.b16 %v171
    %v1055 = vunpack.c.h.b16 %v171
    %v1056 = vunpack.c.l.b16 %v172
    %v1057 = vunpack.c.h.b16 %v172
    %v1058 = vunpack.c.l.b16 %v173
    %v1059 = vunpack.c.h.b16 %v173
    %v1060 = vunpack.c.l.b16 %v174
    %v1061 = vunpack.c.h.b16 %v174
    %v1062 = vunpack.c.l.b16 %v175
    %v1063 = vunpack.c.h.b16 %v175
    %v1064 = vunpack.c.l.b16 %v176
    %v1065 = vunpack.c.h.b16 %v176
    %v1066 = vunpack.c.l.b16 %v177
    %v1067 = vunpack.c.h.b16 %v177
    %v1068 = vunpack.c.l.b16 %v178
    %v1069 = vunpack.c.h.b16 %v178
    %v1070 = vunpack.c.l.b16 %v179
    %v1071 = vunpack.c.h.b16 %v179
    %v1072 = vunpack.c.l.b16 %v180
    %v1073 = vunpack.c.h.b16 %v180
    %v1074 = vunpack.c.l.b16 %v181
    %v1075 = vunpack.c.h.b16 %v181
    %v1076 = vunpack.c.l.b16 %v182
    %v1077 = vunpack.c.h.b16 %v182
    %v1078 = vunpack.c.l.b16 %v183
    %v1079 = vunpack.c.h.b16 %v183
    %v1080 = vunpack.c.l.b16 %v184
    %v1081 = vunpack.c.h.b16 %v184
    %v1082 = vunpack.c.l.b16 %v185
    %v1083 = vunpack.c.h.b16 %v185
    %v1084 = vunpack.c.l.b16 %v186
    %v1085 = vunpack.c.h.b16 %v186
    %v1086 = vunpack.c.l.b16 %v187
    %v1087 = vunpack.c.h.b16 %v187
    %v1088 = vunpack.c.l.b16 %v188
    %v1089 = vunpack.c.h.b16 %v188
    %v1090 = vunpack.c.l.b16 %v189
    %v1091 = vunpack.c.h.b16 %v189
    %v1092 = vunpack.c.l.b16 %v190
    %v1093 = vunpack.c.h.b16 %v190
    %v1094 = vunpack.c.l.b16 %v191
    %v1095 = vunpack.c.h.b16 %v191
    %v1096 = vunpack.c.l.b16 %v192
    %v1097 = vunpack.c.h.b16 %v192
    %v1098 = vunpack.c.l.b16 %v193
    %v1099 = vunpack.c.h.b16 %v193
    %v1100 = vunpack.c.l.b16 %v194
    %v1101 = vunpack.c.h.b16 %v194
    %v1102 = vunpack.c.l.b16 %v195
    %v1103 = vunpack.c.h.b16 %v195
    %v1104 = vunpack.c.l.b16 %v196
    %v1105 = vunpack.c.h.b16 %v196
    %v1106 = vunpack.c.l.b16 %v197
    %v1107 = vunpack.c.h.b16 %v197
    %v1108 = vunpack.c.l.b16 %v198
    %v1109 = vunpack.c.h.b16 %v198
    %v1110 = vunpack.c.l.b16 %v199
    %v1111 = vunpack.c.h.b16 %v199
    %v1112 = vunpack.c.l.b16 %v200
    %v1113 = vunpack.c.h.b16 %v200
    %v1114 = vunpack.c.l.b16 %v201
    %v1115 = vunpack.c.h.b16 %v201
    %v1116 = vunpack.c.l.b16 %v202
    %v1117 = vunpack.c.h.b16 %v202
    %v1118 = vunpack.c.l.b16 %v203
    %v1119 = vunpack.c.h.b16 %v203
    %v1120 = vunpack.c.l.b16 %v204
    %v1121 = vunpack.c.h.b16 %v204
    %v1122 = vunpack.c.l.b16 %v205
    %v1123 = vunpack.c.h.b16 %v205
    %v1124 = vunpack.c.l.b16 %v206
    %v1125 = vunpack.c.h.b16 %v206
    %v1126 = vunpack.c.l.b16 %v207
    %v1127 = vunpack.c.h.b16 %v207
    %v1128 = vunpack.c.l.b16 %v208
    %v1129 = vunpack.c.h.b16 %v208
    %v1130 = vunpack.c.l.b16 %v209
    %v1131 = vunpack.c.h.b16 %v209
    %v1132 = vunpack.c.l.b16 %v210
    %v1133 = vunpack.c.h.b16 %v210
    %v1134 = vunpack.c.l.b16 %v211
    %v1135 = vunpack.c.h.b16 %v211
    %v1136 = vunpack.c.l.b16 %v212
    %v1137 = vunpack.c.h.b16 %v212
    %v1138 = vunpack.c.l.b16 %v213
    %v1139 = vunpack.c.h.b16 %v213
    %v1140 = vunpack.c.l.b16 %v214
    %v1141 = vunpack.c.h.b16 %v214
    %v1142 = vunpack.c.l.b16 %v215
    %v1143 = vunpack.c.h.b16 %v215
    %v1144 = vunpack.c.l.b16 %v216
    %v1145 = vunpack.c.h.b16 %v216
    %v1146 = vunpack.c.l.b16 %v217
    %v1147 = vunpack.c.h.b16 %v217
    %v1148 = vunpack.c.l.b16 %v218
    %v1149 = vunpack.c.h.b16 %v218
    %v1150 = vunpack.c.l.b16 %v219
    %v1151 = vunpack.c.h.b16 %v219
    %v1152 = vunpack.c.l.b16 %v220
    %v1153 = vunpack.c.h.b16 %v220
    %v1154 = vunpack.c.l.b16 %v221
    %v1155 = vunpack.c.h.b16 %v221
    %v1156 = vunpack.c.l.b16 %v222
    %v1157 = vunpack.c.h.b16 %v222
    %v1158 = vunpack.c.l.b16 %v223
    %v1159 = vunpack.c.h.b16 %v223
    %v1160 = vunpack.c.l.b16 %v224
    %v1161 = vunpack.c.h.b16 %v224
    %v1162 = vunpack.c.l.b16 %v225
    %v1163 = vunpack.c.h.b16 %v225
    %v1164 = vunpack.c.l.b16 %v226
    %v1165 = vunpack.c.h.b16 %v226
    %v1166 = vunpack.c.l.b16 %v227
    %v1167 = vunpack.c.h.b16 %v227
    %v1168 = vunpack.c.l.b16 %v228
    %v1169 = vunpack.c.h.b16 %v228
    %v1170 = vunpack.c.l.b16 %v229
    %v1171 = vunpack.c.h.b16 %v229
    %v1172 = vunpack.c.l.b16 %v230
    %v1173 = vunpack.c.h.b16 %v230
    %v1174 = vunpack.c.l.b16 %v231
    %v1175 = vunpack.c.h.b16 %v231
    %v1176 = vunpack.c.l.b16 %v232
    %v1177 = vunpack.c.h.b16 %v232
    %v1178 = vunpack.c.l.b16 %v233
    %v1179 = vunpack.c.h.b16 %v233
    %v1180 = vunpack.c.l.b16 %v234
    %v1181 = vunpack.c.h.b16 %v234
    %v1182 = vunpack.c.l.b16 %v235
    %v1183 = vunpack.c.h.b16 %v235
    %v1184 = vunpack.c.l.b16 %v236
    %v1185 = vunpack.c.h.b16 %v236
    %v1186 = vunpack.c.l.b16 %v237
    %v1187 = vunpack.c.h.b16 %v237
    %v1188 = vunpack.c.l.b16 %v238
    %v1189 = vunpack.c.h.b16 %v238
    %v1190 = vunpack.c.l.b16 %v239
    %v1191 = vunpack.c.h.b16 %v239
    %v1192 = vunpack.c.l.b16 %v240
    %v1193 = vunpack.c.h.b16 %v240
    %v1194 = vunpack.c.l.b16 %v241
    %v1195 = vunpack.c.h.b16 %v241
    %v1196 = vunpack.c.l.b16 %v242
    %v1197 = vunpack.c.h.b16 %v242
    %v1198 = vunpack.c.l.b16 %v243
    %v1199 = vunpack.c.h.b16 %v243
    %v1200 = vunpack.c.l.b16 %v244
    %v1201 = vunpack.c.h.b16 %v244
    %v1202 = vunpack.c.l.b16 %v245
    %v1203 = vunpack.c.h.b16 %v245
    %v1204 = vunpack.c.l.b16 %v246
    %v1205 = vunpack.c.h.b16 %v246
    %v1206 = vunpack.c.l.b16 %v247
    %v1207 = vunpack.c.h.b16 %v247
    %v1208 = vunpack.c.l.b16 %v248
    %v1209 = vunpack.c.h.b16 %v248
    %v1210 = vunpack.c.l.b16 %v249
    %v1211 = vunpack.c.h.b16 %v249
    %v1212 = vunpack.c.l.b16 %v250
    %v1213 = vunpack.c.h.b16 %v250
    %v1214 = vunpack.c.l.b16 %v251
    %v1215 = vunpack.c.h.b16 %v251
    %v1216 = vunpack.c.l.b16 %v252
    %v1217 = vunpack.c.h.b16 %v252
    %v1218 = vunpack.c.l.b16 %v253
    %v1219 = vunpack.c.h.b16 %v253
    %v1220 = vunpack.c.l.b16 %v254
    %v1221 = vunpack.c.h.b16 %v254
    %v1222 = vunpack.c.l.b16 %v255
    %v1223 = vunpack.c.h.b16 %v255
    %v1224 = vunpack.c.l.b16 %v256
    %v1225 = vunpack.c.h.b16 %v256
    %v1226 = vunpack.c.l.b16 %v257
    %v1227 = vunpack.c.h.b16 %v257
    %v1228 = vunpack.c.l.b16 %v258
    %v1229 = vunpack.c.h.b16 %v258
    %v1230 = vunpack.c.l.b16 %v259
    %v1231 = vunpack.c.h.b16 %v259
    %v1232 = vunpack.c.l.b16 %v260
    %v1233 = vunpack.c.h.b16 %v260
    %v1234 = vunpack.c.l.b16 %v261
    %v1235 = vunpack.c.h.b16 %v261
    %v1236 = vunpack.c.l.b16 %v262
    %v1237 = vunpack.c.h.b16 %v262
    %v1238 = vunpack.c.l.b16 %v263
    %v1239 = vunpack.c.h.b16 %v263
    %v1240 = vunpack.c.l.b16 %v264
    %v1241 = vunpack.c.h.b16 %v264
    %v1242 = vunpack.c.l.b16 %v265
    %v1243 = vunpack.c.h.b16 %v265
    %v1244 = vunpack.c.l.b16 %v266
    %v1245 = vunpack.c.h.b16 %v266
    %v1246 = vunpack.c.l.b16 %v267
    %v1247 = vunpack.c.h.b16 %v267
    %v1248 = vunpack.c.l.b16 %v268
    %v1249 = vunpack.c.h.b16 %v268
    %v1250 = vunpack.c.l.b16 %v269
    %v1251 = vunpack.c.h.b16 %v269
    %v1252 = vunpack.c.l.b16 %v270
    %v1253 = vunpack.c.h.b16 %v270
    %v1254 = vunpack.c.l.b16 %v271
    %v1255 = vunpack.c.h.b16 %v271
    %v1256 = vunpack.c.l.b16 %v272
    %v1257 = vunpack.c.h.b16 %v272
    %v1258 = vunpack.c.l.b16 %v273
    %v1259 = vunpack.c.h.b16 %v273
    %v1260 = vunpack.c.l.b16 %v274
    %v1261 = vunpack.c.h.b16 %v274
    %v1262 = vunpack.c.l.b16 %v275
    %v1263 = vunpack.c.h.b16 %v275
    %v1264 = vunpack.c.l.b16 %v276
    %v1265 = vunpack.c.h.b16 %v276
    %v1266 = vunpack.c.l.b16 %v277
    %v1267 = vunpack.c.h.b16 %v277
    %v1268 = vunpack.c.l.b16 %v278
    %v1269 = vunpack.c.h.b16 %v278
    %v1270 = vunpack.c.l.b16 %v279
    %v1271 = vunpack.c.h.b16 %v279
    %v1272 = vunpack.c.l.b16 %v280
    %v1273 = vunpack.c.h.b16 %v280
    %v1274 = vunpack.c.l.b16 %v281
    %v1275 = vunpack.c.h.b16 %v281
    %v1276 = vunpack.c.l.b16 %v282
    %v1277 = vunpack.c.h.b16 %v282
    %v1278 = vunpack.c.l.b16 %v283
    %v1279 = vunpack.c.h.b16 %v283
    %v1280 = vunpack.c.l.b16 %v284
    %v1281 = vunpack.c.h.b16 %v284
    %v1282 = vunpack.c.l.b16 %v285
    %v1283 = vunpack.c.h.b16 %v285
    %v1284 = vunpack.c.l.b16 %v286
    %v1285 = vunpack.c.h.b16 %v286
    %v1286 = vunpack.c.l.b16 %v287
    %v1287 = vunpack.c.h.b16 %v287
    %v1288 = vunpack.c.l.b16 %v288
    %v1289 = vunpack.c.h.b16 %v288
    %v1290 = vunpack.c.l.b16 %v289
    %v1291 = vunpack.c.h.b16 %v289
    %v1292 = vunpack.c.l.b16 %v290
    %v1293 = vunpack.c.h.b16 %v290
    %v1294 = vunpack.c.l.b16 %v291
    %v1295 = vunpack.c.h.b16 %v291
    %v1296 = vunpack.c.l.b16 %v292
    %v1297 = vunpack.c.h.b16 %v292
    %v1298 = vunpack.c.l.b16 %v293
    %v1299 = vunpack.c.h.b16 %v293
    %v1300 = vunpack.c.l.b16 %v294
    %v1301 = vunpack.c.h.b16 %v294
    %v1302 = vunpack.c.l.b16 %v295
    %v1303 = vunpack.c.h.b16 %v295
    %v1304 = vunpack.c.l.b16 %v296
    %v1305 = vunpack.c.h.b16 %v296
    %v1306 = vunpack.c.l.b16 %v297
    %v1307 = vunpack.c.h.b16 %v297
    %v1308 = vunpack.c.l.b16 %v298
    %v1309 = vunpack.c.h.b16 %v298
    %v1310 = vunpack.c.l.b16 %v299
    %v1311 = vunpack.c.h.b16 %v299
    %v1312 = vunpack.c.l.b16 %v300
    %v1313 = vunpack.c.h.b16 %v300
    %v1314 = vunpack.c.l.b16 %v301
    %v1315 = vunpack.c.h.b16 %v301
    %v1316 = vunpack.c.l.b16 %v302
    %v1317 = vunpack.c.h.b16 %v302
    %v1318 = vunpack.c.l.b16 %v303
    %v1319 = vunpack.c.h.b16 %v303
    %v1320 = vunpack.c.l.b16 %v304
    %v1321 = vunpack.c.h.b16 %v304
    %v1322 = vunpack.c.l.b16 %v305
    %v1323 = vunpack.c.h.b16 %v305
    %v1324 = vunpack.c.l.b16 %v306
    %v1325 = vunpack.c.h.b16 %v306
    %v1326 = vunpack.c.l.b16 %v307
    %v1327 = vunpack.c.h.b16 %v307
    %v1328 = vunpack.c.l.b16 %v308
    %v1329 = vunpack.c.h.b16 %v308
    %v1330 = vunpack.c.l.b16 %v309
    %v1331 = vunpack.c.h.b16 %v309
    %v1332 = vunpack.c.l.b16 %v310
    %v1333 = vunpack.c.h.b16 %v310
    %v1334 = vunpack.c.l.b16 %v311
    %v1335 = vunpack.c.h.b16 %v311
    %v1336 = vunpack.c.l.b16 %v312
    %v1337 = vunpack.c.h.b16 %v312
    %v1338 = vunpack.c.l.b16 %v313
    %v1339 = vunpack.c.h.b16 %v313
    %v1340 = vunpack.c.l.b16 %v314
    %v1341 = vunpack.c.h.b16 %v314
    %v1342 = vunpack.c.l.b16 %v315
    %v1343 = vunpack.c.h.b16 %v315
    %v1344 = vunpack.c.l.b16 %v316
    %v1345 = vunpack.c.h.b16 %v316
    %v1346 = vunpack.c.l.b16 %v317
    %v1347 = vunpack.c.h.b16 %v317
    %v1348 = vunpack.c.l.b16 %v318
    %v1349 = vunpack.c.h.b16 %v318
    %v1350 = vunpack.c.l.b16 %v319
    %v1351 = vunpack.c.h.b16 %v319
    %v1352 = vunpack.c.l.b16 %v320
    %v1353 = vunpack.c.h.b16 %v320
    %v1354 = vunpack.c.l.b16 %v321
    %v1355 = vunpack.c.h.b16 %v321
    %v1356 = vunpack.c.l.b16 %v322
    %v1357 = vunpack.c.h.b16 %v322
    %v1358 = vunpack.c.l.b16 %v323
    %v1359 = vunpack.c.h.b16 %v323
    %v1360 = vunpack.c.l.b16 %v324
    %v1361 = vunpack.c.h.b16 %v324
    %v1362 = vunpack.c.l.b16 %v325
    %v1363 = vunpack.c.h.b16 %v325
    %v1364 = vunpack.c.l.b16 %v326
    %v1365 = vunpack.c.h.b16 %v326
    %v1366 = vunpack.c.l.b16 %v327
    %v1367 = vunpack.c.h.b16 %v327
    %v1368 = vunpack.c.l.b16 %v328
    %v1369 = vunpack.c.h.b16 %v328
    %v1370 = vunpack.c.l.b16 %v329
    %v1371 = vunpack.c.h.b16 %v329
    %v1372 = vunpack.c.l.b16 %v330
    %v1373 = vunpack.c.h.b16 %v330
    %v1374 = vunpack.c.l.b16 %v331
    %v1375 = vunpack.c.h.b16 %v331
    %v1376 = vunpack.c.l.b16 %v332
    %v1377 = vunpack.c.h.b16 %v332
    %v1378 = vunpack.c.l.b16 %v333
    %v1379 = vunpack.c.h.b16 %v333
    %v1380 = vunpack.c.l.b16 %v334
    %v1381 = vunpack.c.h.b16 %v334
    %v1382 = vunpack.c.l.b16 %v335
    %v1383 = vunpack.c.h.b16 %v335
    %v1384 = vunpack.c.l.b16 %v336
    %v1385 = vunpack.c.h.b16 %v336
    %v1386 = vunpack.c.l.b16 %v337
    %v1387 = vunpack.c.h.b16 %v337
    %v1388 = vunpack.c.l.b16 %v338
    %v1389 = vunpack.c.h.b16 %v338
    %v1390 = vunpack.c.l.b16 %v339
    %v1391 = vunpack.c.h.b16 %v339
    %v1392 = vunpack.c.l.b16 %v340
    %v1393 = vunpack.c.h.b16 %v340
    %v1394 = vunpack.c.l.b16 %v341
    %v1395 = vunpack.c.h.b16 %v341
    %v1396 = vunpack.c.l.b16 %v342
    %v1397 = vunpack.c.h.b16 %v342
    %v1398 = vunpack.c.l.b16 %v343
    %v1399 = vunpack.c.h.b16 %v343
    %v1400 = vunpack.c.l.b16 %v344
    %v1401 = vunpack.c.h.b16 %v344
    %v1402 = vunpack.c.l.b16 %v345
    %v1403 = vunpack.c.h.b16 %v345
    %v1404 = vunpack.c.l.b16 %v346
    %v1405 = vunpack.c.h.b16 %v346
    %v1406 = vunpack.c.l.b16 %v347
    %v1407 = vunpack.c.h.b16 %v347
    %v1408 = vunpack.c.l.b16 %v348
    %v1409 = vunpack.c.h.b16 %v348
    %v1410 = vunpack.c.l.b16 %v349
    %v1411 = vunpack.c.h.b16 %v349
    %v1412 = vunpack.c.l.b16 %v350
    %v1413 = vunpack.c.h.b16 %v350
    %v1414 = vunpack.c.l.b16 %v351
    %v1415 = vunpack.c.h.b16 %v351
    %v1416 = vunpack.c.l.b16 %v352
    %v1417 = vunpack.c.h.b16 %v352
    %v1418 = vunpack.c.l.b16 %v353
    %v1419 = vunpack.c.h.b16 %v353
    %v1420 = vunpack.c.l.b16 %v354
    %v1421 = vunpack.c.h.b16 %v354
    %v1422 = vunpack.c.l.b16 %v355
    %v1423 = vunpack.c.h.b16 %v355
    %v1424 = vunpack.c.l.b16 %v356
    %v1425 = vunpack.c.h.b16 %v356
    %v1426 = vunpack.c.l.b16 %v357
    %v1427 = vunpack.c.h.b16 %v357
    %v1428 = vunpack.c.l.b16 %v358
    %v1429 = vunpack.c.h.b16 %v358
    %v1430 = vunpack.c.l.b16 %v359
    %v1431 = vunpack.c.h.b16 %v359
    %v1432 = vunpack.c.l.b16 %v360
    %v1433 = vunpack.c.h.b16 %v360
    %v1434 = vunpack.c.l.b16 %v361
    %v1435 = vunpack.c.h.b16 %v361
    %v1436 = vunpack.c.l.b16 %v362
    %v1437 = vunpack.c.h.b16 %v362
    %v1438 = vunpack.c.l.b16 %v363
    %v1439 = vunpack.c.h.b16 %v363
    %v1440 = vunpack.c.l.b16 %v364
    %v1441 = vunpack.c.h.b16 %v364
    %v1442 = vunpack.c.l.b16 %v365
    %v1443 = vunpack.c.h.b16 %v365
    %v1444 = vunpack.c.l.b16 %v366
    %v1445 = vunpack.c.h.b16 %v366
    %v1446 = vunpack.c.l.b16 %v367
    %v1447 = vunpack.c.h.b16 %v367
    %v1448 = vunpack.c.l.b16 %v368
    %v1449 = vunpack.c.h.b16 %v368
    %v1450 = vunpack.c.l.b16 %v369
    %v1451 = vunpack.c.h.b16 %v369
    %v1452 = vunpack.c.l.b16 %v370
    %v1453 = vunpack.c.h.b16 %v370
    %v1454 = vunpack.c.l.b16 %v371
    %v1455 = vunpack.c.h.b16 %v371
    %v1456 = vunpack.c.l.b16 %v372
    %v1457 = vunpack.c.h.b16 %v372
    %v1458 = vunpack.c.l.b16 %v373
    %v1459 = vunpack.c.h.b16 %v373
    %v1460 = vunpack.c.l.b16 %v374
    %v1461 = vunpack.c.h.b16 %v374
    %v1462 = vunpack.c.l.b16 %v375
    %v1463 = vunpack.c.h.b16 %v375
    %v1464 = vunpack.c.l.b16 %v376
    %v1465 = vunpack.c.h.b16 %v376
    %v1466 = vunpack.c.l.b16 %v377
    %v1467 = vunpack.c.h.b16 %v377
    %v1468 = vunpack.c.l.b16 %v378
    %v1469 = vunpack.c.h.b16 %v378
    %v1470 = vunpack.c.l.b16 %v379
    %v1471 = vunpack.c.h.b16 %v379
    %v1472 = vunpack.c.l.b16 %v380
    %v1473 = vunpack.c.h.b16 %v380
    %v1474 = vunpack.c.l.b16 %v381
    %v1475 = vunpack.c.h.b16 %v381
    %v1476 = vunpack.c.l.b16 %v382
    %v1477 = vunpack.c.h.b16 %v382
    %v1478 = vunpack.c.l.b16 %v383
    %v1479 = vunpack.c.h.b16 %v383
    %v1480 = vunpack.c.l.b16 %v384
    %v1481 = vunpack.c.h.b16 %v384
    %v1482 = vunpack.c.l.b16 %v385
    %v1483 = vunpack.c.h.b16 %v385
    %v1484 = vpack.c.b16 %v976, %v972
    %v1485 = vpack.c.b16 %v977, %v973
    %v1486 = vpack.c.b16 %v978, %v974
    %v1487 = vpack.c.b16 %v979, %v975
    %v1488 = vpack.c.b16 %v984, %v980
    %v1489 = vpack.c.b16 %v985, %v981
    %v1490 = vpack.c.b16 %v986, %v982
    %v1491 = vpack.c.b16 %v987, %v983
    %v1492 = vpack.c.b16 %v992, %v988
    %v1493 = vpack.c.b16 %v993, %v989
    %v1494 = vpack.c.b16 %v994, %v990
    %v1495 = vpack.c.b16 %v995, %v991
    %v1496 = vpack.c.b16 %v1000, %v996
    %v1497 = vpack.c.b16 %v1001, %v997
    %v1498 = vpack.c.b16 %v1002, %v998
    %v1499 = vpack.c.b16 %v1003, %v999
    %v1500 = vpack.c.b16 %v1008, %v1004
    %v1501 = vpack.c.b16 %v1009, %v1005
    %v1502 = vpack.c.b16 %v1010, %v1006
    %v1503 = vpack.c.b16 %v1011, %v1007
    %v1504 = vpack.c.b16 %v1016, %v1012
    %v1505 = vpack.c.b16 %v1017, %v1013
    %v1506 = vpack.c.b16 %v1018, %v1014
    %v1507 = vpack.c.b16 %v1019, %v1015
    %v1508 = vpack.c.b16 %v1024, %v1020
    %v1509 = vpack.c.b16 %v1025, %v1021
    %v1510 = vpack.c.b16 %v1026, %v1022
    %v1511 = vpack.c.b16 %v1027, %v1023
    %v1512 = vpack.c.b16 %v1032, %v1028
    %v1513 = vpack.c.b16 %v1033, %v1029
    %v1514 = vpack.c.b16 %v1034, %v1030
    %v1515 = vpack.c.b16 %v1035, %v1031
    %v1516 = vpack.c.b16 %v1040, %v1036
    %v1517 = vpack.c.b16 %v1041, %v1037
    %v1518 = vpack.c.b16 %v1042, %v1038
    %v1519 = vpack.c.b16 %v1043, %v1039
    %v1520 = vpack.c.b16 %v1048, %v1044
    %v1521 = vpack.c.b16 %v1049, %v1045
    %v1522 = vpack.c.b16 %v1050, %v1046
    %v1523 = vpack.c.b16 %v1051, %v1047
    %v1524 = vpack.c.b16 %v1056, %v1052
    %v1525 = vpack.c.b16 %v1057, %v1053
    %v1526 = vpack.c.b16 %v1058, %v1054
    %v1527 = vpack.c.b16 %v1059, %v1055
    %v1528 = vpack.c.b16 %v1064, %v1060
    %v1529 = vpack.c.b16 %v1065, %v1061
    %v1530 = vpack.c.b16 %v1066, %v1062
    %v1531 = vpack.c.b16 %v1067, %v1063
    %v1532 = vpack.c.b16 %v1072, %v1068
    %v1533 = vpack.c.b16 %v1073, %v1069
    %v1534 = vpack.c.b16 %v1074, %v1070
    %v1535 = vpack.c.b16 %v1075, %v1071
    %v1536 = vpack.c.b16 %v1080, %v1076
    %v1537 = vpack.c.b16 %v1081, %v1077
    %v1538 = vpack.c.b16 %v1082, %v1078
    %v1539 = vpack.c.b16 %v1083, %v1079
    %v1540 = vpack.c.b16 %v1088, %v1084
    %v1541 = vpack.c.b16 %v1089, %v1085
    %v1542 = vpack.c.b16 %v1090, %v1086
    %v1543 = vpack.c.b16 %v1091, %v1087
    %v1544 = vpack.c.b16 %v1096, %v1092
    %v1545 = vpack.c.b16 %v1097, %v1093
    %v1546 = vpack.c.b16 %v1098, %v1094
    %v1547 = vpack.c.b16 %v1099, %v1095
    %v1548 = vpack.c.b16 %v1104, %v1100
    %v1549 = vpack.c.b16 %v1105, %v1101
    %v1550 = vpack.c.b16 %v1106, %v1102
    %v1551 = vpack.c.b16 %v1107, %v1103
    %v1552 = vpack.c.b16 %v1112, %v1108
    %v1553 = vpack.c.b16 %v1113, %v1109
    %v1554 = vpack.c.b16 %v1114, %v1110
    %v1555 = vpack.c.b16 %v1115, %v1111
    %v1556 = vpack.c.b16 %v1120, %v1116
    %v1557 = vpack.c.b16 %v1121, %v1117
    %v1558 = vpack.c.b16 %v1122, %v1118
    %v1559 = vpack.c.b16 %v1123, %v1119
    %v1560 = vpack.c.b16 %v1128, %v1124
    %v1561 = vpack.c.b16 %v1129, %v1125
    %v1562 = vpack.c.b16 %v1130, %v1126
    %v1563 = vpack.c.b16 %v1131, %v1127
    %v1564 = vpack.c.b16 %v1136, %v1132
    %v1565 = vpack.c.b16 %v1137, %v1133
    %v1566 = vpack.c.b16 %v1138, %v1134
    %v1567 = vpack.c.b16 %v1139, %v1135
    %v1568 = vpack.c.b16 %v1144, %v1140
    %v1569 = vpack.c.b16 %v1145, %v1141
    %v1570 = vpack.c.b16 %v1146, %v1142
    %v1571 = vpack.c.b16 %v1147, %v1143
    %v1572 = vpack.c.b16 %v1152, %v1148
    %v1573 = vpack.c.b16 %v1153, %v1149
    %v1574 = vpack.c.b16 %v1154, %v1150
    %v1575 = vpack.c.b16 %v1155, %v1151
    %v1576 = vpack.c.b16 %v1160, %v1156
    %v1577 = vpack.c.b16 %v1161, %v1157
    %v1578 = vpack.c.b16 %v1162, %v1158
    %v1579 = vpack.c.b16 %v1163, %v1159
    %v1580 = vpack.c.b16 %v1168, %v1164
    %v1581 = vpack.c.b16 %v1169, %v1165
    %v1582 = vpack.c.b16 %v1170, %v1166
    %v1583 = vpack.c.b16 %v1171, %v1167
    %v1584 = vpack.c.b16 %v1176, %v1172
    %v1585 = vpack.c.b16 %v1177, %v1173
    %v1586 = vpack.c.b16 %v1178, %v1174
    %v1587 = vpack.c.b16 %v1179, %v1175
    %v1588 = vpack.c.b16 %v1184, %v1180
    %v1589 = vpack.c.b16 %v1185, %v1181
    %v1590 = vpack.c.b16 %v1186, %v1182
    %v1591 = vpack.c.b16 %v1187, %v1183
    %v1592 = vpack.c.b16 %v1192, %v1188
    %v1593 = vpack.c.b16 %v1193, %v1189
    %v1594 = vpack.c.b16 %v1194, %v1190
    %v1595 = vpack.c.b16 %v1195, %v1191
    %v1596 = vpack.c.b16 %v1200, %v1196
    %v1597 = vpack.c.b16 %v1201, %v1197
    %v1598 = vpack.c.b16 %v1202, %v1198
    %v1599 = vpack.c.b16 %v1203, %v1199
    %v1600 = vpack.c.b16 %v1208, %v1204
    %v1601 = vpack.c.b16 %v1209, %v1205
    %v1602 = vpack.c.b16 %v1210, %v1206
    %v1603 = vpack.c.b16 %v1211, %v1207
    %v1604 = vpack.c.b16 %v1216, %v1212
    %v1605 = vpack.c.b16 %v1217, %v1213
    %v1606 = vpack.c.b16 %v1218, %v1214
    %v1607 = vpack.c.b16 %v1219, %v1215
    %v1608 = vpack.c.b16 %v1224, %v1220
    %v1609 = vpack.c.b16 %v1225, %v1221
    %v1610 = vpack.c.b16 %v1226, %v1222
    %v1611 = vpack.c.b16 %v1227, %v1223
    %v1612 = vpack.c.b16 %v1232, %v1228
    %v1613 = vpack.c.b16 %v1233, %v1229
    %v1614 = vpack.c.b16 %v1234, %v1230
    %v1615 = vpack.c.b16 %v1235, %v1231
    %v1616 = vpack.c.b16 %v1240, %v1236
    %v1617 = vpack.c.b16 %v1241, %v1237
    %v1618 = vpack.c.b16 %v1242, %v1238
    %v1619 = vpack.c.b16 %v1243, %v1239
    %v1620 = vpack.c.b16 %v1248, %v1244
    %v1621 = vpack.c.b16 %v1249, %v1245
    %v1622 = vpack.c.b16 %v1250, %v1246
    %v1623 = vpack.c.b16 %v1251, %v1247
    %v1624 = vpack.c.b16 %v1256, %v1252
    %v1625 = vpack.c.b16 %v1257, %v1253
    %v1626 = vpack.c.b16 %v1258, %v1254
    %v1627 = vpack.c.b16 %v1259, %v1255
    %v1628 = vpack.c.b16 %v1264, %v1260
    %v1629 = vpack.c.b16 %v1265, %v1261
    %v1630 = vpack.c.b16 %v1266, %v1262
    %v1631 = vpack.c.b16 %v1267, %v1263
    %v1632 = vpack.c.b16 %v1272, %v1268
    %v1633 = vpack.c.b16 %v1273, %v1269
    %v1634 = vpack.c.b16 %v1274, %v1270
    %v1635 = vpack.c.b16 %v1275, %v1271
    %v1636 = vpack.c.b16 %v1280, %v1276
    %v1637 = vpack.c.b16 %v1281, %v1277
    %v1638 = vpack.c.b16 %v1282, %v1278
    %v1639 = vpack.c.b16 %v1283, %v1279
    %v1640 = vpack.c.b16 %v1288, %v1284
    %v1641 = vpack.c.b16 %v1289, %v1285
    %v1642 = vpack.c.b16 %v1290, %v1286
    %v1643 = vpack.c.b16 %v1291, %v1287
    %v1644 = vpack.c.b16 %v1296, %v1292
    %v1645 = vpack.c.b16 %v1297, %v1293
    %v1646 = vpack.c.b16 %v1298, %v1294
    %v1647 = vpack.c.b16 %v1299, %v1295
    %v1648 = vpack.c.b16 %v1304, %v1300
    %v1649 = vpack.c.b16 %v1305, %v1301
    %v1650 = vpack.c.b16 %v1306, %v1302
    %v1651 = vpack.c.b16 %v1307, %v1303
    %v1652 = vpack.c.b16 %v1312, %v1308
    %v1653 = vpack.c.b16 %v1313, %v1309
    %v1654 = vpack.c.b16 %v1314, %v1310
    %v1655 = vpack.c.b16 %v1315, %v1311
    %v1656 = vpack.c.b16 %v1320, %v1316
    %v1657 = vpack.c.b16 %v1321, %v1317
    %v1658 = vpack.c.b16 %v1322, %v1318
    %v1659 = vpack.c.b16 %v1323, %v1319
    %v1660 = vpack.c.b16 %v1328, %v1324
    %v1661 = vpack.c.b16 %v1329, %v1325
    %v1662 = vpack.c.b16 %v1330, %v1326
    %v1663 = vpack.c.b16 %v1331, %v1327
    %v1664 = vpack.c.b16 %v1336, %v1332
    %v1665 = vpack.c.b16 %v1337, %v1333
    %v1666 = vpack.c.b16 %v1338, %v1334
    %v1667 = vpack.c.b16 %v1339, %v1335
    %v1668 = vpack.c.b16 %v1344, %v1340
    %v1669 = vpack.c.b16 %v1345, %v1341
    %v1670 = vpack.c.b16 %v1346, %v1342
    %v1671 = vpack.c.b16 %v1347, %v1343
    %v1672 = vpack.c.b16 %v1352, %v1348
    %v1673 = vpack.c.b16 %v1353, %v1349
    %v1674 = vpack.c.b16 %v1354, %v1350
    %v1675 = vpack.c.b16 %v1355, %v1351
    %v1676 = vpack.c.b16 %v1360, %v1356
    %v1677 = vpack.c.b16 %v1361, %v1357
    %v1678 = vpack.c.b16 %v1362, %v1358
    %v1679 = vpack.c.b16 %v1363, %v1359
    %v1680 = vpack.c.b16 %v1368, %v1364
    %v1681 = vpack.c.b16 %v1369, %v1365
    %v1682 = vpack.c.b16 %v1370, %v1366
    %v1683 = vpack.c.b16 %v1371, %v1367
    %v1684 = vpack.c.b16 %v1376, %v1372
    %v1685 = vpack.c.b16 %v1377, %v1373
    %v1686 = vpack.c.b16 %v1378, %v1374
    %v1687 = vpack.c.b16 %v1379, %v1375
    %v1688 = vpack.c.b16 %v1384, %v1380
    %v1689 = vpack.c.b16 %v1385, %v1381
    %v1690 = vpack.c.b16 %v1386, %v1382
    %v1691 = vpack.c.b16 %v1387, %v1383
    %v1692 = vpack.c.b16 %v1392, %v1388
    %v1693 = vpack.c.b16 %v1393, %v1389
    %v1694 = vpack.c.b16 %v1394, %v1390
    %v1695 = vpack.c.b16 %v1395, %v1391
    %v1696 = vpack.c.b16 %v1400, %v1396
    %v1697 = vpack.c.b16 %v1401, %v1397
    %v1698 = vpack.c.b16 %v1402, %v1398
    %v1699 = vpack.c.b16 %v1403, %v1399
    %v1700 = vpack.c.b16 %v1408, %v1404
    %v1701 = vpack.c.b16 %v1409, %v1405
    %v1702 = vpack.c.b16 %v1410, %v1406
    %v1703 = vpack.c.b16 %v1411, %v1407
    %v1704 = vpack.c.b16 %v1416, %v1412
    %v1705 = vpack.c.b16 %v1417, %v1413
    %v1706 = vpack.c.b16 %v1418, %v1414
    %v1707 = vpack.c.b16 %v1419, %v1415
    %v1708 = vpack.c.b16 %v1424, %v1420
    %v1709 = vpack.c.b16 %v1425, %v1421
    %v1710 = vpack.c.b16 %v1426, %v1422
    %v1711 = vpack.c.b16 %v1427, %v1423
    %v1712 = vpack.c.b16 %v1432, %v1428
    %v1713 = vpack.c.b16 %v1433, %v1429
    %v1714 = vpack.c.b16 %v1434, %v1430
    %v1715 = vpack.c.b16 %v1435, %v1431
    %v1716 = vpack.c.b16 %v1440, %v1436
    %v1717 = vpack.c.b16 %v1441, %v1437
    %v1718 = vpack.c.b16 %v1442, %v1438
    %v1719 = vpack.c.b16 %v1443, %v1439
    %v1720 = vpack.c.b16 %v1448, %v1444
    %v1721 = vpack.c.b16 %v1449, %v1445
    %v1722 = vpack.c.b16 %v1450, %v1446
    %v1723 = vpack.c.b16 %v1451, %v1447
    %v1724 = vpack.c.b16 %v1456, %v1452
    %v1725 = vpack.c.b16 %v1457, %v1453
    %v1726 = vpack.c.b16 %v1458, %v1454
    %v1727 = vpack.c.b16 %v1459, %v1455
    %v1728 = vpack.c.b16 %v1464, %v1460
    %v1729 = vpack.c.b16 %v1465, %v1461
    %v1730 = vpack.c.b16 %v1466, %v1462
    %v1731 = vpack.c.b16 %v1467, %v1463
    %v1732 = vpack.c.b16 %v1472, %v1468
    %v1733 = vpack.c.b16 %v1473, %v1469
    %v1734 = vpack.c.b16 %v1474, %v1470
    %v1735 = vpack.c.b16 %v1475, %v1471
    %v1736 = vpack.c.b16 %v1480, %v1476
    %v1737 = vpack.c.b16 %v1481, %v1477
    %v1738 = vpack.c.b16 %v1482, %v1478
    %v1739 = vpack.c.b16 %v1483, %v1479
    %1996 = vmatpush.bf16.msra.mxu0 %v1512
    %1997 = vmatpush.bf16.msra.mxu0 %v1508
    %1998 = vmatpush.bf16.msra.mxu0 %v1504
    %1999 = vmatpush.bf16.msra.mxu0 %v1500
    %2000 = vmatpush.bf16.msra.mxu0 %v1496
    %2001 = vmatpush.bf16.msra.mxu0 %v1492
    %2002 = vmatpush.bf16.msra.mxu0 %v1488
    %2003 = vmatpush.bf16.msra.mxu0 %v1484
    %2004 = vmatmul.bf16.gmra.mxu0 %v588
    %v2005 = vpop.f32.mrf.mxu0
    %v2006 = vadd.f32 %v388, %v2005
    %v2007 = vpop.f32.mrf.mxu0
    %v2008 = vadd.f32 %v388, %v2007
    %2009 = vmatmul.bf16.gmra.mxu0 %v596
    %v2010 = vpop.f32.mrf.mxu0
    %v2011 = vadd.f32 %v388, %v2010
    %v2012 = vpop.f32.mrf.mxu0
    %v2013 = vadd.f32 %v388, %v2012
    %2014 = vmatmul.bf16.gmra.mxu0 %v604
    %v2015 = vpop.f32.mrf.mxu0
    %v2016 = vadd.f32 %v388, %v2015
    %v2017 = vpop.f32.mrf.mxu0
    %v2018 = vadd.f32 %v388, %v2017
    %2019 = vmatmul.bf16.gmra.mxu0 %v612
    %v2020 = vpop.f32.mrf.mxu0
    %v2021 = vadd.f32 %v388, %v2020
    %v2022 = vpop.f32.mrf.mxu0
    %v2023 = vadd.f32 %v388, %v2022
    %2024 = vmatmul.bf16.gmra.mxu0 %v620
    %v2025 = vpop.f32.mrf.mxu0
    %v2026 = vadd.f32 %v388, %v2025
    %v2027 = vpop.f32.mrf.mxu0
    %v2028 = vadd.f32 %v388, %v2027
    %2029 = vmatmul.bf16.gmra.mxu0 %v628
    %v2030 = vpop.f32.mrf.mxu0
    %v2031 = vadd.f32 %v388, %v2030
    %v2032 = vpop.f32.mrf.mxu0
    %v2033 = vadd.f32 %v388, %v2032
    %2034 = vmatmul.bf16.gmra.mxu0 %v636
    %v2035 = vpop.f32.mrf.mxu0
    %v2036 = vadd.f32 %v388, %v2035
    %v2037 = vpop.f32.mrf.mxu0
    %v2038 = vadd.f32 %v388, %v2037
    %2039 = vmatmul.bf16.gmra.mxu0 %v644
    %v2040 = vpop.f32.mrf.mxu0
    %v2041 = vadd.f32 %v388, %v2040
    %v2042 = vpop.f32.mrf.mxu0
    %v2043 = vadd.f32 %v388, %v2042
    %2044 = vdwg.mxu0
    %2045 = vmatpush.bf16.msra.mxu0 %v1544
    %2046 = vmatpush.bf16.msra.mxu0 %v1540
    %2047 = vmatpush.bf16.msra.mxu0 %v1536
    %2048 = vmatpush.bf16.msra.mxu0 %v1532
    %2049 = vmatpush.bf16.msra.mxu0 %v1528
    %2050 = vmatpush.bf16.msra.mxu0 %v1524
    %2051 = vmatpush.bf16.msra.mxu0 %v1520
    %2052 = vmatpush.bf16.msra.mxu0 %v1516
    %2053 = vmatmul.bf16.gmra.mxu0 %v589
    %v2054 = vpop.f32.mrf.mxu0
    %v2055 = vadd.f32 %v2006, %v2054
    %v2056 = vpop.f32.mrf.mxu0
    %v2057 = vadd.f32 %v2008, %v2056
    %2058 = vmatmul.bf16.gmra.mxu0 %v597
    %v2059 = vpop.f32.mrf.mxu0
    %v2060 = vadd.f32 %v2011, %v2059
    %v2061 = vpop.f32.mrf.mxu0
    %v2062 = vadd.f32 %v2013, %v2061
    %2063 = vmatmul.bf16.gmra.mxu0 %v605
    %v2064 = vpop.f32.mrf.mxu0
    %v2065 = vadd.f32 %v2016, %v2064
    %v2066 = vpop.f32.mrf.mxu0
    %v2067 = vadd.f32 %v2018, %v2066
    %2068 = vmatmul.bf16.gmra.mxu0 %v613
    %v2069 = vpop.f32.mrf.mxu0
    %v2070 = vadd.f32 %v2021, %v2069
    %v2071 = vpop.f32.mrf.mxu0
    %v2072 = vadd.f32 %v2023, %v2071
    %2073 = vmatmul.bf16.gmra.mxu0 %v621
    %v2074 = vpop.f32.mrf.mxu0
    %v2075 = vadd.f32 %v2026, %v2074
    %v2076 = vpop.f32.mrf.mxu0
    %v2077 = vadd.f32 %v2028, %v2076
    %2078 = vmatmul.bf16.gmra.mxu0 %v629
    %v2079 = vpop.f32.mrf.mxu0
    %v2080 = vadd.f32 %v2031, %v2079
    %v2081 = vpop.f32.mrf.mxu0
    %v2082 = vadd.f32 %v2033, %v2081
    %2083 = vmatmul.bf16.gmra.mxu0 %v637
    %v2084 = vpop.f32.mrf.mxu0
    %v2085 = vadd.f32 %v2036, %v2084
    %v2086 = vpop.f32.mrf.mxu0
    %v2087 = vadd.f32 %v2038, %v2086
    %2088 = vmatmul.bf16.gmra.mxu0 %v645
    %v2089 = vpop.f32.mrf.mxu0
    %v2090 = vadd.f32 %v2041, %v2089
    %v2091 = vpop.f32.mrf.mxu0
    %v2092 = vadd.f32 %v2043, %v2091
    %2093 = vdwg.mxu0
    %2094 = vmatpush.bf16.msra.mxu0 %v1576
    %2095 = vmatpush.bf16.msra.mxu0 %v1572
    %2096 = vmatpush.bf16.msra.mxu0 %v1568
    %2097 = vmatpush.bf16.msra.mxu0 %v1564
    %2098 = vmatpush.bf16.msra.mxu0 %v1560
    %2099 = vmatpush.bf16.msra.mxu0 %v1556
    %2100 = vmatpush.bf16.msra.mxu0 %v1552
    %2101 = vmatpush.bf16.msra.mxu0 %v1548
    %2102 = vmatmul.bf16.gmra.mxu0 %v590
    %v2103 = vpop.f32.mrf.mxu0
    %v2104 = vadd.f32 %v2055, %v2103
    %v2105 = vpop.f32.mrf.mxu0
    %v2106 = vadd.f32 %v2057, %v2105
    %2107 = vmatmul.bf16.gmra.mxu0 %v598
    %v2108 = vpop.f32.mrf.mxu0
    %v2109 = vadd.f32 %v2060, %v2108
    %v2110 = vpop.f32.mrf.mxu0
    %v2111 = vadd.f32 %v2062, %v2110
    %2112 = vmatmul.bf16.gmra.mxu0 %v606
    %v2113 = vpop.f32.mrf.mxu0
    %v2114 = vadd.f32 %v2065, %v2113
    %v2115 = vpop.f32.mrf.mxu0
    %v2116 = vadd.f32 %v2067, %v2115
    %2117 = vmatmul.bf16.gmra.mxu0 %v614
    %v2118 = vpop.f32.mrf.mxu0
    %v2119 = vadd.f32 %v2070, %v2118
    %v2120 = vpop.f32.mrf.mxu0
    %v2121 = vadd.f32 %v2072, %v2120
    %2122 = vmatmul.bf16.gmra.mxu0 %v622
    %v2123 = vpop.f32.mrf.mxu0
    %v2124 = vadd.f32 %v2075, %v2123
    %v2125 = vpop.f32.mrf.mxu0
    %v2126 = vadd.f32 %v2077, %v2125
    %2127 = vmatmul.bf16.gmra.mxu0 %v630
    %v2128 = vpop.f32.mrf.mxu0
    %v2129 = vadd.f32 %v2080, %v2128
    %v2130 = vpop.f32.mrf.mxu0
    %v2131 = vadd.f32 %v2082, %v2130
    %2132 = vmatmul.bf16.gmra.mxu0 %v638
    %v2133 = vpop.f32.mrf.mxu0
    %v2134 = vadd.f32 %v2085, %v2133
    %v2135 = vpop.f32.mrf.mxu0
    %v2136 = vadd.f32 %v2087, %v2135
    %2137 = vmatmul.bf16.gmra.mxu0 %v646
    %v2138 = vpop.f32.mrf.mxu0
    %v2139 = vadd.f32 %v2090, %v2138
    %v2140 = vpop.f32.mrf.mxu0
    %v2141 = vadd.f32 %v2092, %v2140
    %2142 = vdwg.mxu0
    %2143 = vmatpush.bf16.msra.mxu0 %v1608
    %2144 = vmatpush.bf16.msra.mxu0 %v1604
    %2145 = vmatpush.bf16.msra.mxu0 %v1600
    %2146 = vmatpush.bf16.msra.mxu0 %v1596
    %2147 = vmatpush.bf16.msra.mxu0 %v1592
    %2148 = vmatpush.bf16.msra.mxu0 %v1588
    %2149 = vmatpush.bf16.msra.mxu0 %v1584
    %2150 = vmatpush.bf16.msra.mxu0 %v1580
    %2151 = vmatmul.bf16.gmra.mxu0 %v591
    %v2152 = vpop.f32.mrf.mxu0
    %v2153 = vadd.f32 %v2104, %v2152
    %v2154 = vpop.f32.mrf.mxu0
    %v2155 = vadd.f32 %v2106, %v2154
    %2156 = vmatmul.bf16.gmra.mxu0 %v599
    %v2157 = vpop.f32.mrf.mxu0
    %v2158 = vadd.f32 %v2109, %v2157
    %v2159 = vpop.f32.mrf.mxu0
    %v2160 = vadd.f32 %v2111, %v2159
    %2161 = vmatmul.bf16.gmra.mxu0 %v607
    %v2162 = vpop.f32.mrf.mxu0
    %v2163 = vadd.f32 %v2114, %v2162
    %v2164 = vpop.f32.mrf.mxu0
    %v2165 = vadd.f32 %v2116, %v2164
    %2166 = vmatmul.bf16.gmra.mxu0 %v615
    %v2167 = vpop.f32.mrf.mxu0
    %v2168 = vadd.f32 %v2119, %v2167
    %v2169 = vpop.f32.mrf.mxu0
    %v2170 = vadd.f32 %v2121, %v2169
    %2171 = vmatmul.bf16.gmra.mxu0 %v623
    %v2172 = vpop.f32.mrf.mxu0
    %v2173 = vadd.f32 %v2124, %v2172
    %v2174 = vpop.f32.mrf.mxu0
    %v2175 = vadd.f32 %v2126, %v2174
    %2176 = vmatmul.bf16.gmra.mxu0 %v631
    %v2177 = vpop.f32.mrf.mxu0
    %v2178 = vadd.f32 %v2129, %v2177
    %v2179 = vpop.f32.mrf.mxu0
    %v2180 = vadd.f32 %v2131, %v2179
    %2181 = vmatmul.bf16.gmra.mxu0 %v639
    %v2182 = vpop.f32.mrf.mxu0
    %v2183 = vadd.f32 %v2134, %v2182
    %v2184 = vpop.f32.mrf.mxu0
    %v2185 = vadd.f32 %v2136, %v2184
    %2186 = vmatmul.bf16.gmra.mxu0 %v647
    %v2187 = vpop.f32.mrf.mxu0
    %v2188 = vadd.f32 %v2139, %v2187
    %v2189 = vpop.f32.mrf.mxu0
    %v2190 = vadd.f32 %v2141, %v2189
    %2191 = vdwg.mxu0
    %2192 = vmatpush.bf16.msra.mxu0 %v1640
    %2193 = vmatpush.bf16.msra.mxu0 %v1636
    %2194 = vmatpush.bf16.msra.mxu0 %v1632
    %2195 = vmatpush.bf16.msra.mxu0 %v1628
    %2196 = vmatpush.bf16.msra.mxu0 %v1624
    %2197 = vmatpush.bf16.msra.mxu0 %v1620
    %2198 = vmatpush.bf16.msra.mxu0 %v1616
    %2199 = vmatpush.bf16.msra.mxu0 %v1612
    %2200 = vmatmul.bf16.gmra.mxu0 %v592
    %v2201 = vpop.f32.mrf.mxu0
    %v2202 = vadd.f32 %v2153, %v2201
    %v2203 = vpop.f32.mrf.mxu0
    %v2204 = vadd.f32 %v2155, %v2203
    %2205 = vmatmul.bf16.gmra.mxu0 %v600
    %v2206 = vpop.f32.mrf.mxu0
    %v2207 = vadd.f32 %v2158, %v2206
    %v2208 = vpop.f32.mrf.mxu0
    %v2209 = vadd.f32 %v2160, %v2208
    %2210 = vmatmul.bf16.gmra.mxu0 %v608
    %v2211 = vpop.f32.mrf.mxu0
    %v2212 = vadd.f32 %v2163, %v2211
    %v2213 = vpop.f32.mrf.mxu0
    %v2214 = vadd.f32 %v2165, %v2213
    %2215 = vmatmul.bf16.gmra.mxu0 %v616
    %v2216 = vpop.f32.mrf.mxu0
    %v2217 = vadd.f32 %v2168, %v2216
    %v2218 = vpop.f32.mrf.mxu0
    %v2219 = vadd.f32 %v2170, %v2218
    %2220 = vmatmul.bf16.gmra.mxu0 %v624
    %v2221 = vpop.f32.mrf.mxu0
    %v2222 = vadd.f32 %v2173, %v2221
    %v2223 = vpop.f32.mrf.mxu0
    %v2224 = vadd.f32 %v2175, %v2223
    %2225 = vmatmul.bf16.gmra.mxu0 %v632
    %v2226 = vpop.f32.mrf.mxu0
    %v2227 = vadd.f32 %v2178, %v2226
    %v2228 = vpop.f32.mrf.mxu0
    %v2229 = vadd.f32 %v2180, %v2228
    %2230 = vmatmul.bf16.gmra.mxu0 %v640
    %v2231 = vpop.f32.mrf.mxu0
    %v2232 = vadd.f32 %v2183, %v2231
    %v2233 = vpop.f32.mrf.mxu0
    %v2234 = vadd.f32 %v2185, %v2233
    %2235 = vmatmul.bf16.gmra.mxu0 %v648
    %v2236 = vpop.f32.mrf.mxu0
    %v2237 = vadd.f32 %v2188, %v2236
    %v2238 = vpop.f32.mrf.mxu0
    %v2239 = vadd.f32 %v2190, %v2238
    %2240 = vdwg.mxu0
    %2241 = vmatpush.bf16.msra.mxu0 %v1672
    %2242 = vmatpush.bf16.msra.mxu0 %v1668
    %2243 = vmatpush.bf16.msra.mxu0 %v1664
    %2244 = vmatpush.bf16.msra.mxu0 %v1660
    %2245 = vmatpush.bf16.msra.mxu0 %v1656
    %2246 = vmatpush.bf16.msra.mxu0 %v1652
    %2247 = vmatpush.bf16.msra.mxu0 %v1648
    %2248 = vmatpush.bf16.msra.mxu0 %v1644
    %2249 = vmatmul.bf16.gmra.mxu0 %v593
    %v2250 = vpop.f32.mrf.mxu0
    %v2251 = vadd.f32 %v2202, %v2250
    %v2252 = vpop.f32.mrf.mxu0
    %v2253 = vadd.f32 %v2204, %v2252
    %2254 = vmatmul.bf16.gmra.mxu0 %v601
    %v2255 = vpop.f32.mrf.mxu0
    %v2256 = vadd.f32 %v2207, %v2255
    %v2257 = vpop.f32.mrf.mxu0
    %v2258 = vadd.f32 %v2209, %v2257
    %2259 = vmatmul.bf16.gmra.mxu0 %v609
    %v2260 = vpop.f32.mrf.mxu0
    %v2261 = vadd.f32 %v2212, %v2260
    %v2262 = vpop.f32.mrf.mxu0
    %v2263 = vadd.f32 %v2214, %v2262
    %2264 = vmatmul.bf16.gmra.mxu0 %v617
    %v2265 = vpop.f32.mrf.mxu0
    %v2266 = vadd.f32 %v2217, %v2265
    %v2267 = vpop.f32.mrf.mxu0
    %v2268 = vadd.f32 %v2219, %v2267
    %2269 = vmatmul.bf16.gmra.mxu0 %v625
    %v2270 = vpop.f32.mrf.mxu0
    %v2271 = vadd.f32 %v2222, %v2270
    %v2272 = vpop.f32.mrf.mxu0
    %v2273 = vadd.f32 %v2224, %v2272
    %2274 = vmatmul.bf16.gmra.mxu0 %v633
    %v2275 = vpop.f32.mrf.mxu0
    %v2276 = vadd.f32 %v2227, %v2275
    %v2277 = vpop.f32.mrf.mxu0
    %v2278 = vadd.f32 %v2229, %v2277
    %2279 = vmatmul.bf16.gmra.mxu0 %v641
    %v2280 = vpop.f32.mrf.mxu0
    %v2281 = vadd.f32 %v2232, %v2280
    %v2282 = vpop.f32.mrf.mxu0
    %v2283 = vadd.f32 %v2234, %v2282
    %2284 = vmatmul.bf16.gmra.mxu0 %v649
    %v2285 = vpop.f32.mrf.mxu0
    %v2286 = vadd.f32 %v2237, %v2285
    %v2287 = vpop.f32.mrf.mxu0
    %v2288 = vadd.f32 %v2239, %v2287
    %2289 = vdwg.mxu0
    %2290 = vmatpush.bf16.msra.mxu0 %v1704
    %2291 = vmatpush.bf16.msra.mxu0 %v1700
    %2292 = vmatpush.bf16.msra.mxu0 %v1696
    %2293 = vmatpush.bf16.msra.mxu0 %v1692
    %2294 = vmatpush.bf16.msra.mxu0 %v1688
    %2295 = vmatpush.bf16.msra.mxu0 %v1684
    %2296 = vmatpush.bf16.msra.mxu0 %v1680
    %2297 = vmatpush.bf16.msra.mxu0 %v1676
    %2298 = vmatmul.bf16.gmra.mxu0 %v594
    %v2299 = vpop.f32.mrf.mxu0
    %v2300 = vadd.f32 %v2251, %v2299
    %v2301 = vpop.f32.mrf.mxu0
    %v2302 = vadd.f32 %v2253, %v2301
    %2303 = vmatmul.bf16.gmra.mxu0 %v602
    %v2304 = vpop.f32.mrf.mxu0
    %v2305 = vadd.f32 %v2256, %v2304
    %v2306 = vpop.f32.mrf.mxu0
    %v2307 = vadd.f32 %v2258, %v2306
    %2308 = vmatmul.bf16.gmra.mxu0 %v610
    %v2309 = vpop.f32.mrf.mxu0
    %v2310 = vadd.f32 %v2261, %v2309
    %v2311 = vpop.f32.mrf.mxu0
    %v2312 = vadd.f32 %v2263, %v2311
    %2313 = vmatmul.bf16.gmra.mxu0 %v618
    %v2314 = vpop.f32.mrf.mxu0
    %v2315 = vadd.f32 %v2266, %v2314
    %v2316 = vpop.f32.mrf.mxu0
    %v2317 = vadd.f32 %v2268, %v2316
    %2318 = vmatmul.bf16.gmra.mxu0 %v626
    %v2319 = vpop.f32.mrf.mxu0
    %v2320 = vadd.f32 %v2271, %v2319
    %v2321 = vpop.f32.mrf.mxu0
    %v2322 = vadd.f32 %v2273, %v2321
    %2323 = vmatmul.bf16.gmra.mxu0 %v634
    %v2324 = vpop.f32.mrf.mxu0
    %v2325 = vadd.f32 %v2276, %v2324
    %v2326 = vpop.f32.mrf.mxu0
    %v2327 = vadd.f32 %v2278, %v2326
    %2328 = vmatmul.bf16.gmra.mxu0 %v642
    %v2329 = vpop.f32.mrf.mxu0
    %v2330 = vadd.f32 %v2281, %v2329
    %v2331 = vpop.f32.mrf.mxu0
    %v2332 = vadd.f32 %v2283, %v2331
    %2333 = vmatmul.bf16.gmra.mxu0 %v650
    %v2334 = vpop.f32.mrf.mxu0
    %v2335 = vadd.f32 %v2286, %v2334
    %v2336 = vpop.f32.mrf.mxu0
    %v2337 = vadd.f32 %v2288, %v2336
    %2338 = vdwg.mxu0
    %2339 = vmatpush.bf16.msra.mxu0 %v1736
    %2340 = vmatpush.bf16.msra.mxu0 %v1732
    %2341 = vmatpush.bf16.msra.mxu0 %v1728
    %2342 = vmatpush.bf16.msra.mxu0 %v1724
    %2343 = vmatpush.bf16.msra.mxu0 %v1720
    %2344 = vmatpush.bf16.msra.mxu0 %v1716
    %2345 = vmatpush.bf16.msra.mxu0 %v1712
    %2346 = vmatpush.bf16.msra.mxu0 %v1708
    %2347 = vmatmul.bf16.gmra.mxu0 %v595
    %v2348 = vpop.f32.mrf.mxu0
    %v2349 = vadd.f32 %v2300, %v2348
    %v2350 = vpop.f32.mrf.mxu0
    %v2351 = vadd.f32 %v2302, %v2350
    %2352 = vmatmul.bf16.gmra.mxu0 %v603
    %v2353 = vpop.f32.mrf.mxu0
    %v2354 = vadd.f32 %v2305, %v2353
    %v2355 = vpop.f32.mrf.mxu0
    %v2356 = vadd.f32 %v2307, %v2355
    %2357 = vmatmul.bf16.gmra.mxu0 %v611
    %v2358 = vpop.f32.mrf.mxu0
    %v2359 = vadd.f32 %v2310, %v2358
    %v2360 = vpop.f32.mrf.mxu0
    %v2361 = vadd.f32 %v2312, %v2360
    %2362 = vmatmul.bf16.gmra.mxu0 %v619
    %v2363 = vpop.f32.mrf.mxu0
    %v2364 = vadd.f32 %v2315, %v2363
    %v2365 = vpop.f32.mrf.mxu0
    %v2366 = vadd.f32 %v2317, %v2365
    %2367 = vmatmul.bf16.gmra.mxu0 %v627
    %v2368 = vpop.f32.mrf.mxu0
    %v2369 = vadd.f32 %v2320, %v2368
    %v2370 = vpop.f32.mrf.mxu0
    %v2371 = vadd.f32 %v2322, %v2370
    %2372 = vmatmul.bf16.gmra.mxu0 %v635
    %v2373 = vpop.f32.mrf.mxu0
    %v2374 = vadd.f32 %v2325, %v2373
    %v2375 = vpop.f32.mrf.mxu0
    %v2376 = vadd.f32 %v2327, %v2375
    %2377 = vmatmul.bf16.gmra.mxu0 %v643
    %v2378 = vpop.f32.mrf.mxu0
    %v2379 = vadd.f32 %v2330, %v2378
    %v2380 = vpop.f32.mrf.mxu0
    %v2381 = vadd.f32 %v2332, %v2380
    %2382 = vmatmul.bf16.gmra.mxu0 %v651
    %v2383 = vpop.f32.mrf.mxu0
    %v2384 = vadd.f32 %v2335, %v2383
    %v2385 = vpop.f32.mrf.mxu0
    %v2386 = vadd.f32 %v2337, %v2385
    %2387 = vdwg.mxu0
    %2388 = vmatpush.bf16.msra.mxu0 %v1513
    %2389 = vmatpush.bf16.msra.mxu0 %v1509
    %2390 = vmatpush.bf16.msra.mxu0 %v1505
    %2391 = vmatpush.bf16.msra.mxu0 %v1501
    %2392 = vmatpush.bf16.msra.mxu0 %v1497
    %2393 = vmatpush.bf16.msra.mxu0 %v1493
    %2394 = vmatpush.bf16.msra.mxu0 %v1489
    %2395 = vmatpush.bf16.msra.mxu0 %v1485
    %2396 = vmatmul.bf16.gmra.mxu0 %v588
    %v2397 = vpop.f32.mrf.mxu0
    %v2398 = vadd.f32 %v389, %v2397
    %v2399 = vpop.f32.mrf.mxu0
    %v2400 = vadd.f32 %v389, %v2399
    %2401 = vmatmul.bf16.gmra.mxu0 %v596
    %v2402 = vpop.f32.mrf.mxu0
    %v2403 = vadd.f32 %v389, %v2402
    %v2404 = vpop.f32.mrf.mxu0
    %v2405 = vadd.f32 %v389, %v2404
    %2406 = vmatmul.bf16.gmra.mxu0 %v604
    %v2407 = vpop.f32.mrf.mxu0
    %v2408 = vadd.f32 %v389, %v2407
    %v2409 = vpop.f32.mrf.mxu0
    %v2410 = vadd.f32 %v389, %v2409
    %2411 = vmatmul.bf16.gmra.mxu0 %v612
    %v2412 = vpop.f32.mrf.mxu0
    %v2413 = vadd.f32 %v389, %v2412
    %v2414 = vpop.f32.mrf.mxu0
    %v2415 = vadd.f32 %v389, %v2414
    %2416 = vmatmul.bf16.gmra.mxu0 %v620
    %v2417 = vpop.f32.mrf.mxu0
    %v2418 = vadd.f32 %v389, %v2417
    %v2419 = vpop.f32.mrf.mxu0
    %v2420 = vadd.f32 %v389, %v2419
    %2421 = vmatmul.bf16.gmra.mxu0 %v628
    %v2422 = vpop.f32.mrf.mxu0
    %v2423 = vadd.f32 %v389, %v2422
    %v2424 = vpop.f32.mrf.mxu0
    %v2425 = vadd.f32 %v389, %v2424
    %2426 = vmatmul.bf16.gmra.mxu0 %v636
    %v2427 = vpop.f32.mrf.mxu0
    %v2428 = vadd.f32 %v389, %v2427
    %v2429 = vpop.f32.mrf.mxu0
    %v2430 = vadd.f32 %v389, %v2429
    %2431 = vmatmul.bf16.gmra.mxu0 %v644
    %v2432 = vpop.f32.mrf.mxu0
    %v2433 = vadd.f32 %v389, %v2432
    %v2434 = vpop.f32.mrf.mxu0
    %v2435 = vadd.f32 %v389, %v2434
    %2436 = vdwg.mxu0
    %2437 = vmatpush.bf16.msra.mxu0 %v1545
    %2438 = vmatpush.bf16.msra.mxu0 %v1541
    %2439 = vmatpush.bf16.msra.mxu0 %v1537
    %2440 = vmatpush.bf16.msra.mxu0 %v1533
    %2441 = vmatpush.bf16.msra.mxu0 %v1529
    %2442 = vmatpush.bf16.msra.mxu0 %v1525
    %2443 = vmatpush.bf16.msra.mxu0 %v1521
    %2444 = vmatpush.bf16.msra.mxu0 %v1517
    %2445 = vmatmul.bf16.gmra.mxu0 %v589
    %v2446 = vpop.f32.mrf.mxu0
    %v2447 = vadd.f32 %v2398, %v2446
    %v2448 = vpop.f32.mrf.mxu0
    %v2449 = vadd.f32 %v2400, %v2448
    %2450 = vmatmul.bf16.gmra.mxu0 %v597
    %v2451 = vpop.f32.mrf.mxu0
    %v2452 = vadd.f32 %v2403, %v2451
    %v2453 = vpop.f32.mrf.mxu0
    %v2454 = vadd.f32 %v2405, %v2453
    %2455 = vmatmul.bf16.gmra.mxu0 %v605
    %v2456 = vpop.f32.mrf.mxu0
    %v2457 = vadd.f32 %v2408, %v2456
    %v2458 = vpop.f32.mrf.mxu0
    %v2459 = vadd.f32 %v2410, %v2458
    %2460 = vmatmul.bf16.gmra.mxu0 %v613
    %v2461 = vpop.f32.mrf.mxu0
    %v2462 = vadd.f32 %v2413, %v2461
    %v2463 = vpop.f32.mrf.mxu0
    %v2464 = vadd.f32 %v2415, %v2463
    %2465 = vmatmul.bf16.gmra.mxu0 %v621
    %v2466 = vpop.f32.mrf.mxu0
    %v2467 = vadd.f32 %v2418, %v2466
    %v2468 = vpop.f32.mrf.mxu0
    %v2469 = vadd.f32 %v2420, %v2468
    %2470 = vmatmul.bf16.gmra.mxu0 %v629
    %v2471 = vpop.f32.mrf.mxu0
    %v2472 = vadd.f32 %v2423, %v2471
    %v2473 = vpop.f32.mrf.mxu0
    %v2474 = vadd.f32 %v2425, %v2473
    %2475 = vmatmul.bf16.gmra.mxu0 %v637
    %v2476 = vpop.f32.mrf.mxu0
    %v2477 = vadd.f32 %v2428, %v2476
    %v2478 = vpop.f32.mrf.mxu0
    %v2479 = vadd.f32 %v2430, %v2478
    %2480 = vmatmul.bf16.gmra.mxu0 %v645
    %v2481 = vpop.f32.mrf.mxu0
    %v2482 = vadd.f32 %v2433, %v2481
    %v2483 = vpop.f32.mrf.mxu0
    %v2484 = vadd.f32 %v2435, %v2483
    %2485 = vdwg.mxu0
    %2486 = vmatpush.bf16.msra.mxu0 %v1577
    %2487 = vmatpush.bf16.msra.mxu0 %v1573
    %2488 = vmatpush.bf16.msra.mxu0 %v1569
    %2489 = vmatpush.bf16.msra.mxu0 %v1565
    %2490 = vmatpush.bf16.msra.mxu0 %v1561
    %2491 = vmatpush.bf16.msra.mxu0 %v1557
    %2492 = vmatpush.bf16.msra.mxu0 %v1553
    %2493 = vmatpush.bf16.msra.mxu0 %v1549
    %2494 = vmatmul.bf16.gmra.mxu0 %v590
    %v2495 = vpop.f32.mrf.mxu0
    %v2496 = vadd.f32 %v2447, %v2495
    %v2497 = vpop.f32.mrf.mxu0
    %v2498 = vadd.f32 %v2449, %v2497
    %2499 = vmatmul.bf16.gmra.mxu0 %v598
    %v2500 = vpop.f32.mrf.mxu0
    %v2501 = vadd.f32 %v2452, %v2500
    %v2502 = vpop.f32.mrf.mxu0
    %v2503 = vadd.f32 %v2454, %v2502
    %2504 = vmatmul.bf16.gmra.mxu0 %v606
    %v2505 = vpop.f32.mrf.mxu0
    %v2506 = vadd.f32 %v2457, %v2505
    %v2507 = vpop.f32.mrf.mxu0
    %v2508 = vadd.f32 %v2459, %v2507
    %2509 = vmatmul.bf16.gmra.mxu0 %v614
    %v2510 = vpop.f32.mrf.mxu0
    %v2511 = vadd.f32 %v2462, %v2510
    %v2512 = vpop.f32.mrf.mxu0
    %v2513 = vadd.f32 %v2464, %v2512
    %2514 = vmatmul.bf16.gmra.mxu0 %v622
    %v2515 = vpop.f32.mrf.mxu0
    %v2516 = vadd.f32 %v2467, %v2515
    %v2517 = vpop.f32.mrf.mxu0
    %v2518 = vadd.f32 %v2469, %v2517
    %2519 = vmatmul.bf16.gmra.mxu0 %v630
    %v2520 = vpop.f32.mrf.mxu0
    %v2521 = vadd.f32 %v2472, %v2520
    %v2522 = vpop.f32.mrf.mxu0
    %v2523 = vadd.f32 %v2474, %v2522
    %2524 = vmatmul.bf16.gmra.mxu0 %v638
    %v2525 = vpop.f32.mrf.mxu0
    %v2526 = vadd.f32 %v2477, %v2525
    %v2527 = vpop.f32.mrf.mxu0
    %v2528 = vadd.f32 %v2479, %v2527
    %2529 = vmatmul.bf16.gmra.mxu0 %v646
    %v2530 = vpop.f32.mrf.mxu0
    %v2531 = vadd.f32 %v2482, %v2530
    %v2532 = vpop.f32.mrf.mxu0
    %v2533 = vadd.f32 %v2484, %v2532
    %2534 = vdwg.mxu0
    %2535 = vmatpush.bf16.msra.mxu0 %v1609
    %2536 = vmatpush.bf16.msra.mxu0 %v1605
    %2537 = vmatpush.bf16.msra.mxu0 %v1601
    %2538 = vmatpush.bf16.msra.mxu0 %v1597
    %2539 = vmatpush.bf16.msra.mxu0 %v1593
    %2540 = vmatpush.bf16.msra.mxu0 %v1589
    %2541 = vmatpush.bf16.msra.mxu0 %v1585
    %2542 = vmatpush.bf16.msra.mxu0 %v1581
    %2543 = vmatmul.bf16.gmra.mxu0 %v591
    %v2544 = vpop.f32.mrf.mxu0
    %v2545 = vadd.f32 %v2496, %v2544
    %v2546 = vpop.f32.mrf.mxu0
    %v2547 = vadd.f32 %v2498, %v2546
    %2548 = vmatmul.bf16.gmra.mxu0 %v599
    %v2549 = vpop.f32.mrf.mxu0
    %v2550 = vadd.f32 %v2501, %v2549
    %v2551 = vpop.f32.mrf.mxu0
    %v2552 = vadd.f32 %v2503, %v2551
    %2553 = vmatmul.bf16.gmra.mxu0 %v607
    %v2554 = vpop.f32.mrf.mxu0
    %v2555 = vadd.f32 %v2506, %v2554
    %v2556 = vpop.f32.mrf.mxu0
    %v2557 = vadd.f32 %v2508, %v2556
    %2558 = vmatmul.bf16.gmra.mxu0 %v615
    %v2559 = vpop.f32.mrf.mxu0
    %v2560 = vadd.f32 %v2511, %v2559
    %v2561 = vpop.f32.mrf.mxu0
    %v2562 = vadd.f32 %v2513, %v2561
    %2563 = vmatmul.bf16.gmra.mxu0 %v623
    %v2564 = vpop.f32.mrf.mxu0
    %v2565 = vadd.f32 %v2516, %v2564
    %v2566 = vpop.f32.mrf.mxu0
    %v2567 = vadd.f32 %v2518, %v2566
    %2568 = vmatmul.bf16.gmra.mxu0 %v631
    %v2569 = vpop.f32.mrf.mxu0
    %v2570 = vadd.f32 %v2521, %v2569
    %v2571 = vpop.f32.mrf.mxu0
    %v2572 = vadd.f32 %v2523, %v2571
    %2573 = vmatmul.bf16.gmra.mxu0 %v639
    %v2574 = vpop.f32.mrf.mxu0
    %v2575 = vadd.f32 %v2526, %v2574
    %v2576 = vpop.f32.mrf.mxu0
    %v2577 = vadd.f32 %v2528, %v2576
    %2578 = vmatmul.bf16.gmra.mxu0 %v647
    %v2579 = vpop.f32.mrf.mxu0
    %v2580 = vadd.f32 %v2531, %v2579
    %v2581 = vpop.f32.mrf.mxu0
    %v2582 = vadd.f32 %v2533, %v2581
    %2583 = vdwg.mxu0
    %2584 = vmatpush.bf16.msra.mxu0 %v1641
    %2585 = vmatpush.bf16.msra.mxu0 %v1637
    %2586 = vmatpush.bf16.msra.mxu0 %v1633
    %2587 = vmatpush.bf16.msra.mxu0 %v1629
    %2588 = vmatpush.bf16.msra.mxu0 %v1625
    %2589 = vmatpush.bf16.msra.mxu0 %v1621
    %2590 = vmatpush.bf16.msra.mxu0 %v1617
    %2591 = vmatpush.bf16.msra.mxu0 %v1613
    %2592 = vmatmul.bf16.gmra.mxu0 %v592
    %v2593 = vpop.f32.mrf.mxu0
    %v2594 = vadd.f32 %v2545, %v2593
    %v2595 = vpop.f32.mrf.mxu0
    %v2596 = vadd.f32 %v2547, %v2595
    %2597 = vmatmul.bf16.gmra.mxu0 %v600
    %v2598 = vpop.f32.mrf.mxu0
    %v2599 = vadd.f32 %v2550, %v2598
    %v2600 = vpop.f32.mrf.mxu0
    %v2601 = vadd.f32 %v2552, %v2600
    %2602 = vmatmul.bf16.gmra.mxu0 %v608
    %v2603 = vpop.f32.mrf.mxu0
    %v2604 = vadd.f32 %v2555, %v2603
    %v2605 = vpop.f32.mrf.mxu0
    %v2606 = vadd.f32 %v2557, %v2605
    %2607 = vmatmul.bf16.gmra.mxu0 %v616
    %v2608 = vpop.f32.mrf.mxu0
    %v2609 = vadd.f32 %v2560, %v2608
    %v2610 = vpop.f32.mrf.mxu0
    %v2611 = vadd.f32 %v2562, %v2610
    %2612 = vmatmul.bf16.gmra.mxu0 %v624
    %v2613 = vpop.f32.mrf.mxu0
    %v2614 = vadd.f32 %v2565, %v2613
    %v2615 = vpop.f32.mrf.mxu0
    %v2616 = vadd.f32 %v2567, %v2615
    %2617 = vmatmul.bf16.gmra.mxu0 %v632
    %v2618 = vpop.f32.mrf.mxu0
    %v2619 = vadd.f32 %v2570, %v2618
    %v2620 = vpop.f32.mrf.mxu0
    %v2621 = vadd.f32 %v2572, %v2620
    %2622 = vmatmul.bf16.gmra.mxu0 %v640
    %v2623 = vpop.f32.mrf.mxu0
    %v2624 = vadd.f32 %v2575, %v2623
    %v2625 = vpop.f32.mrf.mxu0
    %v2626 = vadd.f32 %v2577, %v2625
    %2627 = vmatmul.bf16.gmra.mxu0 %v648
    %v2628 = vpop.f32.mrf.mxu0
    %v2629 = vadd.f32 %v2580, %v2628
    %v2630 = vpop.f32.mrf.mxu0
    %v2631 = vadd.f32 %v2582, %v2630
    %2632 = vdwg.mxu0
    %2633 = vmatpush.bf16.msra.mxu0 %v1673
    %2634 = vmatpush.bf16.msra.mxu0 %v1669
    %2635 = vmatpush.bf16.msra.mxu0 %v1665
    %2636 = vmatpush.bf16.msra.mxu0 %v1661
    %2637 = vmatpush.bf16.msra.mxu0 %v1657
    %2638 = vmatpush.bf16.msra.mxu0 %v1653
    %2639 = vmatpush.bf16.msra.mxu0 %v1649
    %2640 = vmatpush.bf16.msra.mxu0 %v1645
    %2641 = vmatmul.bf16.gmra.mxu0 %v593
    %v2642 = vpop.f32.mrf.mxu0
    %v2643 = vadd.f32 %v2594, %v2642
    %v2644 = vpop.f32.mrf.mxu0
    %v2645 = vadd.f32 %v2596, %v2644
    %2646 = vmatmul.bf16.gmra.mxu0 %v601
    %v2647 = vpop.f32.mrf.mxu0
    %v2648 = vadd.f32 %v2599, %v2647
    %v2649 = vpop.f32.mrf.mxu0
    %v2650 = vadd.f32 %v2601, %v2649
    %2651 = vmatmul.bf16.gmra.mxu0 %v609
    %v2652 = vpop.f32.mrf.mxu0
    %v2653 = vadd.f32 %v2604, %v2652
    %v2654 = vpop.f32.mrf.mxu0
    %v2655 = vadd.f32 %v2606, %v2654
    %2656 = vmatmul.bf16.gmra.mxu0 %v617
    %v2657 = vpop.f32.mrf.mxu0
    %v2658 = vadd.f32 %v2609, %v2657
    %v2659 = vpop.f32.mrf.mxu0
    %v2660 = vadd.f32 %v2611, %v2659
    %2661 = vmatmul.bf16.gmra.mxu0 %v625
    %v2662 = vpop.f32.mrf.mxu0
    %v2663 = vadd.f32 %v2614, %v2662
    %v2664 = vpop.f32.mrf.mxu0
    %v2665 = vadd.f32 %v2616, %v2664
    %2666 = vmatmul.bf16.gmra.mxu0 %v633
    %v2667 = vpop.f32.mrf.mxu0
    %v2668 = vadd.f32 %v2619, %v2667
    %v2669 = vpop.f32.mrf.mxu0
    %v2670 = vadd.f32 %v2621, %v2669
    %2671 = vmatmul.bf16.gmra.mxu0 %v641
    %v2672 = vpop.f32.mrf.mxu0
    %v2673 = vadd.f32 %v2624, %v2672
    %v2674 = vpop.f32.mrf.mxu0
    %v2675 = vadd.f32 %v2626, %v2674
    %2676 = vmatmul.bf16.gmra.mxu0 %v649
    %v2677 = vpop.f32.mrf.mxu0
    %v2678 = vadd.f32 %v2629, %v2677
    %v2679 = vpop.f32.mrf.mxu0
    %v2680 = vadd.f32 %v2631, %v2679
    %2681 = vdwg.mxu0
    %2682 = vmatpush.bf16.msra.mxu0 %v1705
    %2683 = vmatpush.bf16.msra.mxu0 %v1701
    %2684 = vmatpush.bf16.msra.mxu0 %v1697
    %2685 = vmatpush.bf16.msra.mxu0 %v1693
    %2686 = vmatpush.bf16.msra.mxu0 %v1689
    %2687 = vmatpush.bf16.msra.mxu0 %v1685
    %2688 = vmatpush.bf16.msra.mxu0 %v1681
    %2689 = vmatpush.bf16.msra.mxu0 %v1677
    %2690 = vmatmul.bf16.gmra.mxu0 %v594
    %v2691 = vpop.f32.mrf.mxu0
    %v2692 = vadd.f32 %v2643, %v2691
    %v2693 = vpop.f32.mrf.mxu0
    %v2694 = vadd.f32 %v2645, %v2693
    %2695 = vmatmul.bf16.gmra.mxu0 %v602
    %v2696 = vpop.f32.mrf.mxu0
    %v2697 = vadd.f32 %v2648, %v2696
    %v2698 = vpop.f32.mrf.mxu0
    %v2699 = vadd.f32 %v2650, %v2698
    %2700 = vmatmul.bf16.gmra.mxu0 %v610
    %v2701 = vpop.f32.mrf.mxu0
    %v2702 = vadd.f32 %v2653, %v2701
    %v2703 = vpop.f32.mrf.mxu0
    %v2704 = vadd.f32 %v2655, %v2703
    %2705 = vmatmul.bf16.gmra.mxu0 %v618
    %v2706 = vpop.f32.mrf.mxu0
    %v2707 = vadd.f32 %v2658, %v2706
    %v2708 = vpop.f32.mrf.mxu0
    %v2709 = vadd.f32 %v2660, %v2708
    %2710 = vmatmul.bf16.gmra.mxu0 %v626
    %v2711 = vpop.f32.mrf.mxu0
    %v2712 = vadd.f32 %v2663, %v2711
    %v2713 = vpop.f32.mrf.mxu0
    %v2714 = vadd.f32 %v2665, %v2713
    %2715 = vmatmul.bf16.gmra.mxu0 %v634
    %v2716 = vpop.f32.mrf.mxu0
    %v2717 = vadd.f32 %v2668, %v2716
    %v2718 = vpop.f32.mrf.mxu0
    %v2719 = vadd.f32 %v2670, %v2718
    %2720 = vmatmul.bf16.gmra.mxu0 %v642
    %v2721 = vpop.f32.mrf.mxu0
    %v2722 = vadd.f32 %v2673, %v2721
    %v2723 = vpop.f32.mrf.mxu0
    %v2724 = vadd.f32 %v2675, %v2723
    %2725 = vmatmul.bf16.gmra.mxu0 %v650
    %v2726 = vpop.f32.mrf.mxu0
    %v2727 = vadd.f32 %v2678, %v2726
    %v2728 = vpop.f32.mrf.mxu0
    %v2729 = vadd.f32 %v2680, %v2728
    %2730 = vdwg.mxu0
    %2731 = vmatpush.bf16.msra.mxu0 %v1737
    %2732 = vmatpush.bf16.msra.mxu0 %v1733
    %2733 = vmatpush.bf16.msra.mxu0 %v1729
    %2734 = vmatpush.bf16.msra.mxu0 %v1725
    %2735 = vmatpush.bf16.msra.mxu0 %v1721
    %2736 = vmatpush.bf16.msra.mxu0 %v1717
    %2737 = vmatpush.bf16.msra.mxu0 %v1713
    %2738 = vmatpush.bf16.msra.mxu0 %v1709
    %2739 = vmatmul.bf16.gmra.mxu0 %v595
    %v2740 = vpop.f32.mrf.mxu0
    %v2741 = vadd.f32 %v2692, %v2740
    %v2742 = vpop.f32.mrf.mxu0
    %v2743 = vadd.f32 %v2694, %v2742
    %2744 = vmatmul.bf16.gmra.mxu0 %v603
    %v2745 = vpop.f32.mrf.mxu0
    %v2746 = vadd.f32 %v2697, %v2745
    %v2747 = vpop.f32.mrf.mxu0
    %v2748 = vadd.f32 %v2699, %v2747
    %2749 = vmatmul.bf16.gmra.mxu0 %v611
    %v2750 = vpop.f32.mrf.mxu0
    %v2751 = vadd.f32 %v2702, %v2750
    %v2752 = vpop.f32.mrf.mxu0
    %v2753 = vadd.f32 %v2704, %v2752
    %2754 = vmatmul.bf16.gmra.mxu0 %v619
    %v2755 = vpop.f32.mrf.mxu0
    %v2756 = vadd.f32 %v2707, %v2755
    %v2757 = vpop.f32.mrf.mxu0
    %v2758 = vadd.f32 %v2709, %v2757
    %2759 = vmatmul.bf16.gmra.mxu0 %v627
    %v2760 = vpop.f32.mrf.mxu0
    %v2761 = vadd.f32 %v2712, %v2760
    %v2762 = vpop.f32.mrf.mxu0
    %v2763 = vadd.f32 %v2714, %v2762
    %2764 = vmatmul.bf16.gmra.mxu0 %v635
    %v2765 = vpop.f32.mrf.mxu0
    %v2766 = vadd.f32 %v2717, %v2765
    %v2767 = vpop.f32.mrf.mxu0
    %v2768 = vadd.f32 %v2719, %v2767
    %2769 = vmatmul.bf16.gmra.mxu0 %v643
    %v2770 = vpop.f32.mrf.mxu0
    %v2771 = vadd.f32 %v2722, %v2770
    %v2772 = vpop.f32.mrf.mxu0
    %v2773 = vadd.f32 %v2724, %v2772
    %2774 = vmatmul.bf16.gmra.mxu0 %v651
    %v2775 = vpop.f32.mrf.mxu0
    %v2776 = vadd.f32 %v2727, %v2775
    %v2777 = vpop.f32.mrf.mxu0
    %v2778 = vadd.f32 %v2729, %v2777
    %2779 = vdwg.mxu0
    %2780 = vmatpush.bf16.msra.mxu0 %v1514
    %2781 = vmatpush.bf16.msra.mxu0 %v1510
    %2782 = vmatpush.bf16.msra.mxu0 %v1506
    %2783 = vmatpush.bf16.msra.mxu0 %v1502
    %2784 = vmatpush.bf16.msra.mxu0 %v1498
    %2785 = vmatpush.bf16.msra.mxu0 %v1494
    %2786 = vmatpush.bf16.msra.mxu0 %v1490
    %2787 = vmatpush.bf16.msra.mxu0 %v1486
    %2788 = vmatmul.bf16.gmra.mxu0 %v588
    %v2789 = vpop.f32.mrf.mxu0
    %v2790 = vadd.f32 %v390, %v2789
    %v2791 = vpop.f32.mrf.mxu0
    %v2792 = vadd.f32 %v390, %v2791
    %2793 = vmatmul.bf16.gmra.mxu0 %v596
    %v2794 = vpop.f32.mrf.mxu0
    %v2795 = vadd.f32 %v390, %v2794
    %v2796 = vpop.f32.mrf.mxu0
    %v2797 = vadd.f32 %v390, %v2796
    %2798 = vmatmul.bf16.gmra.mxu0 %v604
    %v2799 = vpop.f32.mrf.mxu0
    %v2800 = vadd.f32 %v390, %v2799
    %v2801 = vpop.f32.mrf.mxu0
    %v2802 = vadd.f32 %v390, %v2801
    %2803 = vmatmul.bf16.gmra.mxu0 %v612
    %v2804 = vpop.f32.mrf.mxu0
    %v2805 = vadd.f32 %v390, %v2804
    %v2806 = vpop.f32.mrf.mxu0
    %v2807 = vadd.f32 %v390, %v2806
    %2808 = vmatmul.bf16.gmra.mxu0 %v620
    %v2809 = vpop.f32.mrf.mxu0
    %v2810 = vadd.f32 %v390, %v2809
    %v2811 = vpop.f32.mrf.mxu0
    %v2812 = vadd.f32 %v390, %v2811
    %2813 = vmatmul.bf16.gmra.mxu0 %v628
    %v2814 = vpop.f32.mrf.mxu0
    %v2815 = vadd.f32 %v390, %v2814
    %v2816 = vpop.f32.mrf.mxu0
    %v2817 = vadd.f32 %v390, %v2816
    %2818 = vmatmul.bf16.gmra.mxu0 %v636
    %v2819 = vpop.f32.mrf.mxu0
    %v2820 = vadd.f32 %v390, %v2819
    %v2821 = vpop.f32.mrf.mxu0
    %v2822 = vadd.f32 %v390, %v2821
    %2823 = vmatmul.bf16.gmra.mxu0 %v644
    %v2824 = vpop.f32.mrf.mxu0
    %v2825 = vadd.f32 %v390, %v2824
    %v2826 = vpop.f32.mrf.mxu0
    %v2827 = vadd.f32 %v390, %v2826
    %2828 = vdwg.mxu0
    %2829 = vmatpush.bf16.msra.mxu0 %v1546
    %2830 = vmatpush.bf16.msra.mxu0 %v1542
    %2831 = vmatpush.bf16.msra.mxu0 %v1538
    %2832 = vmatpush.bf16.msra.mxu0 %v1534
    %2833 = vmatpush.bf16.msra.mxu0 %v1530
    %2834 = vmatpush.bf16.msra.mxu0 %v1526
    %2835 = vmatpush.bf16.msra.mxu0 %v1522
    %2836 = vmatpush.bf16.msra.mxu0 %v1518
    %2837 = vmatmul.bf16.gmra.mxu0 %v589
    %v2838 = vpop.f32.mrf.mxu0
    %v2839 = vadd.f32 %v2790, %v2838
    %v2840 = vpop.f32.mrf.mxu0
    %v2841 = vadd.f32 %v2792, %v2840
    %2842 = vmatmul.bf16.gmra.mxu0 %v597
    %v2843 = vpop.f32.mrf.mxu0
    %v2844 = vadd.f32 %v2795, %v2843
    %v2845 = vpop.f32.mrf.mxu0
    %v2846 = vadd.f32 %v2797, %v2845
    %2847 = vmatmul.bf16.gmra.mxu0 %v605
    %v2848 = vpop.f32.mrf.mxu0
    %v2849 = vadd.f32 %v2800, %v2848
    %v2850 = vpop.f32.mrf.mxu0
    %v2851 = vadd.f32 %v2802, %v2850
    %2852 = vmatmul.bf16.gmra.mxu0 %v613
    %v2853 = vpop.f32.mrf.mxu0
    %v2854 = vadd.f32 %v2805, %v2853
    %v2855 = vpop.f32.mrf.mxu0
    %v2856 = vadd.f32 %v2807, %v2855
    %2857 = vmatmul.bf16.gmra.mxu0 %v621
    %v2858 = vpop.f32.mrf.mxu0
    %v2859 = vadd.f32 %v2810, %v2858
    %v2860 = vpop.f32.mrf.mxu0
    %v2861 = vadd.f32 %v2812, %v2860
    %2862 = vmatmul.bf16.gmra.mxu0 %v629
    %v2863 = vpop.f32.mrf.mxu0
    %v2864 = vadd.f32 %v2815, %v2863
    %v2865 = vpop.f32.mrf.mxu0
    %v2866 = vadd.f32 %v2817, %v2865
    %2867 = vmatmul.bf16.gmra.mxu0 %v637
    %v2868 = vpop.f32.mrf.mxu0
    %v2869 = vadd.f32 %v2820, %v2868
    %v2870 = vpop.f32.mrf.mxu0
    %v2871 = vadd.f32 %v2822, %v2870
    %2872 = vmatmul.bf16.gmra.mxu0 %v645
    %v2873 = vpop.f32.mrf.mxu0
    %v2874 = vadd.f32 %v2825, %v2873
    %v2875 = vpop.f32.mrf.mxu0
    %v2876 = vadd.f32 %v2827, %v2875
    %2877 = vdwg.mxu0
    %2878 = vmatpush.bf16.msra.mxu0 %v1578
    %2879 = vmatpush.bf16.msra.mxu0 %v1574
    %2880 = vmatpush.bf16.msra.mxu0 %v1570
    %2881 = vmatpush.bf16.msra.mxu0 %v1566
    %2882 = vmatpush.bf16.msra.mxu0 %v1562
    %2883 = vmatpush.bf16.msra.mxu0 %v1558
    %2884 = vmatpush.bf16.msra.mxu0 %v1554
    %2885 = vmatpush.bf16.msra.mxu0 %v1550
    %2886 = vmatmul.bf16.gmra.mxu0 %v590
    %v2887 = vpop.f32.mrf.mxu0
    %v2888 = vadd.f32 %v2839, %v2887
    %v2889 = vpop.f32.mrf.mxu0
    %v2890 = vadd.f32 %v2841, %v2889
    %2891 = vmatmul.bf16.gmra.mxu0 %v598
    %v2892 = vpop.f32.mrf.mxu0
    %v2893 = vadd.f32 %v2844, %v2892
    %v2894 = vpop.f32.mrf.mxu0
    %v2895 = vadd.f32 %v2846, %v2894
    %2896 = vmatmul.bf16.gmra.mxu0 %v606
    %v2897 = vpop.f32.mrf.mxu0
    %v2898 = vadd.f32 %v2849, %v2897
    %v2899 = vpop.f32.mrf.mxu0
    %v2900 = vadd.f32 %v2851, %v2899
    %2901 = vmatmul.bf16.gmra.mxu0 %v614
    %v2902 = vpop.f32.mrf.mxu0
    %v2903 = vadd.f32 %v2854, %v2902
    %v2904 = vpop.f32.mrf.mxu0
    %v2905 = vadd.f32 %v2856, %v2904
    %2906 = vmatmul.bf16.gmra.mxu0 %v622
    %v2907 = vpop.f32.mrf.mxu0
    %v2908 = vadd.f32 %v2859, %v2907
    %v2909 = vpop.f32.mrf.mxu0
    %v2910 = vadd.f32 %v2861, %v2909
    %2911 = vmatmul.bf16.gmra.mxu0 %v630
    %v2912 = vpop.f32.mrf.mxu0
    %v2913 = vadd.f32 %v2864, %v2912
    %v2914 = vpop.f32.mrf.mxu0
    %v2915 = vadd.f32 %v2866, %v2914
    %2916 = vmatmul.bf16.gmra.mxu0 %v638
    %v2917 = vpop.f32.mrf.mxu0
    %v2918 = vadd.f32 %v2869, %v2917
    %v2919 = vpop.f32.mrf.mxu0
    %v2920 = vadd.f32 %v2871, %v2919
    %2921 = vmatmul.bf16.gmra.mxu0 %v646
    %v2922 = vpop.f32.mrf.mxu0
    %v2923 = vadd.f32 %v2874, %v2922
    %v2924 = vpop.f32.mrf.mxu0
    %v2925 = vadd.f32 %v2876, %v2924
    %2926 = vdwg.mxu0
    %2927 = vmatpush.bf16.msra.mxu0 %v1610
    %2928 = vmatpush.bf16.msra.mxu0 %v1606
    %2929 = vmatpush.bf16.msra.mxu0 %v1602
    %2930 = vmatpush.bf16.msra.mxu0 %v1598
    %2931 = vmatpush.bf16.msra.mxu0 %v1594
    %2932 = vmatpush.bf16.msra.mxu0 %v1590
    %2933 = vmatpush.bf16.msra.mxu0 %v1586
    %2934 = vmatpush.bf16.msra.mxu0 %v1582
    %2935 = vmatmul.bf16.gmra.mxu0 %v591
    %v2936 = vpop.f32.mrf.mxu0
    %v2937 = vadd.f32 %v2888, %v2936
    %v2938 = vpop.f32.mrf.mxu0
    %v2939 = vadd.f32 %v2890, %v2938
    %2940 = vmatmul.bf16.gmra.mxu0 %v599
    %v2941 = vpop.f32.mrf.mxu0
    %v2942 = vadd.f32 %v2893, %v2941
    %v2943 = vpop.f32.mrf.mxu0
    %v2944 = vadd.f32 %v2895, %v2943
    %2945 = vmatmul.bf16.gmra.mxu0 %v607
    %v2946 = vpop.f32.mrf.mxu0
    %v2947 = vadd.f32 %v2898, %v2946
    %v2948 = vpop.f32.mrf.mxu0
    %v2949 = vadd.f32 %v2900, %v2948
    %2950 = vmatmul.bf16.gmra.mxu0 %v615
    %v2951 = vpop.f32.mrf.mxu0
    %v2952 = vadd.f32 %v2903, %v2951
    %v2953 = vpop.f32.mrf.mxu0
    %v2954 = vadd.f32 %v2905, %v2953
    %2955 = vmatmul.bf16.gmra.mxu0 %v623
    %v2956 = vpop.f32.mrf.mxu0
    %v2957 = vadd.f32 %v2908, %v2956
    %v2958 = vpop.f32.mrf.mxu0
    %v2959 = vadd.f32 %v2910, %v2958
    %2960 = vmatmul.bf16.gmra.mxu0 %v631
    %v2961 = vpop.f32.mrf.mxu0
    %v2962 = vadd.f32 %v2913, %v2961
    %v2963 = vpop.f32.mrf.mxu0
    %v2964 = vadd.f32 %v2915, %v2963
    %2965 = vmatmul.bf16.gmra.mxu0 %v639
    %v2966 = vpop.f32.mrf.mxu0
    %v2967 = vadd.f32 %v2918, %v2966
    %v2968 = vpop.f32.mrf.mxu0
    %v2969 = vadd.f32 %v2920, %v2968
    %2970 = vmatmul.bf16.gmra.mxu0 %v647
    %v2971 = vpop.f32.mrf.mxu0
    %v2972 = vadd.f32 %v2923, %v2971
    %v2973 = vpop.f32.mrf.mxu0
    %v2974 = vadd.f32 %v2925, %v2973
    %2975 = vdwg.mxu0
    %2976 = vmatpush.bf16.msra.mxu0 %v1642
    %2977 = vmatpush.bf16.msra.mxu0 %v1638
    %2978 = vmatpush.bf16.msra.mxu0 %v1634
    %2979 = vmatpush.bf16.msra.mxu0 %v1630
    %2980 = vmatpush.bf16.msra.mxu0 %v1626
    %2981 = vmatpush.bf16.msra.mxu0 %v1622
    %2982 = vmatpush.bf16.msra.mxu0 %v1618
    %2983 = vmatpush.bf16.msra.mxu0 %v1614
    %2984 = vmatmul.bf16.gmra.mxu0 %v592
    %v2985 = vpop.f32.mrf.mxu0
    %v2986 = vadd.f32 %v2937, %v2985
    %v2987 = vpop.f32.mrf.mxu0
    %v2988 = vadd.f32 %v2939, %v2987
    %2989 = vmatmul.bf16.gmra.mxu0 %v600
    %v2990 = vpop.f32.mrf.mxu0
    %v2991 = vadd.f32 %v2942, %v2990
    %v2992 = vpop.f32.mrf.mxu0
    %v2993 = vadd.f32 %v2944, %v2992
    %2994 = vmatmul.bf16.gmra.mxu0 %v608
    %v2995 = vpop.f32.mrf.mxu0
    %v2996 = vadd.f32 %v2947, %v2995
    %v2997 = vpop.f32.mrf.mxu0
    %v2998 = vadd.f32 %v2949, %v2997
    %2999 = vmatmul.bf16.gmra.mxu0 %v616
    %v3000 = vpop.f32.mrf.mxu0
    %v3001 = vadd.f32 %v2952, %v3000
    %v3002 = vpop.f32.mrf.mxu0
    %v3003 = vadd.f32 %v2954, %v3002
    %3004 = vmatmul.bf16.gmra.mxu0 %v624
    %v3005 = vpop.f32.mrf.mxu0
    %v3006 = vadd.f32 %v2957, %v3005
    %v3007 = vpop.f32.mrf.mxu0
    %v3008 = vadd.f32 %v2959, %v3007
    %3009 = vmatmul.bf16.gmra.mxu0 %v632
    %v3010 = vpop.f32.mrf.mxu0
    %v3011 = vadd.f32 %v2962, %v3010
    %v3012 = vpop.f32.mrf.mxu0
    %v3013 = vadd.f32 %v2964, %v3012
    %3014 = vmatmul.bf16.gmra.mxu0 %v640
    %v3015 = vpop.f32.mrf.mxu0
    %v3016 = vadd.f32 %v2967, %v3015
    %v3017 = vpop.f32.mrf.mxu0
    %v3018 = vadd.f32 %v2969, %v3017
    %3019 = vmatmul.bf16.gmra.mxu0 %v648
    %v3020 = vpop.f32.mrf.mxu0
    %v3021 = vadd.f32 %v2972, %v3020
    %v3022 = vpop.f32.mrf.mxu0
    %v3023 = vadd.f32 %v2974, %v3022
    %3024 = vdwg.mxu0
    %3025 = vmatpush.bf16.msra.mxu0 %v1674
    %3026 = vmatpush.bf16.msra.mxu0 %v1670
    %3027 = vmatpush.bf16.msra.mxu0 %v1666
    %3028 = vmatpush.bf16.msra.mxu0 %v1662
    %3029 = vmatpush.bf16.msra.mxu0 %v1658
    %3030 = vmatpush.bf16.msra.mxu0 %v1654
    %3031 = vmatpush.bf16.msra.mxu0 %v1650
    %3032 = vmatpush.bf16.msra.mxu0 %v1646
    %3033 = vmatmul.bf16.gmra.mxu0 %v593
    %v3034 = vpop.f32.mrf.mxu0
    %v3035 = vadd.f32 %v2986, %v3034
    %v3036 = vpop.f32.mrf.mxu0
    %v3037 = vadd.f32 %v2988, %v3036
    %3038 = vmatmul.bf16.gmra.mxu0 %v601
    %v3039 = vpop.f32.mrf.mxu0
    %v3040 = vadd.f32 %v2991, %v3039
    %v3041 = vpop.f32.mrf.mxu0
    %v3042 = vadd.f32 %v2993, %v3041
    %3043 = vmatmul.bf16.gmra.mxu0 %v609
    %v3044 = vpop.f32.mrf.mxu0
    %v3045 = vadd.f32 %v2996, %v3044
    %v3046 = vpop.f32.mrf.mxu0
    %v3047 = vadd.f32 %v2998, %v3046
    %3048 = vmatmul.bf16.gmra.mxu0 %v617
    %v3049 = vpop.f32.mrf.mxu0
    %v3050 = vadd.f32 %v3001, %v3049
    %v3051 = vpop.f32.mrf.mxu0
    %v3052 = vadd.f32 %v3003, %v3051
    %3053 = vmatmul.bf16.gmra.mxu0 %v625
    %v3054 = vpop.f32.mrf.mxu0
    %v3055 = vadd.f32 %v3006, %v3054
    %v3056 = vpop.f32.mrf.mxu0
    %v3057 = vadd.f32 %v3008, %v3056
    %3058 = vmatmul.bf16.gmra.mxu0 %v633
    %v3059 = vpop.f32.mrf.mxu0
    %v3060 = vadd.f32 %v3011, %v3059
    %v3061 = vpop.f32.mrf.mxu0
    %v3062 = vadd.f32 %v3013, %v3061
    %3063 = vmatmul.bf16.gmra.mxu0 %v641
    %v3064 = vpop.f32.mrf.mxu0
    %v3065 = vadd.f32 %v3016, %v3064
    %v3066 = vpop.f32.mrf.mxu0
    %v3067 = vadd.f32 %v3018, %v3066
    %3068 = vmatmul.bf16.gmra.mxu0 %v649
    %v3069 = vpop.f32.mrf.mxu0
    %v3070 = vadd.f32 %v3021, %v3069
    %v3071 = vpop.f32.mrf.mxu0
    %v3072 = vadd.f32 %v3023, %v3071
    %3073 = vdwg.mxu0
    %3074 = vmatpush.bf16.msra.mxu0 %v1706
    %3075 = vmatpush.bf16.msra.mxu0 %v1702
    %3076 = vmatpush.bf16.msra.mxu0 %v1698
    %3077 = vmatpush.bf16.msra.mxu0 %v1694
    %3078 = vmatpush.bf16.msra.mxu0 %v1690
    %3079 = vmatpush.bf16.msra.mxu0 %v1686
    %3080 = vmatpush.bf16.msra.mxu0 %v1682
    %3081 = vmatpush.bf16.msra.mxu0 %v1678
    %3082 = vmatmul.bf16.gmra.mxu0 %v594
    %v3083 = vpop.f32.mrf.mxu0
    %v3084 = vadd.f32 %v3035, %v3083
    %v3085 = vpop.f32.mrf.mxu0
    %v3086 = vadd.f32 %v3037, %v3085
    %3087 = vmatmul.bf16.gmra.mxu0 %v602
    %v3088 = vpop.f32.mrf.mxu0
    %v3089 = vadd.f32 %v3040, %v3088
    %v3090 = vpop.f32.mrf.mxu0
    %v3091 = vadd.f32 %v3042, %v3090
    %3092 = vmatmul.bf16.gmra.mxu0 %v610
    %v3093 = vpop.f32.mrf.mxu0
    %v3094 = vadd.f32 %v3045, %v3093
    %v3095 = vpop.f32.mrf.mxu0
    %v3096 = vadd.f32 %v3047, %v3095
    %3097 = vmatmul.bf16.gmra.mxu0 %v618
    %v3098 = vpop.f32.mrf.mxu0
    %v3099 = vadd.f32 %v3050, %v3098
    %v3100 = vpop.f32.mrf.mxu0
    %v3101 = vadd.f32 %v3052, %v3100
    %3102 = vmatmul.bf16.gmra.mxu0 %v626
    %v3103 = vpop.f32.mrf.mxu0
    %v3104 = vadd.f32 %v3055, %v3103
    %v3105 = vpop.f32.mrf.mxu0
    %v3106 = vadd.f32 %v3057, %v3105
    %3107 = vmatmul.bf16.gmra.mxu0 %v634
    %v3108 = vpop.f32.mrf.mxu0
    %v3109 = vadd.f32 %v3060, %v3108
    %v3110 = vpop.f32.mrf.mxu0
    %v3111 = vadd.f32 %v3062, %v3110
    %3112 = vmatmul.bf16.gmra.mxu0 %v642
    %v3113 = vpop.f32.mrf.mxu0
    %v3114 = vadd.f32 %v3065, %v3113
    %v3115 = vpop.f32.mrf.mxu0
    %v3116 = vadd.f32 %v3067, %v3115
    %3117 = vmatmul.bf16.gmra.mxu0 %v650
    %v3118 = vpop.f32.mrf.mxu0
    %v3119 = vadd.f32 %v3070, %v3118
    %v3120 = vpop.f32.mrf.mxu0
    %v3121 = vadd.f32 %v3072, %v3120
    %3122 = vdwg.mxu0
    %3123 = vmatpush.bf16.msra.mxu0 %v1738
    %3124 = vmatpush.bf16.msra.mxu0 %v1734
    %3125 = vmatpush.bf16.msra.mxu0 %v1730
    %3126 = vmatpush.bf16.msra.mxu0 %v1726
    %3127 = vmatpush.bf16.msra.mxu0 %v1722
    %3128 = vmatpush.bf16.msra.mxu0 %v1718
    %3129 = vmatpush.bf16.msra.mxu0 %v1714
    %3130 = vmatpush.bf16.msra.mxu0 %v1710
    %3131 = vmatmul.bf16.gmra.mxu0 %v595
    %v3132 = vpop.f32.mrf.mxu0
    %v3133 = vadd.f32 %v3084, %v3132
    %v3134 = vpop.f32.mrf.mxu0
    %v3135 = vadd.f32 %v3086, %v3134
    %3136 = vmatmul.bf16.gmra.mxu0 %v603
    %v3137 = vpop.f32.mrf.mxu0
    %v3138 = vadd.f32 %v3089, %v3137
    %v3139 = vpop.f32.mrf.mxu0
    %v3140 = vadd.f32 %v3091, %v3139
    %3141 = vmatmul.bf16.gmra.mxu0 %v611
    %v3142 = vpop.f32.mrf.mxu0
    %v3143 = vadd.f32 %v3094, %v3142
    %v3144 = vpop.f32.mrf.mxu0
    %v3145 = vadd.f32 %v3096, %v3144
    %3146 = vmatmul.bf16.gmra.mxu0 %v619
    %v3147 = vpop.f32.mrf.mxu0
    %v3148 = vadd.f32 %v3099, %v3147
    %v3149 = vpop.f32.mrf.mxu0
    %v3150 = vadd.f32 %v3101, %v3149
    %3151 = vmatmul.bf16.gmra.mxu0 %v627
    %v3152 = vpop.f32.mrf.mxu0
    %v3153 = vadd.f32 %v3104, %v3152
    %v3154 = vpop.f32.mrf.mxu0
    %v3155 = vadd.f32 %v3106, %v3154
    %3156 = vmatmul.bf16.gmra.mxu0 %v635
    %v3157 = vpop.f32.mrf.mxu0
    %v3158 = vadd.f32 %v3109, %v3157
    %v3159 = vpop.f32.mrf.mxu0
    %v3160 = vadd.f32 %v3111, %v3159
    %3161 = vmatmul.bf16.gmra.mxu0 %v643
    %v3162 = vpop.f32.mrf.mxu0
    %v3163 = vadd.f32 %v3114, %v3162
    %v3164 = vpop.f32.mrf.mxu0
    %v3165 = vadd.f32 %v3116, %v3164
    %3166 = vmatmul.bf16.gmra.mxu0 %v651
    %v3167 = vpop.f32.mrf.mxu0
    %v3168 = vadd.f32 %v3119, %v3167
    %v3169 = vpop.f32.mrf.mxu0
    %v3170 = vadd.f32 %v3121, %v3169
    %3171 = vdwg.mxu0
    %3172 = vmatpush.bf16.msra.mxu0 %v1515
    %3173 = vmatpush.bf16.msra.mxu0 %v1511
    %3174 = vmatpush.bf16.msra.mxu0 %v1507
    %3175 = vmatpush.bf16.msra.mxu0 %v1503
    %3176 = vmatpush.bf16.msra.mxu0 %v1499
    %3177 = vmatpush.bf16.msra.mxu0 %v1495
    %3178 = vmatpush.bf16.msra.mxu0 %v1491
    %3179 = vmatpush.bf16.msra.mxu0 %v1487
    %3180 = vmatmul.bf16.gmra.mxu0 %v588
    %v3181 = vpop.f32.mrf.mxu0
    %v3182 = vadd.f32 %v391, %v3181
    %v3183 = vpop.f32.mrf.mxu0
    %v3184 = vadd.f32 %v391, %v3183
    %3185 = vmatmul.bf16.gmra.mxu0 %v596
    %v3186 = vpop.f32.mrf.mxu0
    %v3187 = vadd.f32 %v391, %v3186
    %v3188 = vpop.f32.mrf.mxu0
    %v3189 = vadd.f32 %v391, %v3188
    %3190 = vmatmul.bf16.gmra.mxu0 %v604
    %v3191 = vpop.f32.mrf.mxu0
    %v3192 = vadd.f32 %v391, %v3191
    %v3193 = vpop.f32.mrf.mxu0
    %v3194 = vadd.f32 %v391, %v3193
    %3195 = vmatmul.bf16.gmra.mxu0 %v612
    %v3196 = vpop.f32.mrf.mxu0
    %v3197 = vadd.f32 %v391, %v3196
    %v3198 = vpop.f32.mrf.mxu0
    %v3199 = vadd.f32 %v391, %v3198
    %3200 = vmatmul.bf16.gmra.mxu0 %v620
    %v3201 = vpop.f32.mrf.mxu0
    %v3202 = vadd.f32 %v391, %v3201
    %v3203 = vpop.f32.mrf.mxu0
    %v3204 = vadd.f32 %v391, %v3203
    %3205 = vmatmul.bf16.gmra.mxu0 %v628
    %v3206 = vpop.f32.mrf.mxu0
    %v3207 = vadd.f32 %v391, %v3206
    %v3208 = vpop.f32.mrf.mxu0
    %v3209 = vadd.f32 %v391, %v3208
    %3210 = vmatmul.bf16.gmra.mxu0 %v636
    %v3211 = vpop.f32.mrf.mxu0
    %v3212 = vadd.f32 %v391, %v3211
    %v3213 = vpop.f32.mrf.mxu0
    %v3214 = vadd.f32 %v391, %v3213
    %3215 = vmatmul.bf16.gmra.mxu0 %v644
    %v3216 = vpop.f32.mrf.mxu0
    %v3217 = vadd.f32 %v391, %v3216
    %v3218 = vpop.f32.mrf.mxu0
    %v3219 = vadd.f32 %v391, %v3218
    %3220 = vdwg.mxu0
    %3221 = vmatpush.bf16.msra.mxu0 %v1547
    %3222 = vmatpush.bf16.msra.mxu0 %v1543
    %3223 = vmatpush.bf16.msra.mxu0 %v1539
    %3224 = vmatpush.bf16.msra.mxu0 %v1535
    %3225 = vmatpush.bf16.msra.mxu0 %v1531
    %3226 = vmatpush.bf16.msra.mxu0 %v1527
    %3227 = vmatpush.bf16.msra.mxu0 %v1523
    %3228 = vmatpush.bf16.msra.mxu0 %v1519
    %3229 = vmatmul.bf16.gmra.mxu0 %v589
    %v3230 = vpop.f32.mrf.mxu0
    %v3231 = vadd.f32 %v3182, %v3230
    %v3232 = vpop.f32.mrf.mxu0
    %v3233 = vadd.f32 %v3184, %v3232
    %3234 = vmatmul.bf16.gmra.mxu0 %v597
    %v3235 = vpop.f32.mrf.mxu0
    %v3236 = vadd.f32 %v3187, %v3235
    %v3237 = vpop.f32.mrf.mxu0
    %v3238 = vadd.f32 %v3189, %v3237
    %3239 = vmatmul.bf16.gmra.mxu0 %v605
    %v3240 = vpop.f32.mrf.mxu0
    %v3241 = vadd.f32 %v3192, %v3240
    %v3242 = vpop.f32.mrf.mxu0
    %v3243 = vadd.f32 %v3194, %v3242
    %3244 = vmatmul.bf16.gmra.mxu0 %v613
    %v3245 = vpop.f32.mrf.mxu0
    %v3246 = vadd.f32 %v3197, %v3245
    %v3247 = vpop.f32.mrf.mxu0
    %v3248 = vadd.f32 %v3199, %v3247
    %3249 = vmatmul.bf16.gmra.mxu0 %v621
    %v3250 = vpop.f32.mrf.mxu0
    %v3251 = vadd.f32 %v3202, %v3250
    %v3252 = vpop.f32.mrf.mxu0
    %v3253 = vadd.f32 %v3204, %v3252
    %3254 = vmatmul.bf16.gmra.mxu0 %v629
    %v3255 = vpop.f32.mrf.mxu0
    %v3256 = vadd.f32 %v3207, %v3255
    %v3257 = vpop.f32.mrf.mxu0
    %v3258 = vadd.f32 %v3209, %v3257
    %3259 = vmatmul.bf16.gmra.mxu0 %v637
    %v3260 = vpop.f32.mrf.mxu0
    %v3261 = vadd.f32 %v3212, %v3260
    %v3262 = vpop.f32.mrf.mxu0
    %v3263 = vadd.f32 %v3214, %v3262
    %3264 = vmatmul.bf16.gmra.mxu0 %v645
    %v3265 = vpop.f32.mrf.mxu0
    %v3266 = vadd.f32 %v3217, %v3265
    %v3267 = vpop.f32.mrf.mxu0
    %v3268 = vadd.f32 %v3219, %v3267
    %3269 = vdwg.mxu0
    %3270 = vmatpush.bf16.msra.mxu0 %v1579
    %3271 = vmatpush.bf16.msra.mxu0 %v1575
    %3272 = vmatpush.bf16.msra.mxu0 %v1571
    %3273 = vmatpush.bf16.msra.mxu0 %v1567
    %3274 = vmatpush.bf16.msra.mxu0 %v1563
    %3275 = vmatpush.bf16.msra.mxu0 %v1559
    %3276 = vmatpush.bf16.msra.mxu0 %v1555
    %3277 = vmatpush.bf16.msra.mxu0 %v1551
    %3278 = vmatmul.bf16.gmra.mxu0 %v590
    %v3279 = vpop.f32.mrf.mxu0
    %v3280 = vadd.f32 %v3231, %v3279
    %v3281 = vpop.f32.mrf.mxu0
    %v3282 = vadd.f32 %v3233, %v3281
    %3283 = vmatmul.bf16.gmra.mxu0 %v598
    %v3284 = vpop.f32.mrf.mxu0
    %v3285 = vadd.f32 %v3236, %v3284
    %v3286 = vpop.f32.mrf.mxu0
    %v3287 = vadd.f32 %v3238, %v3286
    %3288 = vmatmul.bf16.gmra.mxu0 %v606
    %v3289 = vpop.f32.mrf.mxu0
    %v3290 = vadd.f32 %v3241, %v3289
    %v3291 = vpop.f32.mrf.mxu0
    %v3292 = vadd.f32 %v3243, %v3291
    %3293 = vmatmul.bf16.gmra.mxu0 %v614
    %v3294 = vpop.f32.mrf.mxu0
    %v3295 = vadd.f32 %v3246, %v3294
    %v3296 = vpop.f32.mrf.mxu0
    %v3297 = vadd.f32 %v3248, %v3296
    %3298 = vmatmul.bf16.gmra.mxu0 %v622
    %v3299 = vpop.f32.mrf.mxu0
    %v3300 = vadd.f32 %v3251, %v3299
    %v3301 = vpop.f32.mrf.mxu0
    %v3302 = vadd.f32 %v3253, %v3301
    %3303 = vmatmul.bf16.gmra.mxu0 %v630
    %v3304 = vpop.f32.mrf.mxu0
    %v3305 = vadd.f32 %v3256, %v3304
    %v3306 = vpop.f32.mrf.mxu0
    %v3307 = vadd.f32 %v3258, %v3306
    %3308 = vmatmul.bf16.gmra.mxu0 %v638
    %v3309 = vpop.f32.mrf.mxu0
    %v3310 = vadd.f32 %v3261, %v3309
    %v3311 = vpop.f32.mrf.mxu0
    %v3312 = vadd.f32 %v3263, %v3311
    %3313 = vmatmul.bf16.gmra.mxu0 %v646
    %v3314 = vpop.f32.mrf.mxu0
    %v3315 = vadd.f32 %v3266, %v3314
    %v3316 = vpop.f32.mrf.mxu0
    %v3317 = vadd.f32 %v3268, %v3316
    %3318 = vdwg.mxu0
    %3319 = vmatpush.bf16.msra.mxu0 %v1611
    %3320 = vmatpush.bf16.msra.mxu0 %v1607
    %3321 = vmatpush.bf16.msra.mxu0 %v1603
    %3322 = vmatpush.bf16.msra.mxu0 %v1599
    %3323 = vmatpush.bf16.msra.mxu0 %v1595
    %3324 = vmatpush.bf16.msra.mxu0 %v1591
    %3325 = vmatpush.bf16.msra.mxu0 %v1587
    %3326 = vmatpush.bf16.msra.mxu0 %v1583
    %3327 = vmatmul.bf16.gmra.mxu0 %v591
    %v3328 = vpop.f32.mrf.mxu0
    %v3329 = vadd.f32 %v3280, %v3328
    %v3330 = vpop.f32.mrf.mxu0
    %v3331 = vadd.f32 %v3282, %v3330
    %3332 = vmatmul.bf16.gmra.mxu0 %v599
    %v3333 = vpop.f32.mrf.mxu0
    %v3334 = vadd.f32 %v3285, %v3333
    %v3335 = vpop.f32.mrf.mxu0
    %v3336 = vadd.f32 %v3287, %v3335
    %3337 = vmatmul.bf16.gmra.mxu0 %v607
    %v3338 = vpop.f32.mrf.mxu0
    %v3339 = vadd.f32 %v3290, %v3338
    %v3340 = vpop.f32.mrf.mxu0
    %v3341 = vadd.f32 %v3292, %v3340
    %3342 = vmatmul.bf16.gmra.mxu0 %v615
    %v3343 = vpop.f32.mrf.mxu0
    %v3344 = vadd.f32 %v3295, %v3343
    %v3345 = vpop.f32.mrf.mxu0
    %v3346 = vadd.f32 %v3297, %v3345
    %3347 = vmatmul.bf16.gmra.mxu0 %v623
    %v3348 = vpop.f32.mrf.mxu0
    %v3349 = vadd.f32 %v3300, %v3348
    %v3350 = vpop.f32.mrf.mxu0
    %v3351 = vadd.f32 %v3302, %v3350
    %3352 = vmatmul.bf16.gmra.mxu0 %v631
    %v3353 = vpop.f32.mrf.mxu0
    %v3354 = vadd.f32 %v3305, %v3353
    %v3355 = vpop.f32.mrf.mxu0
    %v3356 = vadd.f32 %v3307, %v3355
    %3357 = vmatmul.bf16.gmra.mxu0 %v639
    %v3358 = vpop.f32.mrf.mxu0
    %v3359 = vadd.f32 %v3310, %v3358
    %v3360 = vpop.f32.mrf.mxu0
    %v3361 = vadd.f32 %v3312, %v3360
    %3362 = vmatmul.bf16.gmra.mxu0 %v647
    %v3363 = vpop.f32.mrf.mxu0
    %v3364 = vadd.f32 %v3315, %v3363
    %v3365 = vpop.f32.mrf.mxu0
    %v3366 = vadd.f32 %v3317, %v3365
    %3367 = vdwg.mxu0
    %3368 = vmatpush.bf16.msra.mxu0 %v1643
    %3369 = vmatpush.bf16.msra.mxu0 %v1639
    %3370 = vmatpush.bf16.msra.mxu0 %v1635
    %3371 = vmatpush.bf16.msra.mxu0 %v1631
    %3372 = vmatpush.bf16.msra.mxu0 %v1627
    %3373 = vmatpush.bf16.msra.mxu0 %v1623
    %3374 = vmatpush.bf16.msra.mxu0 %v1619
    %3375 = vmatpush.bf16.msra.mxu0 %v1615
    %3376 = vmatmul.bf16.gmra.mxu0 %v592
    %v3377 = vpop.f32.mrf.mxu0
    %v3378 = vadd.f32 %v3329, %v3377
    %v3379 = vpop.f32.mrf.mxu0
    %v3380 = vadd.f32 %v3331, %v3379
    %3381 = vmatmul.bf16.gmra.mxu0 %v600
    %v3382 = vpop.f32.mrf.mxu0
    %v3383 = vadd.f32 %v3334, %v3382
    %v3384 = vpop.f32.mrf.mxu0
    %v3385 = vadd.f32 %v3336, %v3384
    %3386 = vmatmul.bf16.gmra.mxu0 %v608
    %v3387 = vpop.f32.mrf.mxu0
    %v3388 = vadd.f32 %v3339, %v3387
    %v3389 = vpop.f32.mrf.mxu0
    %v3390 = vadd.f32 %v3341, %v3389
    %3391 = vmatmul.bf16.gmra.mxu0 %v616
    %v3392 = vpop.f32.mrf.mxu0
    %v3393 = vadd.f32 %v3344, %v3392
    %v3394 = vpop.f32.mrf.mxu0
    %v3395 = vadd.f32 %v3346, %v3394
    %3396 = vmatmul.bf16.gmra.mxu0 %v624
    %v3397 = vpop.f32.mrf.mxu0
    %v3398 = vadd.f32 %v3349, %v3397
    %v3399 = vpop.f32.mrf.mxu0
    %v3400 = vadd.f32 %v3351, %v3399
    %3401 = vmatmul.bf16.gmra.mxu0 %v632
    %v3402 = vpop.f32.mrf.mxu0
    %v3403 = vadd.f32 %v3354, %v3402
    %v3404 = vpop.f32.mrf.mxu0
    %v3405 = vadd.f32 %v3356, %v3404
    %3406 = vmatmul.bf16.gmra.mxu0 %v640
    %v3407 = vpop.f32.mrf.mxu0
    %v3408 = vadd.f32 %v3359, %v3407
    %v3409 = vpop.f32.mrf.mxu0
    %v3410 = vadd.f32 %v3361, %v3409
    %3411 = vmatmul.bf16.gmra.mxu0 %v648
    %v3412 = vpop.f32.mrf.mxu0
    %v3413 = vadd.f32 %v3364, %v3412
    %v3414 = vpop.f32.mrf.mxu0
    %v3415 = vadd.f32 %v3366, %v3414
    %3416 = vdwg.mxu0
    %3417 = vmatpush.bf16.msra.mxu0 %v1675
    %3418 = vmatpush.bf16.msra.mxu0 %v1671
    %3419 = vmatpush.bf16.msra.mxu0 %v1667
    %3420 = vmatpush.bf16.msra.mxu0 %v1663
    %3421 = vmatpush.bf16.msra.mxu0 %v1659
    %3422 = vmatpush.bf16.msra.mxu0 %v1655
    %3423 = vmatpush.bf16.msra.mxu0 %v1651
    %3424 = vmatpush.bf16.msra.mxu0 %v1647
    %3425 = vmatmul.bf16.gmra.mxu0 %v593
    %v3426 = vpop.f32.mrf.mxu0
    %v3427 = vadd.f32 %v3378, %v3426
    %v3428 = vpop.f32.mrf.mxu0
    %v3429 = vadd.f32 %v3380, %v3428
    %3430 = vmatmul.bf16.gmra.mxu0 %v601
    %v3431 = vpop.f32.mrf.mxu0
    %v3432 = vadd.f32 %v3383, %v3431
    %v3433 = vpop.f32.mrf.mxu0
    %v3434 = vadd.f32 %v3385, %v3433
    %3435 = vmatmul.bf16.gmra.mxu0 %v609
    %v3436 = vpop.f32.mrf.mxu0
    %v3437 = vadd.f32 %v3388, %v3436
    %v3438 = vpop.f32.mrf.mxu0
    %v3439 = vadd.f32 %v3390, %v3438
    %3440 = vmatmul.bf16.gmra.mxu0 %v617
    %v3441 = vpop.f32.mrf.mxu0
    %v3442 = vadd.f32 %v3393, %v3441
    %v3443 = vpop.f32.mrf.mxu0
    %v3444 = vadd.f32 %v3395, %v3443
    %3445 = vmatmul.bf16.gmra.mxu0 %v625
    %v3446 = vpop.f32.mrf.mxu0
    %v3447 = vadd.f32 %v3398, %v3446
    %v3448 = vpop.f32.mrf.mxu0
    %v3449 = vadd.f32 %v3400, %v3448
    %3450 = vmatmul.bf16.gmra.mxu0 %v633
    %v3451 = vpop.f32.mrf.mxu0
    %v3452 = vadd.f32 %v3403, %v3451
    %v3453 = vpop.f32.mrf.mxu0
    %v3454 = vadd.f32 %v3405, %v3453
    %3455 = vmatmul.bf16.gmra.mxu0 %v641
    %v3456 = vpop.f32.mrf.mxu0
    %v3457 = vadd.f32 %v3408, %v3456
    %v3458 = vpop.f32.mrf.mxu0
    %v3459 = vadd.f32 %v3410, %v3458
    %3460 = vmatmul.bf16.gmra.mxu0 %v649
    %v3461 = vpop.f32.mrf.mxu0
    %v3462 = vadd.f32 %v3413, %v3461
    %v3463 = vpop.f32.mrf.mxu0
    %v3464 = vadd.f32 %v3415, %v3463
    %3465 = vdwg.mxu0
    %3466 = vmatpush.bf16.msra.mxu0 %v1707
    %3467 = vmatpush.bf16.msra.mxu0 %v1703
    %3468 = vmatpush.bf16.msra.mxu0 %v1699
    %3469 = vmatpush.bf16.msra.mxu0 %v1695
    %3470 = vmatpush.bf16.msra.mxu0 %v1691
    %3471 = vmatpush.bf16.msra.mxu0 %v1687
    %3472 = vmatpush.bf16.msra.mxu0 %v1683
    %3473 = vmatpush.bf16.msra.mxu0 %v1679
    %3474 = vmatmul.bf16.gmra.mxu0 %v594
    %v3475 = vpop.f32.mrf.mxu0
    %v3476 = vadd.f32 %v3427, %v3475
    %v3477 = vpop.f32.mrf.mxu0
    %v3478 = vadd.f32 %v3429, %v3477
    %3479 = vmatmul.bf16.gmra.mxu0 %v602
    %v3480 = vpop.f32.mrf.mxu0
    %v3481 = vadd.f32 %v3432, %v3480
    %v3482 = vpop.f32.mrf.mxu0
    %v3483 = vadd.f32 %v3434, %v3482
    %3484 = vmatmul.bf16.gmra.mxu0 %v610
    %v3485 = vpop.f32.mrf.mxu0
    %v3486 = vadd.f32 %v3437, %v3485
    %v3487 = vpop.f32.mrf.mxu0
    %v3488 = vadd.f32 %v3439, %v3487
    %3489 = vmatmul.bf16.gmra.mxu0 %v618
    %v3490 = vpop.f32.mrf.mxu0
    %v3491 = vadd.f32 %v3442, %v3490
    %v3492 = vpop.f32.mrf.mxu0
    %v3493 = vadd.f32 %v3444, %v3492
    %3494 = vmatmul.bf16.gmra.mxu0 %v626
    %v3495 = vpop.f32.mrf.mxu0
    %v3496 = vadd.f32 %v3447, %v3495
    %v3497 = vpop.f32.mrf.mxu0
    %v3498 = vadd.f32 %v3449, %v3497
    %3499 = vmatmul.bf16.gmra.mxu0 %v634
    %v3500 = vpop.f32.mrf.mxu0
    %v3501 = vadd.f32 %v3452, %v3500
    %v3502 = vpop.f32.mrf.mxu0
    %v3503 = vadd.f32 %v3454, %v3502
    %3504 = vmatmul.bf16.gmra.mxu0 %v642
    %v3505 = vpop.f32.mrf.mxu0
    %v3506 = vadd.f32 %v3457, %v3505
    %v3507 = vpop.f32.mrf.mxu0
    %v3508 = vadd.f32 %v3459, %v3507
    %3509 = vmatmul.bf16.gmra.mxu0 %v650
    %v3510 = vpop.f32.mrf.mxu0
    %v3511 = vadd.f32 %v3462, %v3510
    %v3512 = vpop.f32.mrf.mxu0
    %v3513 = vadd.f32 %v3464, %v3512
    %3514 = vdwg.mxu0
    %3515 = vmatpush.bf16.msra.mxu0 %v1739
    %3516 = vmatpush.bf16.msra.mxu0 %v1735
    %3517 = vmatpush.bf16.msra.mxu0 %v1731
    %3518 = vmatpush.bf16.msra.mxu0 %v1727
    %3519 = vmatpush.bf16.msra.mxu0 %v1723
    %3520 = vmatpush.bf16.msra.mxu0 %v1719
    %3521 = vmatpush.bf16.msra.mxu0 %v1715
    %3522 = vmatpush.bf16.msra.mxu0 %v1711
    %3523 = vmatmul.bf16.gmra.mxu0 %v595
    %v3524 = vpop.f32.mrf.mxu0
    %v3525 = vadd.f32 %v3476, %v3524
    %v3526 = vpop.f32.mrf.mxu0
    %v3527 = vadd.f32 %v3478, %v3526
    %3528 = vmatmul.bf16.gmra.mxu0 %v603
    %v3529 = vpop.f32.mrf.mxu0
    %v3530 = vadd.f32 %v3481, %v3529
    %v3531 = vpop.f32.mrf.mxu0
    %v3532 = vadd.f32 %v3483, %v3531
    %3533 = vmatmul.bf16.gmra.mxu0 %v611
    %v3534 = vpop.f32.mrf.mxu0
    %v3535 = vadd.f32 %v3486, %v3534
    %v3536 = vpop.f32.mrf.mxu0
    %v3537 = vadd.f32 %v3488, %v3536
    %3538 = vmatmul.bf16.gmra.mxu0 %v619
    %v3539 = vpop.f32.mrf.mxu0
    %v3540 = vadd.f32 %v3491, %v3539
    %v3541 = vpop.f32.mrf.mxu0
    %v3542 = vadd.f32 %v3493, %v3541
    %3543 = vmatmul.bf16.gmra.mxu0 %v627
    %v3544 = vpop.f32.mrf.mxu0
    %v3545 = vadd.f32 %v3496, %v3544
    %v3546 = vpop.f32.mrf.mxu0
    %v3547 = vadd.f32 %v3498, %v3546
    %3548 = vmatmul.bf16.gmra.mxu0 %v635
    %v3549 = vpop.f32.mrf.mxu0
    %v3550 = vadd.f32 %v3501, %v3549
    %v3551 = vpop.f32.mrf.mxu0
    %v3552 = vadd.f32 %v3503, %v3551
    %3553 = vmatmul.bf16.gmra.mxu0 %v643
    %v3554 = vpop.f32.mrf.mxu0
    %v3555 = vadd.f32 %v3506, %v3554
    %v3556 = vpop.f32.mrf.mxu0
    %v3557 = vadd.f32 %v3508, %v3556
    %3558 = vmatmul.bf16.gmra.mxu0 %v651
    %v3559 = vpop.f32.mrf.mxu0
    %v3560 = vadd.f32 %v3511, %v3559
    %v3561 = vpop.f32.mrf.mxu0
    %v3562 = vadd.f32 %v3513, %v3561
    %3563 = vdwg.mxu0
    %v3564 = vmax.f32 %v2349, 0.0
    %v3565 = vmax.f32 %v2741, 0.0
    %v3566 = vmax.f32 %v3133, 0.0
    %v3567 = vmax.f32 %v3525, 0.0
    %v3568 = vmax.f32 %v2351, 0.0
    %v3569 = vmax.f32 %v2743, 0.0
    %v3570 = vmax.f32 %v3135, 0.0
    %v3571 = vmax.f32 %v3527, 0.0
    %v3572 = vmax.f32 %v2354, 0.0
    %v3573 = vmax.f32 %v2746, 0.0
    %v3574 = vmax.f32 %v3138, 0.0
    %v3575 = vmax.f32 %v3530, 0.0
    %v3576 = vmax.f32 %v2356, 0.0
    %v3577 = vmax.f32 %v2748, 0.0
    %v3578 = vmax.f32 %v3140, 0.0
    %v3579 = vmax.f32 %v3532, 0.0
    %v3580 = vmax.f32 %v2359, 0.0
    %v3581 = vmax.f32 %v2751, 0.0
    %v3582 = vmax.f32 %v3143, 0.0
    %v3583 = vmax.f32 %v3535, 0.0
    %v3584 = vmax.f32 %v2361, 0.0
    %v3585 = vmax.f32 %v2753, 0.0
    %v3586 = vmax.f32 %v3145, 0.0
    %v3587 = vmax.f32 %v3537, 0.0
    %v3588 = vmax.f32 %v2364, 0.0
    %v3589 = vmax.f32 %v2756, 0.0
    %v3590 = vmax.f32 %v3148, 0.0
    %v3591 = vmax.f32 %v3540, 0.0
    %v3592 = vmax.f32 %v2366, 0.0
    %v3593 = vmax.f32 %v2758, 0.0
    %v3594 = vmax.f32 %v3150, 0.0
    %v3595 = vmax.f32 %v3542, 0.0
    %v3596 = vmax.f32 %v2369, 0.0
    %v3597 = vmax.f32 %v2761, 0.0
    %v3598 = vmax.f32 %v3153, 0.0
    %v3599 = vmax.f32 %v3545, 0.0
    %v3600 = vmax.f32 %v2371, 0.0
    %v3601 = vmax.f32 %v2763, 0.0
    %v3602 = vmax.f32 %v3155, 0.0
    %v3603 = vmax.f32 %v3547, 0.0
    %v3604 = vmax.f32 %v2374, 0.0
    %v3605 = vmax.f32 %v2766, 0.0
    %v3606 = vmax.f32 %v3158, 0.0
    %v3607 = vmax.f32 %v3550, 0.0
    %v3608 = vmax.f32 %v2376, 0.0
    %v3609 = vmax.f32 %v2768, 0.0
    %v3610 = vmax.f32 %v3160, 0.0
    %v3611 = vmax.f32 %v3552, 0.0
    %v3612 = vmax.f32 %v2379, 0.0
    %v3613 = vmax.f32 %v2771, 0.0
    %v3614 = vmax.f32 %v3163, 0.0
    %v3615 = vmax.f32 %v3555, 0.0
    %v3616 = vmax.f32 %v2381, 0.0
    %v3617 = vmax.f32 %v2773, 0.0
    %v3618 = vmax.f32 %v3165, 0.0
    %v3619 = vmax.f32 %v3557, 0.0
    %v3620 = vmax.f32 %v2384, 0.0
    %v3621 = vmax.f32 %v2776, 0.0
    %v3622 = vmax.f32 %v3168, 0.0
    %v3623 = vmax.f32 %v3560, 0.0
    %v3624 = vmax.f32 %v2386, 0.0
    %v3625 = vmax.f32 %v2778, 0.0
    %v3626 = vmax.f32 %v3170, 0.0
    %v3627 = vmax.f32 %v3562, 0.0
    %v3628 = vpack.c.bf16 %v3568, %v3564
    %v3629 = vpack.c.bf16 %v3569, %v3565
    %v3630 = vpack.c.bf16 %v3570, %v3566
    %v3631 = vpack.c.bf16 %v3571, %v3567
    %v3632 = vpack.c.bf16 %v3576, %v3572
    %v3633 = vpack.c.bf16 %v3577, %v3573
    %v3634 = vpack.c.bf16 %v3578, %v3574
    %v3635 = vpack.c.bf16 %v3579, %v3575
    %v3636 = vpack.c.bf16 %v3584, %v3580
    %v3637 = vpack.c.bf16 %v3585, %v3581
    %v3638 = vpack.c.bf16 %v3586, %v3582
    %v3639 = vpack.c.bf16 %v3587, %v3583
    %v3640 = vpack.c.bf16 %v3592, %v3588
    %v3641 = vpack.c.bf16 %v3593, %v3589
    %v3642 = vpack.c.bf16 %v3594, %v3590
    %v3643 = vpack.c.bf16 %v3595, %v3591
    %v3644 = vpack.c.bf16 %v3600, %v3596
    %v3645 = vpack.c.bf16 %v3601, %v3597
    %v3646 = vpack.c.bf16 %v3602, %v3598
    %v3647 = vpack.c.bf16 %v3603, %v3599
    %v3648 = vpack.c.bf16 %v3608, %v3604
    %v3649 = vpack.c.bf16 %v3609, %v3605
    %v3650 = vpack.c.bf16 %v3610, %v3606
    %v3651 = vpack.c.bf16 %v3611, %v3607
    %v3652 = vpack.c.bf16 %v3616, %v3612
    %v3653 = vpack.c.bf16 %v3617, %v3613
    %v3654 = vpack.c.bf16 %v3618, %v3614
    %v3655 = vpack.c.bf16 %v3619, %v3615
    %v3656 = vpack.c.bf16 %v3624, %v3620
    %v3657 = vpack.c.bf16 %v3625, %v3621
    %v3658 = vpack.c.bf16 %v3626, %v3622
    %v3659 = vpack.c.bf16 %v3627, %v3623
    %v3660 = vld [vmem:[#allocation6] sm:$0xff]
    %v3661 = vld [vmem:[#allocation6 + $0x8] sm:$0xff]
    %v3662 = vld [vmem:[#allocation6 + $0x10] sm:$0xff]
    %v3663 = vld [vmem:[#allocation6 + $0x18] sm:$0xff]
    %v3664 = vld [vmem:[#allocation6 + $0x20] sm:$0xff]
    %v3665 = vld [vmem:[#allocation6 + $0x28] sm:$0xff]
    %v3666 = vld [vmem:[#allocation6 + $0x30] sm:$0xff]
    %v3667 = vld [vmem:[#allocation6 + $0x38] sm:$0xff]
    %v3668 = vld [vmem:[#allocation6 + $0x40] sm:$0xff]
    %v3669 = vld [vmem:[#allocation6 + $0x48] sm:$0xff]
    %v3670 = vld [vmem:[#allocation6 + $0x50] sm:$0xff]
    %v3671 = vld [vmem:[#allocation6 + $0x58] sm:$0xff]
    %v3672 = vld [vmem:[#allocation6 + $0x60] sm:$0xff]
    %v3673 = vld [vmem:[#allocation6 + $0x68] sm:$0xff]
    %v3674 = vld [vmem:[#allocation6 + $0x70] sm:$0xff]
    %v3675 = vld [vmem:[#allocation6 + $0x78] sm:$0xff]
    %v3676 = vld [vmem:[#allocation6 + $0x80] sm:$0xff]
    %v3677 = vld [vmem:[#allocation6 + $0x88] sm:$0xff]
    %v3678 = vld [vmem:[#allocation6 + $0x90] sm:$0xff]
    %v3679 = vld [vmem:[#allocation6 + $0x98] sm:$0xff]
    %v3680 = vld [vmem:[#allocation6 + $0xa0] sm:$0xff]
    %v3681 = vld [vmem:[#allocation6 + $0xa8] sm:$0xff]
    %v3682 = vld [vmem:[#allocation6 + $0xb0] sm:$0xff]
    %v3683 = vld [vmem:[#allocation6 + $0xb8] sm:$0xff]
    %v3684 = vld [vmem:[#allocation6 + $0xc0] sm:$0xff]
    %v3685 = vld [vmem:[#allocation6 + $0xc8] sm:$0xff]
    %v3686 = vld [vmem:[#allocation6 + $0xd0] sm:$0xff]
    %v3687 = vld [vmem:[#allocation6 + $0xd8] sm:$0xff]
    %v3688 = vld [vmem:[#allocation6 + $0xe0] sm:$0xff]
    %v3689 = vld [vmem:[#allocation6 + $0xe8] sm:$0xff]
    %v3690 = vld [vmem:[#allocation6 + $0xf0] sm:$0xff]
    %v3691 = vld [vmem:[#allocation6 + $0xf8] sm:$0xff]
    %v3692 = vld [vmem:[#allocation6 + $0x100] sm:$0xff]
    %v3693 = vld [vmem:[#allocation6 + $0x108] sm:$0xff]
    %v3694 = vld [vmem:[#allocation6 + $0x110] sm:$0xff]
    %v3695 = vld [vmem:[#allocation6 + $0x118] sm:$0xff]
    %v3696 = vld [vmem:[#allocation6 + $0x120] sm:$0xff]
    %v3697 = vld [vmem:[#allocation6 + $0x128] sm:$0xff]
    %v3698 = vld [vmem:[#allocation6 + $0x130] sm:$0xff]
    %v3699 = vld [vmem:[#allocation6 + $0x138] sm:$0xff]
    %v3700 = vld [vmem:[#allocation6 + $0x140] sm:$0xff]
    %v3701 = vld [vmem:[#allocation6 + $0x148] sm:$0xff]
    %v3702 = vld [vmem:[#allocation6 + $0x150] sm:$0xff]
    %v3703 = vld [vmem:[#allocation6 + $0x158] sm:$0xff]
    %v3704 = vld [vmem:[#allocation6 + $0x160] sm:$0xff]
    %v3705 = vld [vmem:[#allocation6 + $0x168] sm:$0xff]
    %v3706 = vld [vmem:[#allocation6 + $0x170] sm:$0xff]
    %v3707 = vld [vmem:[#allocation6 + $0x178] sm:$0xff]
    %v3708 = vld [vmem:[#allocation6 + $0x180] sm:$0xff]
    %v3709 = vld [vmem:[#allocation6 + $0x188] sm:$0xff]
    %v3710 = vld [vmem:[#allocation6 + $0x190] sm:$0xff]
    %v3711 = vld [vmem:[#allocation6 + $0x198] sm:$0xff]
    %v3712 = vld [vmem:[#allocation6 + $0x1a0] sm:$0xff]
    %v3713 = vld [vmem:[#allocation6 + $0x1a8] sm:$0xff]
    %v3714 = vld [vmem:[#allocation6 + $0x1b0] sm:$0xff]
    %v3715 = vld [vmem:[#allocation6 + $0x1b8] sm:$0xff]
    %v3716 = vld [vmem:[#allocation6 + $0x1c0] sm:$0xff]
    %v3717 = vld [vmem:[#allocation6 + $0x1c8] sm:$0xff]
    %v3718 = vld [vmem:[#allocation6 + $0x1d0] sm:$0xff]
    %v3719 = vld [vmem:[#allocation6 + $0x1d8] sm:$0xff]
    %v3720 = vld [vmem:[#allocation6 + $0x1e0] sm:$0xff]
    %v3721 = vld [vmem:[#allocation6 + $0x1e8] sm:$0xff]
    %v3722 = vld [vmem:[#allocation6 + $0x1f0] sm:$0xff]
    %v3723 = vld [vmem:[#allocation6 + $0x1f8] sm:$0xff]
    %v3724 = vld [vmem:[#allocation6 + $0x200] sm:$0xff]
    %v3725 = vld [vmem:[#allocation6 + $0x208] sm:$0xff]
    %v3726 = vld [vmem:[#allocation6 + $0x210] sm:$0xff]
    %v3727 = vld [vmem:[#allocation6 + $0x218] sm:$0xff]
    %v3728 = vld [vmem:[#allocation6 + $0x220] sm:$0xff]
    %v3729 = vld [vmem:[#allocation6 + $0x228] sm:$0xff]
    %v3730 = vld [vmem:[#allocation6 + $0x230] sm:$0xff]
    %v3731 = vld [vmem:[#allocation6 + $0x238] sm:$0xff]
    %v3732 = vld [vmem:[#allocation6 + $0x240] sm:$0xff]
    %v3733 = vld [vmem:[#allocation6 + $0x248] sm:$0xff]
    %v3734 = vld [vmem:[#allocation6 + $0x250] sm:$0xff]
    %v3735 = vld [vmem:[#allocation6 + $0x258] sm:$0xff]
    %v3736 = vld [vmem:[#allocation6 + $0x260] sm:$0xff]
    %v3737 = vld [vmem:[#allocation6 + $0x268] sm:$0xff]
    %v3738 = vld [vmem:[#allocation6 + $0x270] sm:$0xff]
    %v3739 = vld [vmem:[#allocation6 + $0x278] sm:$0xff]
    %v3740 = vld [vmem:[#allocation6 + $0x280] sm:$0xff]
    %v3741 = vld [vmem:[#allocation6 + $0x288] sm:$0xff]
    %v3742 = vld [vmem:[#allocation6 + $0x290] sm:$0xff]
    %v3743 = vld [vmem:[#allocation6 + $0x298] sm:$0xff]
    %v3744 = vld [vmem:[#allocation6 + $0x2a0] sm:$0xff]
    %v3745 = vld [vmem:[#allocation6 + $0x2a8] sm:$0xff]
    %v3746 = vld [vmem:[#allocation6 + $0x2b0] sm:$0xff]
    %v3747 = vld [vmem:[#allocation6 + $0x2b8] sm:$0xff]
    %v3748 = vld [vmem:[#allocation6 + $0x2c0] sm:$0xff]
    %v3749 = vld [vmem:[#allocation6 + $0x2c8] sm:$0xff]
    %v3750 = vld [vmem:[#allocation6 + $0x2d0] sm:$0xff]
    %v3751 = vld [vmem:[#allocation6 + $0x2d8] sm:$0xff]
    %v3752 = vld [vmem:[#allocation6 + $0x2e0] sm:$0xff]
    %v3753 = vld [vmem:[#allocation6 + $0x2e8] sm:$0xff]
    %v3754 = vld [vmem:[#allocation6 + $0x2f0] sm:$0xff]
    %v3755 = vld [vmem:[#allocation6 + $0x2f8] sm:$0xff]
    %v3756 = vld [vmem:[#allocation6 + $0x300] sm:$0xff]
    %v3757 = vld [vmem:[#allocation6 + $0x308] sm:$0xff]
    %v3758 = vld [vmem:[#allocation6 + $0x310] sm:$0xff]
    %v3759 = vld [vmem:[#allocation6 + $0x318] sm:$0xff]
    %v3760 = vld [vmem:[#allocation6 + $0x320] sm:$0xff]
    %v3761 = vld [vmem:[#allocation6 + $0x328] sm:$0xff]
    %v3762 = vld [vmem:[#allocation6 + $0x330] sm:$0xff]
    %v3763 = vld [vmem:[#allocation6 + $0x338] sm:$0xff]
    %v3764 = vld [vmem:[#allocation6 + $0x340] sm:$0xff]
    %v3765 = vld [vmem:[#allocation6 + $0x348] sm:$0xff]
    %v3766 = vld [vmem:[#allocation6 + $0x350] sm:$0xff]
    %v3767 = vld [vmem:[#allocation6 + $0x358] sm:$0xff]
    %v3768 = vld [vmem:[#allocation6 + $0x360] sm:$0xff]
    %v3769 = vld [vmem:[#allocation6 + $0x368] sm:$0xff]
    %v3770 = vld [vmem:[#allocation6 + $0x370] sm:$0xff]
    %v3771 = vld [vmem:[#allocation6 + $0x378] sm:$0xff]
    %v3772 = vld [vmem:[#allocation6 + $0x380] sm:$0xff]
    %v3773 = vld [vmem:[#allocation6 + $0x388] sm:$0xff]
    %v3774 = vld [vmem:[#allocation6 + $0x390] sm:$0xff]
    %v3775 = vld [vmem:[#allocation6 + $0x398] sm:$0xff]
    %v3776 = vld [vmem:[#allocation6 + $0x3a0] sm:$0xff]
    %v3777 = vld [vmem:[#allocation6 + $0x3a8] sm:$0xff]
    %v3778 = vld [vmem:[#allocation6 + $0x3b0] sm:$0xff]
    %v3779 = vld [vmem:[#allocation6 + $0x3b8] sm:$0xff]
    %v3780 = vld [vmem:[#allocation6 + $0x3c0] sm:$0xff]
    %v3781 = vld [vmem:[#allocation6 + $0x3c8] sm:$0xff]
    %v3782 = vld [vmem:[#allocation6 + $0x3d0] sm:$0xff]
    %v3783 = vld [vmem:[#allocation6 + $0x3d8] sm:$0xff]
    %v3784 = vld [vmem:[#allocation6 + $0x3e0] sm:$0xff]
    %v3785 = vld [vmem:[#allocation6 + $0x3e8] sm:$0xff]
    %v3786 = vld [vmem:[#allocation6 + $0x3f0] sm:$0xff]
    %v3787 = vld [vmem:[#allocation6 + $0x3f8] sm:$0xff]
    %v3788 = vld [vmem:[%s4] sm:$0xf]
    %v3790 = vperm.slane %v3788, 0
    %v3791 = vperm.slane %v3788, 1
    %v3792 = vperm.slane %v3788, 2
    %v3793 = vperm.slane %v3788, 3
    %v3926 = vunpack.c.l.b16 %v3660
    %v3927 = vunpack.c.h.b16 %v3660
    %v3928 = vunpack.c.l.b16 %v3661
    %v3929 = vunpack.c.h.b16 %v3661
    %v3930 = vunpack.c.l.b16 %v3662
    %v3931 = vunpack.c.h.b16 %v3662
    %v3932 = vunpack.c.l.b16 %v3663
    %v3933 = vunpack.c.h.b16 %v3663
    %v3934 = vunpack.c.l.b16 %v3664
    %v3935 = vunpack.c.h.b16 %v3664
    %v3936 = vunpack.c.l.b16 %v3665
    %v3937 = vunpack.c.h.b16 %v3665
    %v3938 = vunpack.c.l.b16 %v3666
    %v3939 = vunpack.c.h.b16 %v3666
    %v3940 = vunpack.c.l.b16 %v3667
    %v3941 = vunpack.c.h.b16 %v3667
    %v3942 = vunpack.c.l.b16 %v3668
    %v3943 = vunpack.c.h.b16 %v3668
    %v3944 = vunpack.c.l.b16 %v3669
    %v3945 = vunpack.c.h.b16 %v3669
    %v3946 = vunpack.c.l.b16 %v3670
    %v3947 = vunpack.c.h.b16 %v3670
    %v3948 = vunpack.c.l.b16 %v3671
    %v3949 = vunpack.c.h.b16 %v3671
    %v3950 = vunpack.c.l.b16 %v3672
    %v3951 = vunpack.c.h.b16 %v3672
    %v3952 = vunpack.c.l.b16 %v3673
    %v3953 = vunpack.c.h.b16 %v3673
    %v3954 = vunpack.c.l.b16 %v3674
    %v3955 = vunpack.c.h.b16 %v3674
    %v3956 = vunpack.c.l.b16 %v3675
    %v3957 = vunpack.c.h.b16 %v3675
    %v3958 = vunpack.c.l.b16 %v3676
    %v3959 = vunpack.c.h.b16 %v3676
    %v3960 = vunpack.c.l.b16 %v3677
    %v3961 = vunpack.c.h.b16 %v3677
    %v3962 = vunpack.c.l.b16 %v3678
    %v3963 = vunpack.c.h.b16 %v3678
    %v3964 = vunpack.c.l.b16 %v3679
    %v3965 = vunpack.c.h.b16 %v3679
    %v3966 = vunpack.c.l.b16 %v3680
    %v3967 = vunpack.c.h.b16 %v3680
    %v3968 = vunpack.c.l.b16 %v3681
    %v3969 = vunpack.c.h.b16 %v3681
    %v3970 = vunpack.c.l.b16 %v3682
    %v3971 = vunpack.c.h.b16 %v3682
    %v3972 = vunpack.c.l.b16 %v3683
    %v3973 = vunpack.c.h.b16 %v3683
    %v3974 = vunpack.c.l.b16 %v3684
    %v3975 = vunpack.c.h.b16 %v3684
    %v3976 = vunpack.c.l.b16 %v3685
    %v3977 = vunpack.c.h.b16 %v3685
    %v3978 = vunpack.c.l.b16 %v3686
    %v3979 = vunpack.c.h.b16 %v3686
    %v3980 = vunpack.c.l.b16 %v3687
    %v3981 = vunpack.c.h.b16 %v3687
    %v3982 = vunpack.c.l.b16 %v3688
    %v3983 = vunpack.c.h.b16 %v3688
    %v3984 = vunpack.c.l.b16 %v3689
    %v3985 = vunpack.c.h.b16 %v3689
    %v3986 = vunpack.c.l.b16 %v3690
    %v3987 = vunpack.c.h.b16 %v3690
    %v3988 = vunpack.c.l.b16 %v3691
    %v3989 = vunpack.c.h.b16 %v3691
    %v3990 = vunpack.c.l.b16 %v3692
    %v3991 = vunpack.c.h.b16 %v3692
    %v3992 = vunpack.c.l.b16 %v3693
    %v3993 = vunpack.c.h.b16 %v3693
    %v3994 = vunpack.c.l.b16 %v3694
    %v3995 = vunpack.c.h.b16 %v3694
    %v3996 = vunpack.c.l.b16 %v3695
    %v3997 = vunpack.c.h.b16 %v3695
    %v3998 = vunpack.c.l.b16 %v3696
    %v3999 = vunpack.c.h.b16 %v3696
    %v4000 = vunpack.c.l.b16 %v3697
    %v4001 = vunpack.c.h.b16 %v3697
    %v4002 = vunpack.c.l.b16 %v3698
    %v4003 = vunpack.c.h.b16 %v3698
    %v4004 = vunpack.c.l.b16 %v3699
    %v4005 = vunpack.c.h.b16 %v3699
    %v4006 = vunpack.c.l.b16 %v3700
    %v4007 = vunpack.c.h.b16 %v3700
    %v4008 = vunpack.c.l.b16 %v3701
    %v4009 = vunpack.c.h.b16 %v3701
    %v4010 = vunpack.c.l.b16 %v3702
    %v4011 = vunpack.c.h.b16 %v3702
    %v4012 = vunpack.c.l.b16 %v3703
    %v4013 = vunpack.c.h.b16 %v3703
    %v4014 = vunpack.c.l.b16 %v3704
    %v4015 = vunpack.c.h.b16 %v3704
    %v4016 = vunpack.c.l.b16 %v3705
    %v4017 = vunpack.c.h.b16 %v3705
    %v4018 = vunpack.c.l.b16 %v3706
    %v4019 = vunpack.c.h.b16 %v3706
    %v4020 = vunpack.c.l.b16 %v3707
    %v4021 = vunpack.c.h.b16 %v3707
    %v4022 = vunpack.c.l.b16 %v3708
    %v4023 = vunpack.c.h.b16 %v3708
    %v4024 = vunpack.c.l.b16 %v3709
    %v4025 = vunpack.c.h.b16 %v3709
    %v4026 = vunpack.c.l.b16 %v3710
    %v4027 = vunpack.c.h.b16 %v3710
    %v4028 = vunpack.c.l.b16 %v3711
    %v4029 = vunpack.c.h.b16 %v3711
    %v4030 = vunpack.c.l.b16 %v3712
    %v4031 = vunpack.c.h.b16 %v3712
    %v4032 = vunpack.c.l.b16 %v3713
    %v4033 = vunpack.c.h.b16 %v3713
    %v4034 = vunpack.c.l.b16 %v3714
    %v4035 = vunpack.c.h.b16 %v3714
    %v4036 = vunpack.c.l.b16 %v3715
    %v4037 = vunpack.c.h.b16 %v3715
    %v4038 = vunpack.c.l.b16 %v3716
    %v4039 = vunpack.c.h.b16 %v3716
    %v4040 = vunpack.c.l.b16 %v3717
    %v4041 = vunpack.c.h.b16 %v3717
    %v4042 = vunpack.c.l.b16 %v3718
    %v4043 = vunpack.c.h.b16 %v3718
    %v4044 = vunpack.c.l.b16 %v3719
    %v4045 = vunpack.c.h.b16 %v3719
    %v4046 = vunpack.c.l.b16 %v3720
    %v4047 = vunpack.c.h.b16 %v3720
    %v4048 = vunpack.c.l.b16 %v3721
    %v4049 = vunpack.c.h.b16 %v3721
    %v4050 = vunpack.c.l.b16 %v3722
    %v4051 = vunpack.c.h.b16 %v3722
    %v4052 = vunpack.c.l.b16 %v3723
    %v4053 = vunpack.c.h.b16 %v3723
    %v4054 = vunpack.c.l.b16 %v3724
    %v4055 = vunpack.c.h.b16 %v3724
    %v4056 = vunpack.c.l.b16 %v3725
    %v4057 = vunpack.c.h.b16 %v3725
    %v4058 = vunpack.c.l.b16 %v3726
    %v4059 = vunpack.c.h.b16 %v3726
    %v4060 = vunpack.c.l.b16 %v3727
    %v4061 = vunpack.c.h.b16 %v3727
    %v4062 = vunpack.c.l.b16 %v3728
    %v4063 = vunpack.c.h.b16 %v3728
    %v4064 = vunpack.c.l.b16 %v3729
    %v4065 = vunpack.c.h.b16 %v3729
    %v4066 = vunpack.c.l.b16 %v3730
    %v4067 = vunpack.c.h.b16 %v3730
    %v4068 = vunpack.c.l.b16 %v3731
    %v4069 = vunpack.c.h.b16 %v3731
    %v4070 = vunpack.c.l.b16 %v3732
    %v4071 = vunpack.c.h.b16 %v3732
    %v4072 = vunpack.c.l.b16 %v3733
    %v4073 = vunpack.c.h.b16 %v3733
    %v4074 = vunpack.c.l.b16 %v3734
    %v4075 = vunpack.c.h.b16 %v3734
    %v4076 = vunpack.c.l.b16 %v3735
    %v4077 = vunpack.c.h.b16 %v3735
    %v4078 = vunpack.c.l.b16 %v3736
    %v4079 = vunpack.c.h.b16 %v3736
    %v4080 = vunpack.c.l.b16 %v3737
    %v4081 = vunpack.c.h.b16 %v3737
    %v4082 = vunpack.c.l.b16 %v3738
    %v4083 = vunpack.c.h.b16 %v3738
    %v4084 = vunpack.c.l.b16 %v3739
    %v4085 = vunpack.c.h.b16 %v3739
    %v4086 = vunpack.c.l.b16 %v3740
    %v4087 = vunpack.c.h.b16 %v3740
    %v4088 = vunpack.c.l.b16 %v3741
    %v4089 = vunpack.c.h.b16 %v3741
    %v4090 = vunpack.c.l.b16 %v3742
    %v4091 = vunpack.c.h.b16 %v3742
    %v4092 = vunpack.c.l.b16 %v3743
    %v4093 = vunpack.c.h.b16 %v3743
    %v4094 = vunpack.c.l.b16 %v3744
    %v4095 = vunpack.c.h.b16 %v3744
    %v4096 = vunpack.c.l.b16 %v3745
    %v4097 = vunpack.c.h.b16 %v3745
    %v4098 = vunpack.c.l.b16 %v3746
    %v4099 = vunpack.c.h.b16 %v3746
    %v4100 = vunpack.c.l.b16 %v3747
    %v4101 = vunpack.c.h.b16 %v3747
    %v4102 = vunpack.c.l.b16 %v3748
    %v4103 = vunpack.c.h.b16 %v3748
    %v4104 = vunpack.c.l.b16 %v3749
    %v4105 = vunpack.c.h.b16 %v3749
    %v4106 = vunpack.c.l.b16 %v3750
    %v4107 = vunpack.c.h.b16 %v3750
    %v4108 = vunpack.c.l.b16 %v3751
    %v4109 = vunpack.c.h.b16 %v3751
    %v4110 = vunpack.c.l.b16 %v3752
    %v4111 = vunpack.c.h.b16 %v3752
    %v4112 = vunpack.c.l.b16 %v3753
    %v4113 = vunpack.c.h.b16 %v3753
    %v4114 = vunpack.c.l.b16 %v3754
    %v4115 = vunpack.c.h.b16 %v3754
    %v4116 = vunpack.c.l.b16 %v3755
    %v4117 = vunpack.c.h.b16 %v3755
    %v4118 = vunpack.c.l.b16 %v3756
    %v4119 = vunpack.c.h.b16 %v3756
    %v4120 = vunpack.c.l.b16 %v3757
    %v4121 = vunpack.c.h.b16 %v3757
    %v4122 = vunpack.c.l.b16 %v3758
    %v4123 = vunpack.c.h.b16 %v3758
    %v4124 = vunpack.c.l.b16 %v3759
    %v4125 = vunpack.c.h.b16 %v3759
    %v4126 = vunpack.c.l.b16 %v3760
    %v4127 = vunpack.c.h.b16 %v3760
    %v4128 = vunpack.c.l.b16 %v3761
    %v4129 = vunpack.c.h.b16 %v3761
    %v4130 = vunpack.c.l.b16 %v3762
    %v4131 = vunpack.c.h.b16 %v3762
    %v4132 = vunpack.c.l.b16 %v3763
    %v4133 = vunpack.c.h.b16 %v3763
    %v4134 = vunpack.c.l.b16 %v3764
    %v4135 = vunpack.c.h.b16 %v3764
    %v4136 = vunpack.c.l.b16 %v3765
    %v4137 = vunpack.c.h.b16 %v3765
    %v4138 = vunpack.c.l.b16 %v3766
    %v4139 = vunpack.c.h.b16 %v3766
    %v4140 = vunpack.c.l.b16 %v3767
    %v4141 = vunpack.c.h.b16 %v3767
    %v4142 = vunpack.c.l.b16 %v3768
    %v4143 = vunpack.c.h.b16 %v3768
    %v4144 = vunpack.c.l.b16 %v3769
    %v4145 = vunpack.c.h.b16 %v3769
    %v4146 = vunpack.c.l.b16 %v3770
    %v4147 = vunpack.c.h.b16 %v3770
    %v4148 = vunpack.c.l.b16 %v3771
    %v4149 = vunpack.c.h.b16 %v3771
    %v4150 = vunpack.c.l.b16 %v3772
    %v4151 = vunpack.c.h.b16 %v3772
    %v4152 = vunpack.c.l.b16 %v3773
    %v4153 = vunpack.c.h.b16 %v3773
    %v4154 = vunpack.c.l.b16 %v3774
    %v4155 = vunpack.c.h.b16 %v3774
    %v4156 = vunpack.c.l.b16 %v3775
    %v4157 = vunpack.c.h.b16 %v3775
    %v4158 = vunpack.c.l.b16 %v3776
    %v4159 = vunpack.c.h.b16 %v3776
    %v4160 = vunpack.c.l.b16 %v3777
    %v4161 = vunpack.c.h.b16 %v3777
    %v4162 = vunpack.c.l.b16 %v3778
    %v4163 = vunpack.c.h.b16 %v3778
    %v4164 = vunpack.c.l.b16 %v3779
    %v4165 = vunpack.c.h.b16 %v3779
    %v4166 = vunpack.c.l.b16 %v3780
    %v4167 = vunpack.c.h.b16 %v3780
    %v4168 = vunpack.c.l.b16 %v3781
    %v4169 = vunpack.c.h.b16 %v3781
    %v4170 = vunpack.c.l.b16 %v3782
    %v4171 = vunpack.c.h.b16 %v3782
    %v4172 = vunpack.c.l.b16 %v3783
    %v4173 = vunpack.c.h.b16 %v3783
    %v4174 = vunpack.c.l.b16 %v3784
    %v4175 = vunpack.c.h.b16 %v3784
    %v4176 = vunpack.c.l.b16 %v3785
    %v4177 = vunpack.c.h.b16 %v3785
    %v4178 = vunpack.c.l.b16 %v3786
    %v4179 = vunpack.c.h.b16 %v3786
    %v4180 = vunpack.c.l.b16 %v3787
    %v4181 = vunpack.c.h.b16 %v3787
    %v4182 = vpack.c.b16 %v3930, %v3926
    %v4183 = vpack.c.b16 %v3931, %v3927
    %v4184 = vpack.c.b16 %v3932, %v3928
    %v4185 = vpack.c.b16 %v3933, %v3929
    %v4186 = vpack.c.b16 %v3938, %v3934
    %v4187 = vpack.c.b16 %v3939, %v3935
    %v4188 = vpack.c.b16 %v3940, %v3936
    %v4189 = vpack.c.b16 %v3941, %v3937
    %v4190 = vpack.c.b16 %v3946, %v3942
    %v4191 = vpack.c.b16 %v3947, %v3943
    %v4192 = vpack.c.b16 %v3948, %v3944
    %v4193 = vpack.c.b16 %v3949, %v3945
    %v4194 = vpack.c.b16 %v3954, %v3950
    %v4195 = vpack.c.b16 %v3955, %v3951
    %v4196 = vpack.c.b16 %v3956, %v3952
    %v4197 = vpack.c.b16 %v3957, %v3953
    %v4198 = vpack.c.b16 %v3962, %v3958
    %v4199 = vpack.c.b16 %v3963, %v3959
    %v4200 = vpack.c.b16 %v3964, %v3960
    %v4201 = vpack.c.b16 %v3965, %v3961
    %v4202 = vpack.c.b16 %v3970, %v3966
    %v4203 = vpack.c.b16 %v3971, %v3967
    %v4204 = vpack.c.b16 %v3972, %v3968
    %v4205 = vpack.c.b16 %v3973, %v3969
    %v4206 = vpack.c.b16 %v3978, %v3974
    %v4207 = vpack.c.b16 %v3979, %v3975
    %v4208 = vpack.c.b16 %v3980, %v3976
    %v4209 = vpack.c.b16 %v3981, %v3977
    %v4210 = vpack.c.b16 %v3986, %v3982
    %v4211 = vpack.c.b16 %v3987, %v3983
    %v4212 = vpack.c.b16 %v3988, %v3984
    %v4213 = vpack.c.b16 %v3989, %v3985
    %v4214 = vpack.c.b16 %v3994, %v3990
    %v4215 = vpack.c.b16 %v3995, %v3991
    %v4216 = vpack.c.b16 %v3996, %v3992
    %v4217 = vpack.c.b16 %v3997, %v3993
    %v4218 = vpack.c.b16 %v4002, %v3998
    %v4219 = vpack.c.b16 %v4003, %v3999
    %v4220 = vpack.c.b16 %v4004, %v4000
    %v4221 = vpack.c.b16 %v4005, %v4001
    %v4222 = vpack.c.b16 %v4010, %v4006
    %v4223 = vpack.c.b16 %v4011, %v4007
    %v4224 = vpack.c.b16 %v4012, %v4008
    %v4225 = vpack.c.b16 %v4013, %v4009
    %v4226 = vpack.c.b16 %v4018, %v4014
    %v4227 = vpack.c.b16 %v4019, %v4015
    %v4228 = vpack.c.b16 %v4020, %v4016
    %v4229 = vpack.c.b16 %v4021, %v4017
    %v4230 = vpack.c.b16 %v4026, %v4022
    %v4231 = vpack.c.b16 %v4027, %v4023
    %v4232 = vpack.c.b16 %v4028, %v4024
    %v4233 = vpack.c.b16 %v4029, %v4025
    %v4234 = vpack.c.b16 %v4034, %v4030
    %v4235 = vpack.c.b16 %v4035, %v4031
    %v4236 = vpack.c.b16 %v4036, %v4032
    %v4237 = vpack.c.b16 %v4037, %v4033
    %v4238 = vpack.c.b16 %v4042, %v4038
    %v4239 = vpack.c.b16 %v4043, %v4039
    %v4240 = vpack.c.b16 %v4044, %v4040
    %v4241 = vpack.c.b16 %v4045, %v4041
    %v4242 = vpack.c.b16 %v4050, %v4046
    %v4243 = vpack.c.b16 %v4051, %v4047
    %v4244 = vpack.c.b16 %v4052, %v4048
    %v4245 = vpack.c.b16 %v4053, %v4049
    %v4246 = vpack.c.b16 %v4058, %v4054
    %v4247 = vpack.c.b16 %v4059, %v4055
    %v4248 = vpack.c.b16 %v4060, %v4056
    %v4249 = vpack.c.b16 %v4061, %v4057
    %v4250 = vpack.c.b16 %v4066, %v4062
    %v4251 = vpack.c.b16 %v4067, %v4063
    %v4252 = vpack.c.b16 %v4068, %v4064
    %v4253 = vpack.c.b16 %v4069, %v4065
    %v4254 = vpack.c.b16 %v4074, %v4070
    %v4255 = vpack.c.b16 %v4075, %v4071
    %v4256 = vpack.c.b16 %v4076, %v4072
    %v4257 = vpack.c.b16 %v4077, %v4073
    %v4258 = vpack.c.b16 %v4082, %v4078
    %v4259 = vpack.c.b16 %v4083, %v4079
    %v4260 = vpack.c.b16 %v4084, %v4080
    %v4261 = vpack.c.b16 %v4085, %v4081
    %v4262 = vpack.c.b16 %v4090, %v4086
    %v4263 = vpack.c.b16 %v4091, %v4087
    %v4264 = vpack.c.b16 %v4092, %v4088
    %v4265 = vpack.c.b16 %v4093, %v4089
    %v4266 = vpack.c.b16 %v4098, %v4094
    %v4267 = vpack.c.b16 %v4099, %v4095
    %v4268 = vpack.c.b16 %v4100, %v4096
    %v4269 = vpack.c.b16 %v4101, %v4097
    %v4270 = vpack.c.b16 %v4106, %v4102
    %v4271 = vpack.c.b16 %v4107, %v4103
    %v4272 = vpack.c.b16 %v4108, %v4104
    %v4273 = vpack.c.b16 %v4109, %v4105
    %v4274 = vpack.c.b16 %v4114, %v4110
    %v4275 = vpack.c.b16 %v4115, %v4111
    %v4276 = vpack.c.b16 %v4116, %v4112
    %v4277 = vpack.c.b16 %v4117, %v4113
    %v4278 = vpack.c.b16 %v4122, %v4118
    %v4279 = vpack.c.b16 %v4123, %v4119
    %v4280 = vpack.c.b16 %v4124, %v4120
    %v4281 = vpack.c.b16 %v4125, %v4121
    %v4282 = vpack.c.b16 %v4130, %v4126
    %v4283 = vpack.c.b16 %v4131, %v4127
    %v4284 = vpack.c.b16 %v4132, %v4128
    %v4285 = vpack.c.b16 %v4133, %v4129
    %v4286 = vpack.c.b16 %v4138, %v4134
    %v4287 = vpack.c.b16 %v4139, %v4135
    %v4288 = vpack.c.b16 %v4140, %v4136
    %v4289 = vpack.c.b16 %v4141, %v4137
    %v4290 = vpack.c.b16 %v4146, %v4142
    %v4291 = vpack.c.b16 %v4147, %v4143
    %v4292 = vpack.c.b16 %v4148, %v4144
    %v4293 = vpack.c.b16 %v4149, %v4145
    %v4294 = vpack.c.b16 %v4154, %v4150
    %v4295 = vpack.c.b16 %v4155, %v4151
    %v4296 = vpack.c.b16 %v4156, %v4152
    %v4297 = vpack.c.b16 %v4157, %v4153
    %v4298 = vpack.c.b16 %v4162, %v4158
    %v4299 = vpack.c.b16 %v4163, %v4159
    %v4300 = vpack.c.b16 %v4164, %v4160
    %v4301 = vpack.c.b16 %v4165, %v4161
    %v4302 = vpack.c.b16 %v4170, %v4166
    %v4303 = vpack.c.b16 %v4171, %v4167
    %v4304 = vpack.c.b16 %v4172, %v4168
    %v4305 = vpack.c.b16 %v4173, %v4169
    %v4306 = vpack.c.b16 %v4178, %v4174
    %v4307 = vpack.c.b16 %v4179, %v4175
    %v4308 = vpack.c.b16 %v4180, %v4176
    %v4309 = vpack.c.b16 %v4181, %v4177
    %4438 = vmatpush.bf16.msra.mxu0 %v4210
    %4439 = vmatpush.bf16.msra.mxu0 %v4206
    %4440 = vmatpush.bf16.msra.mxu0 %v4202
    %4441 = vmatpush.bf16.msra.mxu0 %v4198
    %4442 = vmatpush.bf16.msra.mxu0 %v4194
    %4443 = vmatpush.bf16.msra.mxu0 %v4190
    %4444 = vmatpush.bf16.msra.mxu0 %v4186
    %4445 = vmatpush.bf16.msra.mxu0 %v4182
    %4446 = vmatmul.bf16.gmra.mxu0 %v3628
    %v4447 = vpop.f32.mrf.mxu0
    %v4448 = vadd.f32 %v3790, %v4447
    %v4449 = vpop.f32.mrf.mxu0
    %v4450 = vadd.f32 %v3790, %v4449
    %4451 = vmatmul.bf16.gmra.mxu0 %v3632
    %v4452 = vpop.f32.mrf.mxu0
    %v4453 = vadd.f32 %v3790, %v4452
    %v4454 = vpop.f32.mrf.mxu0
    %v4455 = vadd.f32 %v3790, %v4454
    %4456 = vmatmul.bf16.gmra.mxu0 %v3636
    %v4457 = vpop.f32.mrf.mxu0
    %v4458 = vadd.f32 %v3790, %v4457
    %v4459 = vpop.f32.mrf.mxu0
    %v4460 = vadd.f32 %v3790, %v4459
    %4461 = vmatmul.bf16.gmra.mxu0 %v3640
    %v4462 = vpop.f32.mrf.mxu0
    %v4463 = vadd.f32 %v3790, %v4462
    %v4464 = vpop.f32.mrf.mxu0
    %v4465 = vadd.f32 %v3790, %v4464
    %4466 = vmatmul.bf16.gmra.mxu0 %v3644
    %v4467 = vpop.f32.mrf.mxu0
    %v4468 = vadd.f32 %v3790, %v4467
    %v4469 = vpop.f32.mrf.mxu0
    %v4470 = vadd.f32 %v3790, %v4469
    %4471 = vmatmul.bf16.gmra.mxu0 %v3648
    %v4472 = vpop.f32.mrf.mxu0
    %v4473 = vadd.f32 %v3790, %v4472
    %v4474 = vpop.f32.mrf.mxu0
    %v4475 = vadd.f32 %v3790, %v4474
    %4476 = vmatmul.bf16.gmra.mxu0 %v3652
    %v4477 = vpop.f32.mrf.mxu0
    %v4478 = vadd.f32 %v3790, %v4477
    %v4479 = vpop.f32.mrf.mxu0
    %v4480 = vadd.f32 %v3790, %v4479
    %4481 = vmatmul.bf16.gmra.mxu0 %v3656
    %v4482 = vpop.f32.mrf.mxu0
    %v4483 = vadd.f32 %v3790, %v4482
    %v4484 = vpop.f32.mrf.mxu0
    %v4485 = vadd.f32 %v3790, %v4484
    %4486 = vdwg.mxu0
    %4487 = vmatpush.bf16.msra.mxu0 %v4242
    %4488 = vmatpush.bf16.msra.mxu0 %v4238
    %4489 = vmatpush.bf16.msra.mxu0 %v4234
    %4490 = vmatpush.bf16.msra.mxu0 %v4230
    %4491 = vmatpush.bf16.msra.mxu0 %v4226
    %4492 = vmatpush.bf16.msra.mxu0 %v4222
    %4493 = vmatpush.bf16.msra.mxu0 %v4218
    %4494 = vmatpush.bf16.msra.mxu0 %v4214
    %4495 = vmatmul.bf16.gmra.mxu0 %v3629
    %v4496 = vpop.f32.mrf.mxu0
    %v4497 = vadd.f32 %v4448, %v4496
    %v4498 = vpop.f32.mrf.mxu0
    %v4499 = vadd.f32 %v4450, %v4498
    %4500 = vmatmul.bf16.gmra.mxu0 %v3633
    %v4501 = vpop.f32.mrf.mxu0
    %v4502 = vadd.f32 %v4453, %v4501
    %v4503 = vpop.f32.mrf.mxu0
    %v4504 = vadd.f32 %v4455, %v4503
    %4505 = vmatmul.bf16.gmra.mxu0 %v3637
    %v4506 = vpop.f32.mrf.mxu0
    %v4507 = vadd.f32 %v4458, %v4506
    %v4508 = vpop.f32.mrf.mxu0
    %v4509 = vadd.f32 %v4460, %v4508
    %4510 = vmatmul.bf16.gmra.mxu0 %v3641
    %v4511 = vpop.f32.mrf.mxu0
    %v4512 = vadd.f32 %v4463, %v4511
    %v4513 = vpop.f32.mrf.mxu0
    %v4514 = vadd.f32 %v4465, %v4513
    %4515 = vmatmul.bf16.gmra.mxu0 %v3645
    %v4516 = vpop.f32.mrf.mxu0
    %v4517 = vadd.f32 %v4468, %v4516
    %v4518 = vpop.f32.mrf.mxu0
    %v4519 = vadd.f32 %v4470, %v4518
    %4520 = vmatmul.bf16.gmra.mxu0 %v3649
    %v4521 = vpop.f32.mrf.mxu0
    %v4522 = vadd.f32 %v4473, %v4521
    %v4523 = vpop.f32.mrf.mxu0
    %v4524 = vadd.f32 %v4475, %v4523
    %4525 = vmatmul.bf16.gmra.mxu0 %v3653
    %v4526 = vpop.f32.mrf.mxu0
    %v4527 = vadd.f32 %v4478, %v4526
    %v4528 = vpop.f32.mrf.mxu0
    %v4529 = vadd.f32 %v4480, %v4528
    %4530 = vmatmul.bf16.gmra.mxu0 %v3657
    %v4531 = vpop.f32.mrf.mxu0
    %v4532 = vadd.f32 %v4483, %v4531
    %v4533 = vpop.f32.mrf.mxu0
    %v4534 = vadd.f32 %v4485, %v4533
    %4535 = vdwg.mxu0
    %4536 = vmatpush.bf16.msra.mxu0 %v4274
    %4537 = vmatpush.bf16.msra.mxu0 %v4270
    %4538 = vmatpush.bf16.msra.mxu0 %v4266
    %4539 = vmatpush.bf16.msra.mxu0 %v4262
    %4540 = vmatpush.bf16.msra.mxu0 %v4258
    %4541 = vmatpush.bf16.msra.mxu0 %v4254
    %4542 = vmatpush.bf16.msra.mxu0 %v4250
    %4543 = vmatpush.bf16.msra.mxu0 %v4246
    %4544 = vmatmul.bf16.gmra.mxu0 %v3630
    %v4545 = vpop.f32.mrf.mxu0
    %v4546 = vadd.f32 %v4497, %v4545
    %v4547 = vpop.f32.mrf.mxu0
    %v4548 = vadd.f32 %v4499, %v4547
    %4549 = vmatmul.bf16.gmra.mxu0 %v3634
    %v4550 = vpop.f32.mrf.mxu0
    %v4551 = vadd.f32 %v4502, %v4550
    %v4552 = vpop.f32.mrf.mxu0
    %v4553 = vadd.f32 %v4504, %v4552
    %4554 = vmatmul.bf16.gmra.mxu0 %v3638
    %v4555 = vpop.f32.mrf.mxu0
    %v4556 = vadd.f32 %v4507, %v4555
    %v4557 = vpop.f32.mrf.mxu0
    %v4558 = vadd.f32 %v4509, %v4557
    %4559 = vmatmul.bf16.gmra.mxu0 %v3642
    %v4560 = vpop.f32.mrf.mxu0
    %v4561 = vadd.f32 %v4512, %v4560
    %v4562 = vpop.f32.mrf.mxu0
    %v4563 = vadd.f32 %v4514, %v4562
    %4564 = vmatmul.bf16.gmra.mxu0 %v3646
    %v4565 = vpop.f32.mrf.mxu0
    %v4566 = vadd.f32 %v4517, %v4565
    %v4567 = vpop.f32.mrf.mxu0
    %v4568 = vadd.f32 %v4519, %v4567
    %4569 = vmatmul.bf16.gmra.mxu0 %v3650
    %v4570 = vpop.f32.mrf.mxu0
    %v4571 = vadd.f32 %v4522, %v4570
    %v4572 = vpop.f32.mrf.mxu0
    %v4573 = vadd.f32 %v4524, %v4572
    %4574 = vmatmul.bf16.gmra.mxu0 %v3654
    %v4575 = vpop.f32.mrf.mxu0
    %v4576 = vadd.f32 %v4527, %v4575
    %v4577 = vpop.f32.mrf.mxu0
    %v4578 = vadd.f32 %v4529, %v4577
    %4579 = vmatmul.bf16.gmra.mxu0 %v3658
    %v4580 = vpop.f32.mrf.mxu0
    %v4581 = vadd.f32 %v4532, %v4580
    %v4582 = vpop.f32.mrf.mxu0
    %v4583 = vadd.f32 %v4534, %v4582
    %4584 = vdwg.mxu0
    %4585 = vmatpush.bf16.msra.mxu0 %v4306
    %4586 = vmatpush.bf16.msra.mxu0 %v4302
    %4587 = vmatpush.bf16.msra.mxu0 %v4298
    %4588 = vmatpush.bf16.msra.mxu0 %v4294
    %4589 = vmatpush.bf16.msra.mxu0 %v4290
    %4590 = vmatpush.bf16.msra.mxu0 %v4286
    %4591 = vmatpush.bf16.msra.mxu0 %v4282
    %4592 = vmatpush.bf16.msra.mxu0 %v4278
    %4593 = vmatmul.bf16.gmra.mxu0 %v3631
    %v4594 = vpop.f32.mrf.mxu0
    %v4595 = vadd.f32 %v4546, %v4594
    %v4596 = vpop.f32.mrf.mxu0
    %v4597 = vadd.f32 %v4548, %v4596
    %4598 = vmatmul.bf16.gmra.mxu0 %v3635
    %v4599 = vpop.f32.mrf.mxu0
    %v4600 = vadd.f32 %v4551, %v4599
    %v4601 = vpop.f32.mrf.mxu0
    %v4602 = vadd.f32 %v4553, %v4601
    %4603 = vmatmul.bf16.gmra.mxu0 %v3639
    %v4604 = vpop.f32.mrf.mxu0
    %v4605 = vadd.f32 %v4556, %v4604
    %v4606 = vpop.f32.mrf.mxu0
    %v4607 = vadd.f32 %v4558, %v4606
    %4608 = vmatmul.bf16.gmra.mxu0 %v3643
    %v4609 = vpop.f32.mrf.mxu0
    %v4610 = vadd.f32 %v4561, %v4609
    %v4611 = vpop.f32.mrf.mxu0
    %v4612 = vadd.f32 %v4563, %v4611
    %4613 = vmatmul.bf16.gmra.mxu0 %v3647
    %v4614 = vpop.f32.mrf.mxu0
    %v4615 = vadd.f32 %v4566, %v4614
    %v4616 = vpop.f32.mrf.mxu0
    %v4617 = vadd.f32 %v4568, %v4616
    %4618 = vmatmul.bf16.gmra.mxu0 %v3651
    %v4619 = vpop.f32.mrf.mxu0
    %v4620 = vadd.f32 %v4571, %v4619
    %v4621 = vpop.f32.mrf.mxu0
    %v4622 = vadd.f32 %v4573, %v4621
    %4623 = vmatmul.bf16.gmra.mxu0 %v3655
    %v4624 = vpop.f32.mrf.mxu0
    %v4625 = vadd.f32 %v4576, %v4624
    %v4626 = vpop.f32.mrf.mxu0
    %v4627 = vadd.f32 %v4578, %v4626
    %4628 = vmatmul.bf16.gmra.mxu0 %v3659
    %v4629 = vpop.f32.mrf.mxu0
    %v4630 = vadd.f32 %v4581, %v4629
    %v4631 = vpop.f32.mrf.mxu0
    %v4632 = vadd.f32 %v4583, %v4631
    %4633 = vdwg.mxu0
    %4634 = vmatpush.bf16.msra.mxu0 %v4211
    %4635 = vmatpush.bf16.msra.mxu0 %v4207
    %4636 = vmatpush.bf16.msra.mxu0 %v4203
    %4637 = vmatpush.bf16.msra.mxu0 %v4199
    %4638 = vmatpush.bf16.msra.mxu0 %v4195
    %4639 = vmatpush.bf16.msra.mxu0 %v4191
    %4640 = vmatpush.bf16.msra.mxu0 %v4187
    %4641 = vmatpush.bf16.msra.mxu0 %v4183
    %4642 = vmatmul.bf16.gmra.mxu0 %v3628
    %v4643 = vpop.f32.mrf.mxu0
    %v4644 = vadd.f32 %v3791, %v4643
    %v4645 = vpop.f32.mrf.mxu0
    %v4646 = vadd.f32 %v3791, %v4645
    %4647 = vmatmul.bf16.gmra.mxu0 %v3632
    %v4648 = vpop.f32.mrf.mxu0
    %v4649 = vadd.f32 %v3791, %v4648
    %v4650 = vpop.f32.mrf.mxu0
    %v4651 = vadd.f32 %v3791, %v4650
    %4652 = vmatmul.bf16.gmra.mxu0 %v3636
    %v4653 = vpop.f32.mrf.mxu0
    %v4654 = vadd.f32 %v3791, %v4653
    %v4655 = vpop.f32.mrf.mxu0
    %v4656 = vadd.f32 %v3791, %v4655
    %4657 = vmatmul.bf16.gmra.mxu0 %v3640
    %v4658 = vpop.f32.mrf.mxu0
    %v4659 = vadd.f32 %v3791, %v4658
    %v4660 = vpop.f32.mrf.mxu0
    %v4661 = vadd.f32 %v3791, %v4660
    %4662 = vmatmul.bf16.gmra.mxu0 %v3644
    %v4663 = vpop.f32.mrf.mxu0
    %v4664 = vadd.f32 %v3791, %v4663
    %v4665 = vpop.f32.mrf.mxu0
    %v4666 = vadd.f32 %v3791, %v4665
    %4667 = vmatmul.bf16.gmra.mxu0 %v3648
    %v4668 = vpop.f32.mrf.mxu0
    %v4669 = vadd.f32 %v3791, %v4668
    %v4670 = vpop.f32.mrf.mxu0
    %v4671 = vadd.f32 %v3791, %v4670
    %4672 = vmatmul.bf16.gmra.mxu0 %v3652
    %v4673 = vpop.f32.mrf.mxu0
    %v4674 = vadd.f32 %v3791, %v4673
    %v4675 = vpop.f32.mrf.mxu0
    %v4676 = vadd.f32 %v3791, %v4675
    %4677 = vmatmul.bf16.gmra.mxu0 %v3656
    %v4678 = vpop.f32.mrf.mxu0
    %v4679 = vadd.f32 %v3791, %v4678
    %v4680 = vpop.f32.mrf.mxu0
    %v4681 = vadd.f32 %v3791, %v4680
    %4682 = vdwg.mxu0
    %4683 = vmatpush.bf16.msra.mxu0 %v4243
    %4684 = vmatpush.bf16.msra.mxu0 %v4239
    %4685 = vmatpush.bf16.msra.mxu0 %v4235
    %4686 = vmatpush.bf16.msra.mxu0 %v4231
    %4687 = vmatpush.bf16.msra.mxu0 %v4227
    %4688 = vmatpush.bf16.msra.mxu0 %v4223
    %4689 = vmatpush.bf16.msra.mxu0 %v4219
    %4690 = vmatpush.bf16.msra.mxu0 %v4215
    %4691 = vmatmul.bf16.gmra.mxu0 %v3629
    %v4692 = vpop.f32.mrf.mxu0
    %v4693 = vadd.f32 %v4644, %v4692
    %v4694 = vpop.f32.mrf.mxu0
    %v4695 = vadd.f32 %v4646, %v4694
    %4696 = vmatmul.bf16.gmra.mxu0 %v3633
    %v4697 = vpop.f32.mrf.mxu0
    %v4698 = vadd.f32 %v4649, %v4697
    %v4699 = vpop.f32.mrf.mxu0
    %v4700 = vadd.f32 %v4651, %v4699
    %4701 = vmatmul.bf16.gmra.mxu0 %v3637
    %v4702 = vpop.f32.mrf.mxu0
    %v4703 = vadd.f32 %v4654, %v4702
    %v4704 = vpop.f32.mrf.mxu0
    %v4705 = vadd.f32 %v4656, %v4704
    %4706 = vmatmul.bf16.gmra.mxu0 %v3641
    %v4707 = vpop.f32.mrf.mxu0
    %v4708 = vadd.f32 %v4659, %v4707
    %v4709 = vpop.f32.mrf.mxu0
    %v4710 = vadd.f32 %v4661, %v4709
    %4711 = vmatmul.bf16.gmra.mxu0 %v3645
    %v4712 = vpop.f32.mrf.mxu0
    %v4713 = vadd.f32 %v4664, %v4712
    %v4714 = vpop.f32.mrf.mxu0
    %v4715 = vadd.f32 %v4666, %v4714
    %4716 = vmatmul.bf16.gmra.mxu0 %v3649
    %v4717 = vpop.f32.mrf.mxu0
    %v4718 = vadd.f32 %v4669, %v4717
    %v4719 = vpop.f32.mrf.mxu0
    %v4720 = vadd.f32 %v4671, %v4719
    %4721 = vmatmul.bf16.gmra.mxu0 %v3653
    %v4722 = vpop.f32.mrf.mxu0
    %v4723 = vadd.f32 %v4674, %v4722
    %v4724 = vpop.f32.mrf.mxu0
    %v4725 = vadd.f32 %v4676, %v4724
    %4726 = vmatmul.bf16.gmra.mxu0 %v3657
    %v4727 = vpop.f32.mrf.mxu0
    %v4728 = vadd.f32 %v4679, %v4727
    %v4729 = vpop.f32.mrf.mxu0
    %v4730 = vadd.f32 %v4681, %v4729
    %4731 = vdwg.mxu0
    %4732 = vmatpush.bf16.msra.mxu0 %v4275
    %4733 = vmatpush.bf16.msra.mxu0 %v4271
    %4734 = vmatpush.bf16.msra.mxu0 %v4267
    %4735 = vmatpush.bf16.msra.mxu0 %v4263
    %4736 = vmatpush.bf16.msra.mxu0 %v4259
    %4737 = vmatpush.bf16.msra.mxu0 %v4255
    %4738 = vmatpush.bf16.msra.mxu0 %v4251
    %4739 = vmatpush.bf16.msra.mxu0 %v4247
    %4740 = vmatmul.bf16.gmra.mxu0 %v3630
    %v4741 = vpop.f32.mrf.mxu0
    %v4742 = vadd.f32 %v4693, %v4741
    %v4743 = vpop.f32.mrf.mxu0
    %v4744 = vadd.f32 %v4695, %v4743
    %4745 = vmatmul.bf16.gmra.mxu0 %v3634
    %v4746 = vpop.f32.mrf.mxu0
    %v4747 = vadd.f32 %v4698, %v4746
    %v4748 = vpop.f32.mrf.mxu0
    %v4749 = vadd.f32 %v4700, %v4748
    %4750 = vmatmul.bf16.gmra.mxu0 %v3638
    %v4751 = vpop.f32.mrf.mxu0
    %v4752 = vadd.f32 %v4703, %v4751
    %v4753 = vpop.f32.mrf.mxu0
    %v4754 = vadd.f32 %v4705, %v4753
    %4755 = vmatmul.bf16.gmra.mxu0 %v3642
    %v4756 = vpop.f32.mrf.mxu0
    %v4757 = vadd.f32 %v4708, %v4756
    %v4758 = vpop.f32.mrf.mxu0
    %v4759 = vadd.f32 %v4710, %v4758
    %4760 = vmatmul.bf16.gmra.mxu0 %v3646
    %v4761 = vpop.f32.mrf.mxu0
    %v4762 = vadd.f32 %v4713, %v4761
    %v4763 = vpop.f32.mrf.mxu0
    %v4764 = vadd.f32 %v4715, %v4763
    %4765 = vmatmul.bf16.gmra.mxu0 %v3650
    %v4766 = vpop.f32.mrf.mxu0
    %v4767 = vadd.f32 %v4718, %v4766
    %v4768 = vpop.f32.mrf.mxu0
    %v4769 = vadd.f32 %v4720, %v4768
    %4770 = vmatmul.bf16.gmra.mxu0 %v3654
    %v4771 = vpop.f32.mrf.mxu0
    %v4772 = vadd.f32 %v4723, %v4771
    %v4773 = vpop.f32.mrf.mxu0
    %v4774 = vadd.f32 %v4725, %v4773
    %4775 = vmatmul.bf16.gmra.mxu0 %v3658
    %v4776 = vpop.f32.mrf.mxu0
    %v4777 = vadd.f32 %v4728, %v4776
    %v4778 = vpop.f32.mrf.mxu0
    %v4779 = vadd.f32 %v4730, %v4778
    %4780 = vdwg.mxu0
    %4781 = vmatpush.bf16.msra.mxu0 %v4307
    %4782 = vmatpush.bf16.msra.mxu0 %v4303
    %4783 = vmatpush.bf16.msra.mxu0 %v4299
    %4784 = vmatpush.bf16.msra.mxu0 %v4295
    %4785 = vmatpush.bf16.msra.mxu0 %v4291
    %4786 = vmatpush.bf16.msra.mxu0 %v4287
    %4787 = vmatpush.bf16.msra.mxu0 %v4283
    %4788 = vmatpush.bf16.msra.mxu0 %v4279
    %4789 = vmatmul.bf16.gmra.mxu0 %v3631
    %v4790 = vpop.f32.mrf.mxu0
    %v4791 = vadd.f32 %v4742, %v4790
    %v4792 = vpop.f32.mrf.mxu0
    %v4793 = vadd.f32 %v4744, %v4792
    %4794 = vmatmul.bf16.gmra.mxu0 %v3635
    %v4795 = vpop.f32.mrf.mxu0
    %v4796 = vadd.f32 %v4747, %v4795
    %v4797 = vpop.f32.mrf.mxu0
    %v4798 = vadd.f32 %v4749, %v4797
    %4799 = vmatmul.bf16.gmra.mxu0 %v3639
    %v4800 = vpop.f32.mrf.mxu0
    %v4801 = vadd.f32 %v4752, %v4800
    %v4802 = vpop.f32.mrf.mxu0
    %v4803 = vadd.f32 %v4754, %v4802
    %4804 = vmatmul.bf16.gmra.mxu0 %v3643
    %v4805 = vpop.f32.mrf.mxu0
    %v4806 = vadd.f32 %v4757, %v4805
    %v4807 = vpop.f32.mrf.mxu0
    %v4808 = vadd.f32 %v4759, %v4807
    %4809 = vmatmul.bf16.gmra.mxu0 %v3647
    %v4810 = vpop.f32.mrf.mxu0
    %v4811 = vadd.f32 %v4762, %v4810
    %v4812 = vpop.f32.mrf.mxu0
    %v4813 = vadd.f32 %v4764, %v4812
    %4814 = vmatmul.bf16.gmra.mxu0 %v3651
    %v4815 = vpop.f32.mrf.mxu0
    %v4816 = vadd.f32 %v4767, %v4815
    %v4817 = vpop.f32.mrf.mxu0
    %v4818 = vadd.f32 %v4769, %v4817
    %4819 = vmatmul.bf16.gmra.mxu0 %v3655
    %v4820 = vpop.f32.mrf.mxu0
    %v4821 = vadd.f32 %v4772, %v4820
    %v4822 = vpop.f32.mrf.mxu0
    %v4823 = vadd.f32 %v4774, %v4822
    %4824 = vmatmul.bf16.gmra.mxu0 %v3659
    %v4825 = vpop.f32.mrf.mxu0
    %v4826 = vadd.f32 %v4777, %v4825
    %v4827 = vpop.f32.mrf.mxu0
    %v4828 = vadd.f32 %v4779, %v4827
    %4829 = vdwg.mxu0
    %4830 = vmatpush.bf16.msra.mxu0 %v4212
    %4831 = vmatpush.bf16.msra.mxu0 %v4208
    %4832 = vmatpush.bf16.msra.mxu0 %v4204
    %4833 = vmatpush.bf16.msra.mxu0 %v4200
    %4834 = vmatpush.bf16.msra.mxu0 %v4196
    %4835 = vmatpush.bf16.msra.mxu0 %v4192
    %4836 = vmatpush.bf16.msra.mxu0 %v4188
    %4837 = vmatpush.bf16.msra.mxu0 %v4184
    %4838 = vmatmul.bf16.gmra.mxu0 %v3628
    %v4839 = vpop.f32.mrf.mxu0
    %v4840 = vadd.f32 %v3792, %v4839
    %v4841 = vpop.f32.mrf.mxu0
    %v4842 = vadd.f32 %v3792, %v4841
    %4843 = vmatmul.bf16.gmra.mxu0 %v3632
    %v4844 = vpop.f32.mrf.mxu0
    %v4845 = vadd.f32 %v3792, %v4844
    %v4846 = vpop.f32.mrf.mxu0
    %v4847 = vadd.f32 %v3792, %v4846
    %4848 = vmatmul.bf16.gmra.mxu0 %v3636
    %v4849 = vpop.f32.mrf.mxu0
    %v4850 = vadd.f32 %v3792, %v4849
    %v4851 = vpop.f32.mrf.mxu0
    %v4852 = vadd.f32 %v3792, %v4851
    %4853 = vmatmul.bf16.gmra.mxu0 %v3640
    %v4854 = vpop.f32.mrf.mxu0
    %v4855 = vadd.f32 %v3792, %v4854
    %v4856 = vpop.f32.mrf.mxu0
    %v4857 = vadd.f32 %v3792, %v4856
    %4858 = vmatmul.bf16.gmra.mxu0 %v3644
    %v4859 = vpop.f32.mrf.mxu0
    %v4860 = vadd.f32 %v3792, %v4859
    %v4861 = vpop.f32.mrf.mxu0
    %v4862 = vadd.f32 %v3792, %v4861
    %4863 = vmatmul.bf16.gmra.mxu0 %v3648
    %v4864 = vpop.f32.mrf.mxu0
    %v4865 = vadd.f32 %v3792, %v4864
    %v4866 = vpop.f32.mrf.mxu0
    %v4867 = vadd.f32 %v3792, %v4866
    %4868 = vmatmul.bf16.gmra.mxu0 %v3652
    %v4869 = vpop.f32.mrf.mxu0
    %v4870 = vadd.f32 %v3792, %v4869
    %v4871 = vpop.f32.mrf.mxu0
    %v4872 = vadd.f32 %v3792, %v4871
    %4873 = vmatmul.bf16.gmra.mxu0 %v3656
    %v4874 = vpop.f32.mrf.mxu0
    %v4875 = vadd.f32 %v3792, %v4874
    %v4876 = vpop.f32.mrf.mxu0
    %v4877 = vadd.f32 %v3792, %v4876
    %4878 = vdwg.mxu0
    %4879 = vmatpush.bf16.msra.mxu0 %v4244
    %4880 = vmatpush.bf16.msra.mxu0 %v4240
    %4881 = vmatpush.bf16.msra.mxu0 %v4236
    %4882 = vmatpush.bf16.msra.mxu0 %v4232
    %4883 = vmatpush.bf16.msra.mxu0 %v4228
    %4884 = vmatpush.bf16.msra.mxu0 %v4224
    %4885 = vmatpush.bf16.msra.mxu0 %v4220
    %4886 = vmatpush.bf16.msra.mxu0 %v4216
    %4887 = vmatmul.bf16.gmra.mxu0 %v3629
    %v4888 = vpop.f32.mrf.mxu0
    %v4889 = vadd.f32 %v4840, %v4888
    %v4890 = vpop.f32.mrf.mxu0
    %v4891 = vadd.f32 %v4842, %v4890
    %4892 = vmatmul.bf16.gmra.mxu0 %v3633
    %v4893 = vpop.f32.mrf.mxu0
    %v4894 = vadd.f32 %v4845, %v4893
    %v4895 = vpop.f32.mrf.mxu0
    %v4896 = vadd.f32 %v4847, %v4895
    %4897 = vmatmul.bf16.gmra.mxu0 %v3637
    %v4898 = vpop.f32.mrf.mxu0
    %v4899 = vadd.f32 %v4850, %v4898
    %v4900 = vpop.f32.mrf.mxu0
    %v4901 = vadd.f32 %v4852, %v4900
    %4902 = vmatmul.bf16.gmra.mxu0 %v3641
    %v4903 = vpop.f32.mrf.mxu0
    %v4904 = vadd.f32 %v4855, %v4903
    %v4905 = vpop.f32.mrf.mxu0
    %v4906 = vadd.f32 %v4857, %v4905
    %4907 = vmatmul.bf16.gmra.mxu0 %v3645
    %v4908 = vpop.f32.mrf.mxu0
    %v4909 = vadd.f32 %v4860, %v4908
    %v4910 = vpop.f32.mrf.mxu0
    %v4911 = vadd.f32 %v4862, %v4910
    %4912 = vmatmul.bf16.gmra.mxu0 %v3649
    %v4913 = vpop.f32.mrf.mxu0
    %v4914 = vadd.f32 %v4865, %v4913
    %v4915 = vpop.f32.mrf.mxu0
    %v4916 = vadd.f32 %v4867, %v4915
    %4917 = vmatmul.bf16.gmra.mxu0 %v3653
    %v4918 = vpop.f32.mrf.mxu0
    %v4919 = vadd.f32 %v4870, %v4918
    %v4920 = vpop.f32.mrf.mxu0
    %v4921 = vadd.f32 %v4872, %v4920
    %4922 = vmatmul.bf16.gmra.mxu0 %v3657
    %v4923 = vpop.f32.mrf.mxu0
    %v4924 = vadd.f32 %v4875, %v4923
    %v4925 = vpop.f32.mrf.mxu0
    %v4926 = vadd.f32 %v4877, %v4925
    %4927 = vdwg.mxu0
    %4928 = vmatpush.bf16.msra.mxu0 %v4276
    %4929 = vmatpush.bf16.msra.mxu0 %v4272
    %4930 = vmatpush.bf16.msra.mxu0 %v4268
    %4931 = vmatpush.bf16.msra.mxu0 %v4264
    %4932 = vmatpush.bf16.msra.mxu0 %v4260
    %4933 = vmatpush.bf16.msra.mxu0 %v4256
    %4934 = vmatpush.bf16.msra.mxu0 %v4252
    %4935 = vmatpush.bf16.msra.mxu0 %v4248
    %4936 = vmatmul.bf16.gmra.mxu0 %v3630
    %v4937 = vpop.f32.mrf.mxu0
    %v4938 = vadd.f32 %v4889, %v4937
    %v4939 = vpop.f32.mrf.mxu0
    %v4940 = vadd.f32 %v4891, %v4939
    %4941 = vmatmul.bf16.gmra.mxu0 %v3634
    %v4942 = vpop.f32.mrf.mxu0
    %v4943 = vadd.f32 %v4894, %v4942
    %v4944 = vpop.f32.mrf.mxu0
    %v4945 = vadd.f32 %v4896, %v4944
    %4946 = vmatmul.bf16.gmra.mxu0 %v3638
    %v4947 = vpop.f32.mrf.mxu0
    %v4948 = vadd.f32 %v4899, %v4947
    %v4949 = vpop.f32.mrf.mxu0
    %v4950 = vadd.f32 %v4901, %v4949
    %4951 = vmatmul.bf16.gmra.mxu0 %v3642
    %v4952 = vpop.f32.mrf.mxu0
    %v4953 = vadd.f32 %v4904, %v4952
    %v4954 = vpop.f32.mrf.mxu0
    %v4955 = vadd.f32 %v4906, %v4954
    %4956 = vmatmul.bf16.gmra.mxu0 %v3646
    %v4957 = vpop.f32.mrf.mxu0
    %v4958 = vadd.f32 %v4909, %v4957
    %v4959 = vpop.f32.mrf.mxu0
    %v4960 = vadd.f32 %v4911, %v4959
    %4961 = vmatmul.bf16.gmra.mxu0 %v3650
    %v4962 = vpop.f32.mrf.mxu0
    %v4963 = vadd.f32 %v4914, %v4962
    %v4964 = vpop.f32.mrf.mxu0
    %v4965 = vadd.f32 %v4916, %v4964
    %4966 = vmatmul.bf16.gmra.mxu0 %v3654
    %v4967 = vpop.f32.mrf.mxu0
    %v4968 = vadd.f32 %v4919, %v4967
    %v4969 = vpop.f32.mrf.mxu0
    %v4970 = vadd.f32 %v4921, %v4969
    %4971 = vmatmul.bf16.gmra.mxu0 %v3658
    %v4972 = vpop.f32.mrf.mxu0
    %v4973 = vadd.f32 %v4924, %v4972
    %v4974 = vpop.f32.mrf.mxu0
    %v4975 = vadd.f32 %v4926, %v4974
    %4976 = vdwg.mxu0
    %4977 = vmatpush.bf16.msra.mxu0 %v4308
    %4978 = vmatpush.bf16.msra.mxu0 %v4304
    %4979 = vmatpush.bf16.msra.mxu0 %v4300
    %4980 = vmatpush.bf16.msra.mxu0 %v4296
    %4981 = vmatpush.bf16.msra.mxu0 %v4292
    %4982 = vmatpush.bf16.msra.mxu0 %v4288
    %4983 = vmatpush.bf16.msra.mxu0 %v4284
    %4984 = vmatpush.bf16.msra.mxu0 %v4280
    %4985 = vmatmul.bf16.gmra.mxu0 %v3631
    %v4986 = vpop.f32.mrf.mxu0
    %v4987 = vadd.f32 %v4938, %v4986
    %v4988 = vpop.f32.mrf.mxu0
    %v4989 = vadd.f32 %v4940, %v4988
    %4990 = vmatmul.bf16.gmra.mxu0 %v3635
    %v4991 = vpop.f32.mrf.mxu0
    %v4992 = vadd.f32 %v4943, %v4991
    %v4993 = vpop.f32.mrf.mxu0
    %v4994 = vadd.f32 %v4945, %v4993
    %4995 = vmatmul.bf16.gmra.mxu0 %v3639
    %v4996 = vpop.f32.mrf.mxu0
    %v4997 = vadd.f32 %v4948, %v4996
    %v4998 = vpop.f32.mrf.mxu0
    %v4999 = vadd.f32 %v4950, %v4998
    %5000 = vmatmul.bf16.gmra.mxu0 %v3643
    %v5001 = vpop.f32.mrf.mxu0
    %v5002 = vadd.f32 %v4953, %v5001
    %v5003 = vpop.f32.mrf.mxu0
    %v5004 = vadd.f32 %v4955, %v5003
    %5005 = vmatmul.bf16.gmra.mxu0 %v3647
    %v5006 = vpop.f32.mrf.mxu0
    %v5007 = vadd.f32 %v4958, %v5006
    %v5008 = vpop.f32.mrf.mxu0
    %v5009 = vadd.f32 %v4960, %v5008
    %5010 = vmatmul.bf16.gmra.mxu0 %v3651
    %v5011 = vpop.f32.mrf.mxu0
    %v5012 = vadd.f32 %v4963, %v5011
    %v5013 = vpop.f32.mrf.mxu0
    %v5014 = vadd.f32 %v4965, %v5013
    %5015 = vmatmul.bf16.gmra.mxu0 %v3655
    %v5016 = vpop.f32.mrf.mxu0
    %v5017 = vadd.f32 %v4968, %v5016
    %v5018 = vpop.f32.mrf.mxu0
    %v5019 = vadd.f32 %v4970, %v5018
    %5020 = vmatmul.bf16.gmra.mxu0 %v3659
    %v5021 = vpop.f32.mrf.mxu0
    %v5022 = vadd.f32 %v4973, %v5021
    %v5023 = vpop.f32.mrf.mxu0
    %v5024 = vadd.f32 %v4975, %v5023
    %5025 = vdwg.mxu0
    %5026 = vmatpush.bf16.msra.mxu0 %v4213
    %5027 = vmatpush.bf16.msra.mxu0 %v4209
    %5028 = vmatpush.bf16.msra.mxu0 %v4205
    %5029 = vmatpush.bf16.msra.mxu0 %v4201
    %5030 = vmatpush.bf16.msra.mxu0 %v4197
    %5031 = vmatpush.bf16.msra.mxu0 %v4193
    %5032 = vmatpush.bf16.msra.mxu0 %v4189
    %5033 = vmatpush.bf16.msra.mxu0 %v4185
    %5034 = vmatmul.bf16.gmra.mxu0 %v3628
    %v5035 = vpop.f32.mrf.mxu0
    %v5036 = vadd.f32 %v3793, %v5035
    %v5037 = vpop.f32.mrf.mxu0
    %v5038 = vadd.f32 %v3793, %v5037
    %5039 = vmatmul.bf16.gmra.mxu0 %v3632
    %v5040 = vpop.f32.mrf.mxu0
    %v5041 = vadd.f32 %v3793, %v5040
    %v5042 = vpop.f32.mrf.mxu0
    %v5043 = vadd.f32 %v3793, %v5042
    %5044 = vmatmul.bf16.gmra.mxu0 %v3636
    %v5045 = vpop.f32.mrf.mxu0
    %v5046 = vadd.f32 %v3793, %v5045
    %v5047 = vpop.f32.mrf.mxu0
    %v5048 = vadd.f32 %v3793, %v5047
    %5049 = vmatmul.bf16.gmra.mxu0 %v3640
    %v5050 = vpop.f32.mrf.mxu0
    %v5051 = vadd.f32 %v3793, %v5050
    %v5052 = vpop.f32.mrf.mxu0
    %v5053 = vadd.f32 %v3793, %v5052
    %5054 = vmatmul.bf16.gmra.mxu0 %v3644
    %v5055 = vpop.f32.mrf.mxu0
    %v5056 = vadd.f32 %v3793, %v5055
    %v5057 = vpop.f32.mrf.mxu0
    %v5058 = vadd.f32 %v3793, %v5057
    %5059 = vmatmul.bf16.gmra.mxu0 %v3648
    %v5060 = vpop.f32.mrf.mxu0
    %v5061 = vadd.f32 %v3793, %v5060
    %v5062 = vpop.f32.mrf.mxu0
    %v5063 = vadd.f32 %v3793, %v5062
    %5064 = vmatmul.bf16.gmra.mxu0 %v3652
    %v5065 = vpop.f32.mrf.mxu0
    %v5066 = vadd.f32 %v3793, %v5065
    %v5067 = vpop.f32.mrf.mxu0
    %v5068 = vadd.f32 %v3793, %v5067
    %5069 = vmatmul.bf16.gmra.mxu0 %v3656
    %v5070 = vpop.f32.mrf.mxu0
    %v5071 = vadd.f32 %v3793, %v5070
    %v5072 = vpop.f32.mrf.mxu0
    %v5073 = vadd.f32 %v3793, %v5072
    %5074 = vdwg.mxu0
    %5075 = vmatpush.bf16.msra.mxu0 %v4245
    %5076 = vmatpush.bf16.msra.mxu0 %v4241
    %5077 = vmatpush.bf16.msra.mxu0 %v4237
    %5078 = vmatpush.bf16.msra.mxu0 %v4233
    %5079 = vmatpush.bf16.msra.mxu0 %v4229
    %5080 = vmatpush.bf16.msra.mxu0 %v4225
    %5081 = vmatpush.bf16.msra.mxu0 %v4221
    %5082 = vmatpush.bf16.msra.mxu0 %v4217
    %5083 = vmatmul.bf16.gmra.mxu0 %v3629
    %v5084 = vpop.f32.mrf.mxu0
    %v5085 = vadd.f32 %v5036, %v5084
    %v5086 = vpop.f32.mrf.mxu0
    %v5087 = vadd.f32 %v5038, %v5086
    %5088 = vmatmul.bf16.gmra.mxu0 %v3633
    %v5089 = vpop.f32.mrf.mxu0
    %v5090 = vadd.f32 %v5041, %v5089
    %v5091 = vpop.f32.mrf.mxu0
    %v5092 = vadd.f32 %v5043, %v5091
    %5093 = vmatmul.bf16.gmra.mxu0 %v3637
    %v5094 = vpop.f32.mrf.mxu0
    %v5095 = vadd.f32 %v5046, %v5094
    %v5096 = vpop.f32.mrf.mxu0
    %v5097 = vadd.f32 %v5048, %v5096
    %5098 = vmatmul.bf16.gmra.mxu0 %v3641
    %v5099 = vpop.f32.mrf.mxu0
    %v5100 = vadd.f32 %v5051, %v5099
    %v5101 = vpop.f32.mrf.mxu0
    %v5102 = vadd.f32 %v5053, %v5101
    %5103 = vmatmul.bf16.gmra.mxu0 %v3645
    %v5104 = vpop.f32.mrf.mxu0
    %v5105 = vadd.f32 %v5056, %v5104
    %v5106 = vpop.f32.mrf.mxu0
    %v5107 = vadd.f32 %v5058, %v5106
    %5108 = vmatmul.bf16.gmra.mxu0 %v3649
    %v5109 = vpop.f32.mrf.mxu0
    %v5110 = vadd.f32 %v5061, %v5109
    %v5111 = vpop.f32.mrf.mxu0
    %v5112 = vadd.f32 %v5063, %v5111
    %5113 = vmatmul.bf16.gmra.mxu0 %v3653
    %v5114 = vpop.f32.mrf.mxu0
    %v5115 = vadd.f32 %v5066, %v5114
    %v5116 = vpop.f32.mrf.mxu0
    %v5117 = vadd.f32 %v5068, %v5116
    %5118 = vmatmul.bf16.gmra.mxu0 %v3657
    %v5119 = vpop.f32.mrf.mxu0
    %v5120 = vadd.f32 %v5071, %v5119
    %v5121 = vpop.f32.mrf.mxu0
    %v5122 = vadd.f32 %v5073, %v5121
    %5123 = vdwg.mxu0
    %5124 = vmatpush.bf16.msra.mxu0 %v4277
    %5125 = vmatpush.bf16.msra.mxu0 %v4273
    %5126 = vmatpush.bf16.msra.mxu0 %v4269
    %5127 = vmatpush.bf16.msra.mxu0 %v4265
    %5128 = vmatpush.bf16.msra.mxu0 %v4261
    %5129 = vmatpush.bf16.msra.mxu0 %v4257
    %5130 = vmatpush.bf16.msra.mxu0 %v4253
    %5131 = vmatpush.bf16.msra.mxu0 %v4249
    %5132 = vmatmul.bf16.gmra.mxu0 %v3630
    %v5133 = vpop.f32.mrf.mxu0
    %v5134 = vadd.f32 %v5085, %v5133
    %v5135 = vpop.f32.mrf.mxu0
    %v5136 = vadd.f32 %v5087, %v5135
    %5137 = vmatmul.bf16.gmra.mxu0 %v3634
    %v5138 = vpop.f32.mrf.mxu0
    %v5139 = vadd.f32 %v5090, %v5138
    %v5140 = vpop.f32.mrf.mxu0
    %v5141 = vadd.f32 %v5092, %v5140
    %5142 = vmatmul.bf16.gmra.mxu0 %v3638
    %v5143 = vpop.f32.mrf.mxu0
    %v5144 = vadd.f32 %v5095, %v5143
    %v5145 = vpop.f32.mrf.mxu0
    %v5146 = vadd.f32 %v5097, %v5145
    %5147 = vmatmul.bf16.gmra.mxu0 %v3642
    %v5148 = vpop.f32.mrf.mxu0
    %v5149 = vadd.f32 %v5100, %v5148
    %v5150 = vpop.f32.mrf.mxu0
    %v5151 = vadd.f32 %v5102, %v5150
    %5152 = vmatmul.bf16.gmra.mxu0 %v3646
    %v5153 = vpop.f32.mrf.mxu0
    %v5154 = vadd.f32 %v5105, %v5153
    %v5155 = vpop.f32.mrf.mxu0
    %v5156 = vadd.f32 %v5107, %v5155
    %5157 = vmatmul.bf16.gmra.mxu0 %v3650
    %v5158 = vpop.f32.mrf.mxu0
    %v5159 = vadd.f32 %v5110, %v5158
    %v5160 = vpop.f32.mrf.mxu0
    %v5161 = vadd.f32 %v5112, %v5160
    %5162 = vmatmul.bf16.gmra.mxu0 %v3654
    %v5163 = vpop.f32.mrf.mxu0
    %v5164 = vadd.f32 %v5115, %v5163
    %v5165 = vpop.f32.mrf.mxu0
    %v5166 = vadd.f32 %v5117, %v5165
    %5167 = vmatmul.bf16.gmra.mxu0 %v3658
    %v5168 = vpop.f32.mrf.mxu0
    %v5169 = vadd.f32 %v5120, %v5168
    %v5170 = vpop.f32.mrf.mxu0
    %v5171 = vadd.f32 %v5122, %v5170
    %5172 = vdwg.mxu0
    %5173 = vmatpush.bf16.msra.mxu0 %v4309
    %5174 = vmatpush.bf16.msra.mxu0 %v4305
    %5175 = vmatpush.bf16.msra.mxu0 %v4301
    %5176 = vmatpush.bf16.msra.mxu0 %v4297
    %5177 = vmatpush.bf16.msra.mxu0 %v4293
    %5178 = vmatpush.bf16.msra.mxu0 %v4289
    %5179 = vmatpush.bf16.msra.mxu0 %v4285
    %5180 = vmatpush.bf16.msra.mxu0 %v4281
    %5181 = vmatmul.bf16.gmra.mxu0 %v3631
    %v5182 = vpop.f32.mrf.mxu0
    %v5183 = vadd.f32 %v5134, %v5182
    %v5184 = vpop.f32.mrf.mxu0
    %v5185 = vadd.f32 %v5136, %v5184
    %5186 = vmatmul.bf16.gmra.mxu0 %v3635
    %v5187 = vpop.f32.mrf.mxu0
    %v5188 = vadd.f32 %v5139, %v5187
    %v5189 = vpop.f32.mrf.mxu0
    %v5190 = vadd.f32 %v5141, %v5189
    %5191 = vmatmul.bf16.gmra.mxu0 %v3639
    %v5192 = vpop.f32.mrf.mxu0
    %v5193 = vadd.f32 %v5144, %v5192
    %v5194 = vpop.f32.mrf.mxu0
    %v5195 = vadd.f32 %v5146, %v5194
    %5196 = vmatmul.bf16.gmra.mxu0 %v3643
    %v5197 = vpop.f32.mrf.mxu0
    %v5198 = vadd.f32 %v5149, %v5197
    %v5199 = vpop.f32.mrf.mxu0
    %v5200 = vadd.f32 %v5151, %v5199
    %5201 = vmatmul.bf16.gmra.mxu0 %v3647
    %v5202 = vpop.f32.mrf.mxu0
    %v5203 = vadd.f32 %v5154, %v5202
    %v5204 = vpop.f32.mrf.mxu0
    %v5205 = vadd.f32 %v5156, %v5204
    %5206 = vmatmul.bf16.gmra.mxu0 %v3651
    %v5207 = vpop.f32.mrf.mxu0
    %v5208 = vadd.f32 %v5159, %v5207
    %v5209 = vpop.f32.mrf.mxu0
    %v5210 = vadd.f32 %v5161, %v5209
    %5211 = vmatmul.bf16.gmra.mxu0 %v3655
    %v5212 = vpop.f32.mrf.mxu0
    %v5213 = vadd.f32 %v5164, %v5212
    %v5214 = vpop.f32.mrf.mxu0
    %v5215 = vadd.f32 %v5166, %v5214
    %5216 = vmatmul.bf16.gmra.mxu0 %v3659
    %v5217 = vpop.f32.mrf.mxu0
    %v5218 = vadd.f32 %v5169, %v5217
    %v5219 = vpop.f32.mrf.mxu0
    %v5220 = vadd.f32 %v5171, %v5219
    %5221 = vdwg.mxu0
    %v5222 = vtanh.pop %v4595
    %v5223 = vtanh.pop %v4791
    %v5224 = vtanh.pop %v4597
    %v5225 = vtanh.pop %v4793
    %v5226 = vtanh.pop %v4600
    %v5227 = vtanh.pop %v4796
    %v5228 = vtanh.pop %v4602
    %v5229 = vtanh.pop %v4798
    %v5230 = vtanh.pop %v4605
    %v5231 = vtanh.pop %v4801
    %v5232 = vtanh.pop %v4607
    %v5233 = vtanh.pop %v4803
    %v5234 = vtanh.pop %v4610
    %v5235 = vtanh.pop %v4806
    %v5236 = vtanh.pop %v4612
    %v5237 = vtanh.pop %v4808
    %v5238 = vtanh.pop %v4615
    %v5239 = vtanh.pop %v4811
    %v5240 = vtanh.pop %v4617
    %v5241 = vtanh.pop %v4813
    %v5242 = vtanh.pop %v4620
    %v5243 = vtanh.pop %v4816
    %v5244 = vtanh.pop %v4622
    %v5245 = vtanh.pop %v4818
    %v5246 = vtanh.pop %v4625
    %v5247 = vtanh.pop %v4821
    %v5248 = vtanh.pop %v4627
    %v5249 = vtanh.pop %v4823
    %v5250 = vtanh.pop %v4630
    %v5251 = vtanh.pop %v4826
    %v5252 = vtanh.pop %v4632
    %v5253 = vtanh.pop %v4828
    %v5254 = vxor.u32 %v4987, 2147483648
    %v5255 = vxor.u32 %v5183, 2147483648
    %v5256 = vxor.u32 %v4989, 2147483648
    %v5257 = vxor.u32 %v5185, 2147483648
    %v5258 = vxor.u32 %v4992, 2147483648
    %v5259 = vxor.u32 %v5188, 2147483648
    %v5260 = vxor.u32 %v4994, 2147483648
    %v5261 = vxor.u32 %v5190, 2147483648
    %v5262 = vxor.u32 %v4997, 2147483648
    %v5263 = vxor.u32 %v5193, 2147483648
    %v5264 = vxor.u32 %v4999, 2147483648
    %v5265 = vxor.u32 %v5195, 2147483648
    %v5266 = vxor.u32 %v5002, 2147483648
    %v5267 = vxor.u32 %v5198, 2147483648
    %v5268 = vxor.u32 %v5004, 2147483648
    %v5269 = vxor.u32 %v5200, 2147483648
    %v5270 = vxor.u32 %v5007, 2147483648
    %v5271 = vxor.u32 %v5203, 2147483648
    %v5272 = vxor.u32 %v5009, 2147483648
    %v5273 = vxor.u32 %v5205, 2147483648
    %v5274 = vxor.u32 %v5012, 2147483648
    %v5275 = vxor.u32 %v5208, 2147483648
    %v5276 = vxor.u32 %v5014, 2147483648
    %v5277 = vxor.u32 %v5210, 2147483648
    %v5278 = vxor.u32 %v5017, 2147483648
    %v5279 = vxor.u32 %v5213, 2147483648
    %v5280 = vxor.u32 %v5019, 2147483648
    %v5281 = vxor.u32 %v5215, 2147483648
    %v5282 = vxor.u32 %v5022, 2147483648
    %v5283 = vxor.u32 %v5218, 2147483648
    %v5284 = vxor.u32 %v5024, 2147483648
    %v5285 = vxor.u32 %v5220, 2147483648
    %v5286 = vmul.f32 %v5254, 1.442695
    %v5287 = vpow.pop %v5286
    %v5288 = vmul.f32 %v5255, 1.442695
    %v5289 = vpow.pop %v5288
    %v5290 = vmul.f32 %v5256, 1.442695
    %v5291 = vpow.pop %v5290
    %v5292 = vmul.f32 %v5257, 1.442695
    %v5293 = vpow.pop %v5292
    %v5294 = vmul.f32 %v5258, 1.442695
    %v5295 = vpow.pop %v5294
    %v5296 = vmul.f32 %v5259, 1.442695
    %v5297 = vpow.pop %v5296
    %v5298 = vmul.f32 %v5260, 1.442695
    %v5299 = vpow.pop %v5298
    %v5300 = vmul.f32 %v5261, 1.442695
    %v5301 = vpow.pop %v5300
    %v5302 = vmul.f32 %v5262, 1.442695
    %v5303 = vpow.pop %v5302
    %v5304 = vmul.f32 %v5263, 1.442695
    %v5305 = vpow.pop %v5304
    %v5306 = vmul.f32 %v5264, 1.442695
    %v5307 = vpow.pop %v5306
    %v5308 = vmul.f32 %v5265, 1.442695
    %v5309 = vpow.pop %v5308
    %v5310 = vmul.f32 %v5266, 1.442695
    %v5311 = vpow.pop %v5310
    %v5312 = vmul.f32 %v5267, 1.442695
    %v5313 = vpow.pop %v5312
    %v5314 = vmul.f32 %v5268, 1.442695
    %v5315 = vpow.pop %v5314
    %v5316 = vmul.f32 %v5269, 1.442695
    %v5317 = vpow.pop %v5316
    %v5318 = vmul.f32 %v5270, 1.442695
    %v5319 = vpow.pop %v5318
    %v5320 = vmul.f32 %v5271, 1.442695
    %v5321 = vpow.pop %v5320
    %v5322 = vmul.f32 %v5272, 1.442695
    %v5323 = vpow.pop %v5322
    %v5324 = vmul.f32 %v5273, 1.442695
    %v5325 = vpow.pop %v5324
    %v5326 = vmul.f32 %v5274, 1.442695
    %v5327 = vpow.pop %v5326
    %v5328 = vmul.f32 %v5275, 1.442695
    %v5329 = vpow.pop %v5328
    %v5330 = vmul.f32 %v5276, 1.442695
    %v5331 = vpow.pop %v5330
    %v5332 = vmul.f32 %v5277, 1.442695
    %v5333 = vpow.pop %v5332
    %v5334 = vmul.f32 %v5278, 1.442695
    %v5335 = vpow.pop %v5334
    %v5336 = vmul.f32 %v5279, 1.442695
    %v5337 = vpow.pop %v5336
    %v5338 = vmul.f32 %v5280, 1.442695
    %v5339 = vpow.pop %v5338
    %v5340 = vmul.f32 %v5281, 1.442695
    %v5341 = vpow.pop %v5340
    %v5342 = vmul.f32 %v5282, 1.442695
    %v5343 = vpow.pop %v5342
    %v5344 = vmul.f32 %v5283, 1.442695
    %v5345 = vpow.pop %v5344
    %v5346 = vmul.f32 %v5284, 1.442695
    %v5347 = vpow.pop %v5346
    %v5348 = vmul.f32 %v5285, 1.442695
    %v5349 = vpow.pop %v5348
    %v5350 = vadd.f32 %v5287, 1.0
    %v5351 = vadd.f32 %v5289, 1.0
    %v5352 = vadd.f32 %v5291, 1.0
    %v5353 = vadd.f32 %v5293, 1.0
    %v5354 = vadd.f32 %v5295, 1.0
    %v5355 = vadd.f32 %v5297, 1.0
    %v5356 = vadd.f32 %v5299, 1.0
    %v5357 = vadd.f32 %v5301, 1.0
    %v5358 = vadd.f32 %v5303, 1.0
    %v5359 = vadd.f32 %v5305, 1.0
    %v5360 = vadd.f32 %v5307, 1.0
    %v5361 = vadd.f32 %v5309, 1.0
    %v5362 = vadd.f32 %v5311, 1.0
    %v5363 = vadd.f32 %v5313, 1.0
    %v5364 = vadd.f32 %v5315, 1.0
    %v5365 = vadd.f32 %v5317, 1.0
    %v5366 = vadd.f32 %v5319, 1.0
    %v5367 = vadd.f32 %v5321, 1.0
    %v5368 = vadd.f32 %v5323, 1.0
    %v5369 = vadd.f32 %v5325, 1.0
    %v5370 = vadd.f32 %v5327, 1.0
    %v5371 = vadd.f32 %v5329, 1.0
    %v5372 = vadd.f32 %v5331, 1.0
    %v5373 = vadd.f32 %v5333, 1.0
    %v5374 = vadd.f32 %v5335, 1.0
    %v5375 = vadd.f32 %v5337, 1.0
    %v5376 = vadd.f32 %v5339, 1.0
    %v5377 = vadd.f32 %v5341, 1.0
    %v5378 = vadd.f32 %v5343, 1.0
    %v5379 = vadd.f32 %v5345, 1.0
    %v5380 = vadd.f32 %v5347, 1.0
    %v5381 = vadd.f32 %v5349, 1.0
    %v5382 = vrcp.pop %v5350
    %v5383 = vmul.f32 %v5350, %v5382
    %v5384 = vsub.f32 1.0, %v5383
    %v5385 = vmul.f32 %v5382, %v5384
    %v5386 = vadd.f32 %v5382, %v5385
    %vm5387 = vweird.f32 %v5350
    %vm5388 = vweird.f32 %v5382
    %vm5389 = vmor %vm5387, %vm5388
    %v5390 = vsel %vm5389, %v5382, %v5386
    %v5391 = vand.u32 2147483647, %v5350
    %vm5392 = vcmp.eq.f32.partialorder %v5391, 8.507059e+37
    %v5393 = vand.u32 %v5350, 2147483648
    %v5394 = vor.u32 1.1754944e-38, %v5393
    %v5395 = vsel %vm5392, %v5394, %v5390
    %v5396 = vmul.f32 1.0, %v5395
    %v5397 = vrcp.pop %v5351
    %v5398 = vmul.f32 %v5351, %v5397
    %v5399 = vsub.f32 1.0, %v5398
    %v5400 = vmul.f32 %v5397, %v5399
    %v5401 = vadd.f32 %v5397, %v5400
    %vm5402 = vweird.f32 %v5351
    %vm5403 = vweird.f32 %v5397
    %vm5404 = vmor %vm5402, %vm5403
    %v5405 = vsel %vm5404, %v5397, %v5401
    %v5406 = vand.u32 2147483647, %v5351
    %vm5407 = vcmp.eq.f32.partialorder %v5406, 8.507059e+37
    %v5408 = vand.u32 %v5351, 2147483648
    %v5409 = vor.u32 1.1754944e-38, %v5408
    %v5410 = vsel %vm5407, %v5409, %v5405
    %v5411 = vmul.f32 1.0, %v5410
    %v5412 = vrcp.pop %v5352
    %v5413 = vmul.f32 %v5352, %v5412
    %v5414 = vsub.f32 1.0, %v5413
    %v5415 = vmul.f32 %v5412, %v5414
    %v5416 = vadd.f32 %v5412, %v5415
    %vm5417 = vweird.f32 %v5352
    %vm5418 = vweird.f32 %v5412
    %vm5419 = vmor %vm5417, %vm5418
    %v5420 = vsel %vm5419, %v5412, %v5416
    %v5421 = vand.u32 2147483647, %v5352
    %vm5422 = vcmp.eq.f32.partialorder %v5421, 8.507059e+37
    %v5423 = vand.u32 %v5352, 2147483648
    %v5424 = vor.u32 1.1754944e-38, %v5423
    %v5425 = vsel %vm5422, %v5424, %v5420
    %v5426 = vmul.f32 1.0, %v5425
    %v5427 = vrcp.pop %v5353
    %v5428 = vmul.f32 %v5353, %v5427
    %v5429 = vsub.f32 1.0, %v5428
    %v5430 = vmul.f32 %v5427, %v5429
    %v5431 = vadd.f32 %v5427, %v5430
    %vm5432 = vweird.f32 %v5353
    %vm5433 = vweird.f32 %v5427
    %vm5434 = vmor %vm5432, %vm5433
    %v5435 = vsel %vm5434, %v5427, %v5431
    %v5436 = vand.u32 2147483647, %v5353
    %vm5437 = vcmp.eq.f32.partialorder %v5436, 8.507059e+37
    %v5438 = vand.u32 %v5353, 2147483648
    %v5439 = vor.u32 1.1754944e-38, %v5438
    %v5440 = vsel %vm5437, %v5439, %v5435
    %v5441 = vmul.f32 1.0, %v5440
    %v5442 = vrcp.pop %v5354
    %v5443 = vmul.f32 %v5354, %v5442
    %v5444 = vsub.f32 1.0, %v5443
    %v5445 = vmul.f32 %v5442, %v5444
    %v5446 = vadd.f32 %v5442, %v5445
    %vm5447 = vweird.f32 %v5354
    %vm5448 = vweird.f32 %v5442
    %vm5449 = vmor %vm5447, %vm5448
    %v5450 = vsel %vm5449, %v5442, %v5446
    %v5451 = vand.u32 2147483647, %v5354
    %vm5452 = vcmp.eq.f32.partialorder %v5451, 8.507059e+37
    %v5453 = vand.u32 %v5354, 2147483648
    %v5454 = vor.u32 1.1754944e-38, %v5453
    %v5455 = vsel %vm5452, %v5454, %v5450
    %v5456 = vmul.f32 1.0, %v5455
    %v5457 = vrcp.pop %v5355
    %v5458 = vmul.f32 %v5355, %v5457
    %v5459 = vsub.f32 1.0, %v5458
    %v5460 = vmul.f32 %v5457, %v5459
    %v5461 = vadd.f32 %v5457, %v5460
    %vm5462 = vweird.f32 %v5355
    %vm5463 = vweird.f32 %v5457
    %vm5464 = vmor %vm5462, %vm5463
    %v5465 = vsel %vm5464, %v5457, %v5461
    %v5466 = vand.u32 2147483647, %v5355
    %vm5467 = vcmp.eq.f32.partialorder %v5466, 8.507059e+37
    %v5468 = vand.u32 %v5355, 2147483648
    %v5469 = vor.u32 1.1754944e-38, %v5468
    %v5470 = vsel %vm5467, %v5469, %v5465
    %v5471 = vmul.f32 1.0, %v5470
    %v5472 = vrcp.pop %v5356
    %v5473 = vmul.f32 %v5356, %v5472
    %v5474 = vsub.f32 1.0, %v5473
    %v5475 = vmul.f32 %v5472, %v5474
    %v5476 = vadd.f32 %v5472, %v5475
    %vm5477 = vweird.f32 %v5356
    %vm5478 = vweird.f32 %v5472
    %vm5479 = vmor %vm5477, %vm5478
    %v5480 = vsel %vm5479, %v5472, %v5476
    %v5481 = vand.u32 2147483647, %v5356
    %vm5482 = vcmp.eq.f32.partialorder %v5481, 8.507059e+37
    %v5483 = vand.u32 %v5356, 2147483648
    %v5484 = vor.u32 1.1754944e-38, %v5483
    %v5485 = vsel %vm5482, %v5484, %v5480
    %v5486 = vmul.f32 1.0, %v5485
    %v5487 = vrcp.pop %v5357
    %v5488 = vmul.f32 %v5357, %v5487
    %v5489 = vsub.f32 1.0, %v5488
    %v5490 = vmul.f32 %v5487, %v5489
    %v5491 = vadd.f32 %v5487, %v5490
    %vm5492 = vweird.f32 %v5357
    %vm5493 = vweird.f32 %v5487
    %vm5494 = vmor %vm5492, %vm5493
    %v5495 = vsel %vm5494, %v5487, %v5491
    %v5496 = vand.u32 2147483647, %v5357
    %vm5497 = vcmp.eq.f32.partialorder %v5496, 8.507059e+37
    %v5498 = vand.u32 %v5357, 2147483648
    %v5499 = vor.u32 1.1754944e-38, %v5498
    %v5500 = vsel %vm5497, %v5499, %v5495
    %v5501 = vmul.f32 1.0, %v5500
    %v5502 = vrcp.pop %v5358
    %v5503 = vmul.f32 %v5358, %v5502
    %v5504 = vsub.f32 1.0, %v5503
    %v5505 = vmul.f32 %v5502, %v5504
    %v5506 = vadd.f32 %v5502, %v5505
    %vm5507 = vweird.f32 %v5358
    %vm5508 = vweird.f32 %v5502
    %vm5509 = vmor %vm5507, %vm5508
    %v5510 = vsel %vm5509, %v5502, %v5506
    %v5511 = vand.u32 2147483647, %v5358
    %vm5512 = vcmp.eq.f32.partialorder %v5511, 8.507059e+37
    %v5513 = vand.u32 %v5358, 2147483648
    %v5514 = vor.u32 1.1754944e-38, %v5513
    %v5515 = vsel %vm5512, %v5514, %v5510
    %v5516 = vmul.f32 1.0, %v5515
    %v5517 = vrcp.pop %v5359
    %v5518 = vmul.f32 %v5359, %v5517
    %v5519 = vsub.f32 1.0, %v5518
    %v5520 = vmul.f32 %v5517, %v5519
    %v5521 = vadd.f32 %v5517, %v5520
    %vm5522 = vweird.f32 %v5359
    %vm5523 = vweird.f32 %v5517
    %vm5524 = vmor %vm5522, %vm5523
    %v5525 = vsel %vm5524, %v5517, %v5521
    %v5526 = vand.u32 2147483647, %v5359
    %vm5527 = vcmp.eq.f32.partialorder %v5526, 8.507059e+37
    %v5528 = vand.u32 %v5359, 2147483648
    %v5529 = vor.u32 1.1754944e-38, %v5528
    %v5530 = vsel %vm5527, %v5529, %v5525
    %v5531 = vmul.f32 1.0, %v5530
    %v5532 = vrcp.pop %v5360
    %v5533 = vmul.f32 %v5360, %v5532
    %v5534 = vsub.f32 1.0, %v5533
    %v5535 = vmul.f32 %v5532, %v5534
    %v5536 = vadd.f32 %v5532, %v5535
    %vm5537 = vweird.f32 %v5360
    %vm5538 = vweird.f32 %v5532
    %vm5539 = vmor %vm5537, %vm5538
    %v5540 = vsel %vm5539, %v5532, %v5536
    %v5541 = vand.u32 2147483647, %v5360
    %vm5542 = vcmp.eq.f32.partialorder %v5541, 8.507059e+37
    %v5543 = vand.u32 %v5360, 2147483648
    %v5544 = vor.u32 1.1754944e-38, %v5543
    %v5545 = vsel %vm5542, %v5544, %v5540
    %v5546 = vmul.f32 1.0, %v5545
    %v5547 = vrcp.pop %v5361
    %v5548 = vmul.f32 %v5361, %v5547
    %v5549 = vsub.f32 1.0, %v5548
    %v5550 = vmul.f32 %v5547, %v5549
    %v5551 = vadd.f32 %v5547, %v5550
    %vm5552 = vweird.f32 %v5361
    %vm5553 = vweird.f32 %v5547
    %vm5554 = vmor %vm5552, %vm5553
    %v5555 = vsel %vm5554, %v5547, %v5551
    %v5556 = vand.u32 2147483647, %v5361
    %vm5557 = vcmp.eq.f32.partialorder %v5556, 8.507059e+37
    %v5558 = vand.u32 %v5361, 2147483648
    %v5559 = vor.u32 1.1754944e-38, %v5558
    %v5560 = vsel %vm5557, %v5559, %v5555
    %v5561 = vmul.f32 1.0, %v5560
    %v5562 = vrcp.pop %v5362
    %v5563 = vmul.f32 %v5362, %v5562
    %v5564 = vsub.f32 1.0, %v5563
    %v5565 = vmul.f32 %v5562, %v5564
    %v5566 = vadd.f32 %v5562, %v5565
    %vm5567 = vweird.f32 %v5362
    %vm5568 = vweird.f32 %v5562
    %vm5569 = vmor %vm5567, %vm5568
    %v5570 = vsel %vm5569, %v5562, %v5566
    %v5571 = vand.u32 2147483647, %v5362
    %vm5572 = vcmp.eq.f32.partialorder %v5571, 8.507059e+37
    %v5573 = vand.u32 %v5362, 2147483648
    %v5574 = vor.u32 1.1754944e-38, %v5573
    %v5575 = vsel %vm5572, %v5574, %v5570
    %v5576 = vmul.f32 1.0, %v5575
    %v5577 = vrcp.pop %v5363
    %v5578 = vmul.f32 %v5363, %v5577
    %v5579 = vsub.f32 1.0, %v5578
    %v5580 = vmul.f32 %v5577, %v5579
    %v5581 = vadd.f32 %v5577, %v5580
    %vm5582 = vweird.f32 %v5363
    %vm5583 = vweird.f32 %v5577
    %vm5584 = vmor %vm5582, %vm5583
    %v5585 = vsel %vm5584, %v5577, %v5581
    %v5586 = vand.u32 2147483647, %v5363
    %vm5587 = vcmp.eq.f32.partialorder %v5586, 8.507059e+37
    %v5588 = vand.u32 %v5363, 2147483648
    %v5589 = vor.u32 1.1754944e-38, %v5588
    %v5590 = vsel %vm5587, %v5589, %v5585
    %v5591 = vmul.f32 1.0, %v5590
    %v5592 = vrcp.pop %v5364
    %v5593 = vmul.f32 %v5364, %v5592
    %v5594 = vsub.f32 1.0, %v5593
    %v5595 = vmul.f32 %v5592, %v5594
    %v5596 = vadd.f32 %v5592, %v5595
    %vm5597 = vweird.f32 %v5364
    %vm5598 = vweird.f32 %v5592
    %vm5599 = vmor %vm5597, %vm5598
    %v5600 = vsel %vm5599, %v5592, %v5596
    %v5601 = vand.u32 2147483647, %v5364
    %vm5602 = vcmp.eq.f32.partialorder %v5601, 8.507059e+37
    %v5603 = vand.u32 %v5364, 2147483648
    %v5604 = vor.u32 1.1754944e-38, %v5603
    %v5605 = vsel %vm5602, %v5604, %v5600
    %v5606 = vmul.f32 1.0, %v5605
    %v5607 = vrcp.pop %v5365
    %v5608 = vmul.f32 %v5365, %v5607
    %v5609 = vsub.f32 1.0, %v5608
    %v5610 = vmul.f32 %v5607, %v5609
    %v5611 = vadd.f32 %v5607, %v5610
    %vm5612 = vweird.f32 %v5365
    %vm5613 = vweird.f32 %v5607
    %vm5614 = vmor %vm5612, %vm5613
    %v5615 = vsel %vm5614, %v5607, %v5611
    %v5616 = vand.u32 2147483647, %v5365
    %vm5617 = vcmp.eq.f32.partialorder %v5616, 8.507059e+37
    %v5618 = vand.u32 %v5365, 2147483648
    %v5619 = vor.u32 1.1754944e-38, %v5618
    %v5620 = vsel %vm5617, %v5619, %v5615
    %v5621 = vmul.f32 1.0, %v5620
    %v5622 = vrcp.pop %v5366
    %v5623 = vmul.f32 %v5366, %v5622
    %v5624 = vsub.f32 1.0, %v5623
    %v5625 = vmul.f32 %v5622, %v5624
    %v5626 = vadd.f32 %v5622, %v5625
    %vm5627 = vweird.f32 %v5366
    %vm5628 = vweird.f32 %v5622
    %vm5629 = vmor %vm5627, %vm5628
    %v5630 = vsel %vm5629, %v5622, %v5626
    %v5631 = vand.u32 2147483647, %v5366
    %vm5632 = vcmp.eq.f32.partialorder %v5631, 8.507059e+37
    %v5633 = vand.u32 %v5366, 2147483648
    %v5634 = vor.u32 1.1754944e-38, %v5633
    %v5635 = vsel %vm5632, %v5634, %v5630
    %v5636 = vmul.f32 1.0, %v5635
    %v5637 = vrcp.pop %v5367
    %v5638 = vmul.f32 %v5367, %v5637
    %v5639 = vsub.f32 1.0, %v5638
    %v5640 = vmul.f32 %v5637, %v5639
    %v5641 = vadd.f32 %v5637, %v5640
    %vm5642 = vweird.f32 %v5367
    %vm5643 = vweird.f32 %v5637
    %vm5644 = vmor %vm5642, %vm5643
    %v5645 = vsel %vm5644, %v5637, %v5641
    %v5646 = vand.u32 2147483647, %v5367
    %vm5647 = vcmp.eq.f32.partialorder %v5646, 8.507059e+37
    %v5648 = vand.u32 %v5367, 2147483648
    %v5649 = vor.u32 1.1754944e-38, %v5648
    %v5650 = vsel %vm5647, %v5649, %v5645
    %v5651 = vmul.f32 1.0, %v5650
    %v5652 = vrcp.pop %v5368
    %v5653 = vmul.f32 %v5368, %v5652
    %v5654 = vsub.f32 1.0, %v5653
    %v5655 = vmul.f32 %v5652, %v5654
    %v5656 = vadd.f32 %v5652, %v5655
    %vm5657 = vweird.f32 %v5368
    %vm5658 = vweird.f32 %v5652
    %vm5659 = vmor %vm5657, %vm5658
    %v5660 = vsel %vm5659, %v5652, %v5656
    %v5661 = vand.u32 2147483647, %v5368
    %vm5662 = vcmp.eq.f32.partialorder %v5661, 8.507059e+37
    %v5663 = vand.u32 %v5368, 2147483648
    %v5664 = vor.u32 1.1754944e-38, %v5663
    %v5665 = vsel %vm5662, %v5664, %v5660
    %v5666 = vmul.f32 1.0, %v5665
    %v5667 = vrcp.pop %v5369
    %v5668 = vmul.f32 %v5369, %v5667
    %v5669 = vsub.f32 1.0, %v5668
    %v5670 = vmul.f32 %v5667, %v5669
    %v5671 = vadd.f32 %v5667, %v5670
    %vm5672 = vweird.f32 %v5369
    %vm5673 = vweird.f32 %v5667
    %vm5674 = vmor %vm5672, %vm5673
    %v5675 = vsel %vm5674, %v5667, %v5671
    %v5676 = vand.u32 2147483647, %v5369
    %vm5677 = vcmp.eq.f32.partialorder %v5676, 8.507059e+37
    %v5678 = vand.u32 %v5369, 2147483648
    %v5679 = vor.u32 1.1754944e-38, %v5678
    %v5680 = vsel %vm5677, %v5679, %v5675
    %v5681 = vmul.f32 1.0, %v5680
    %v5682 = vrcp.pop %v5370
    %v5683 = vmul.f32 %v5370, %v5682
    %v5684 = vsub.f32 1.0, %v5683
    %v5685 = vmul.f32 %v5682, %v5684
    %v5686 = vadd.f32 %v5682, %v5685
    %vm5687 = vweird.f32 %v5370
    %vm5688 = vweird.f32 %v5682
    %vm5689 = vmor %vm5687, %vm5688
    %v5690 = vsel %vm5689, %v5682, %v5686
    %v5691 = vand.u32 2147483647, %v5370
    %vm5692 = vcmp.eq.f32.partialorder %v5691, 8.507059e+37
    %v5693 = vand.u32 %v5370, 2147483648
    %v5694 = vor.u32 1.1754944e-38, %v5693
    %v5695 = vsel %vm5692, %v5694, %v5690
    %v5696 = vmul.f32 1.0, %v5695
    %v5697 = vrcp.pop %v5371
    %v5698 = vmul.f32 %v5371, %v5697
    %v5699 = vsub.f32 1.0, %v5698
    %v5700 = vmul.f32 %v5697, %v5699
    %v5701 = vadd.f32 %v5697, %v5700
    %vm5702 = vweird.f32 %v5371
    %vm5703 = vweird.f32 %v5697
    %vm5704 = vmor %vm5702, %vm5703
    %v5705 = vsel %vm5704, %v5697, %v5701
    %v5706 = vand.u32 2147483647, %v5371
    %vm5707 = vcmp.eq.f32.partialorder %v5706, 8.507059e+37
    %v5708 = vand.u32 %v5371, 2147483648
    %v5709 = vor.u32 1.1754944e-38, %v5708
    %v5710 = vsel %vm5707, %v5709, %v5705
    %v5711 = vmul.f32 1.0, %v5710
    %v5712 = vrcp.pop %v5372
    %v5713 = vmul.f32 %v5372, %v5712
    %v5714 = vsub.f32 1.0, %v5713
    %v5715 = vmul.f32 %v5712, %v5714
    %v5716 = vadd.f32 %v5712, %v5715
    %vm5717 = vweird.f32 %v5372
    %vm5718 = vweird.f32 %v5712
    %vm5719 = vmor %vm5717, %vm5718
    %v5720 = vsel %vm5719, %v5712, %v5716
    %v5721 = vand.u32 2147483647, %v5372
    %vm5722 = vcmp.eq.f32.partialorder %v5721, 8.507059e+37
    %v5723 = vand.u32 %v5372, 2147483648
    %v5724 = vor.u32 1.1754944e-38, %v5723
    %v5725 = vsel %vm5722, %v5724, %v5720
    %v5726 = vmul.f32 1.0, %v5725
    %v5727 = vrcp.pop %v5373
    %v5728 = vmul.f32 %v5373, %v5727
    %v5729 = vsub.f32 1.0, %v5728
    %v5730 = vmul.f32 %v5727, %v5729
    %v5731 = vadd.f32 %v5727, %v5730
    %vm5732 = vweird.f32 %v5373
    %vm5733 = vweird.f32 %v5727
    %vm5734 = vmor %vm5732, %vm5733
    %v5735 = vsel %vm5734, %v5727, %v5731
    %v5736 = vand.u32 2147483647, %v5373
    %vm5737 = vcmp.eq.f32.partialorder %v5736, 8.507059e+37
    %v5738 = vand.u32 %v5373, 2147483648
    %v5739 = vor.u32 1.1754944e-38, %v5738
    %v5740 = vsel %vm5737, %v5739, %v5735
    %v5741 = vmul.f32 1.0, %v5740
    %v5742 = vrcp.pop %v5374
    %v5743 = vmul.f32 %v5374, %v5742
    %v5744 = vsub.f32 1.0, %v5743
    %v5745 = vmul.f32 %v5742, %v5744
    %v5746 = vadd.f32 %v5742, %v5745
    %vm5747 = vweird.f32 %v5374
    %vm5748 = vweird.f32 %v5742
    %vm5749 = vmor %vm5747, %vm5748
    %v5750 = vsel %vm5749, %v5742, %v5746
    %v5751 = vand.u32 2147483647, %v5374
    %vm5752 = vcmp.eq.f32.partialorder %v5751, 8.507059e+37
    %v5753 = vand.u32 %v5374, 2147483648
    %v5754 = vor.u32 1.1754944e-38, %v5753
    %v5755 = vsel %vm5752, %v5754, %v5750
    %v5756 = vmul.f32 1.0, %v5755
    %v5757 = vrcp.pop %v5375
    %v5758 = vmul.f32 %v5375, %v5757
    %v5759 = vsub.f32 1.0, %v5758
    %v5760 = vmul.f32 %v5757, %v5759
    %v5761 = vadd.f32 %v5757, %v5760
    %vm5762 = vweird.f32 %v5375
    %vm5763 = vweird.f32 %v5757
    %vm5764 = vmor %vm5762, %vm5763
    %v5765 = vsel %vm5764, %v5757, %v5761
    %v5766 = vand.u32 2147483647, %v5375
    %vm5767 = vcmp.eq.f32.partialorder %v5766, 8.507059e+37
    %v5768 = vand.u32 %v5375, 2147483648
    %v5769 = vor.u32 1.1754944e-38, %v5768
    %v5770 = vsel %vm5767, %v5769, %v5765
    %v5771 = vmul.f32 1.0, %v5770
    %v5772 = vrcp.pop %v5376
    %v5773 = vmul.f32 %v5376, %v5772
    %v5774 = vsub.f32 1.0, %v5773
    %v5775 = vmul.f32 %v5772, %v5774
    %v5776 = vadd.f32 %v5772, %v5775
    %vm5777 = vweird.f32 %v5376
    %vm5778 = vweird.f32 %v5772
    %vm5779 = vmor %vm5777, %vm5778
    %v5780 = vsel %vm5779, %v5772, %v5776
    %v5781 = vand.u32 2147483647, %v5376
    %vm5782 = vcmp.eq.f32.partialorder %v5781, 8.507059e+37
    %v5783 = vand.u32 %v5376, 2147483648
    %v5784 = vor.u32 1.1754944e-38, %v5783
    %v5785 = vsel %vm5782, %v5784, %v5780
    %v5786 = vmul.f32 1.0, %v5785
    %v5787 = vrcp.pop %v5377
    %v5788 = vmul.f32 %v5377, %v5787
    %v5789 = vsub.f32 1.0, %v5788
    %v5790 = vmul.f32 %v5787, %v5789
    %v5791 = vadd.f32 %v5787, %v5790
    %vm5792 = vweird.f32 %v5377
    %vm5793 = vweird.f32 %v5787
    %vm5794 = vmor %vm5792, %vm5793
    %v5795 = vsel %vm5794, %v5787, %v5791
    %v5796 = vand.u32 2147483647, %v5377
    %vm5797 = vcmp.eq.f32.partialorder %v5796, 8.507059e+37
    %v5798 = vand.u32 %v5377, 2147483648
    %v5799 = vor.u32 1.1754944e-38, %v5798
    %v5800 = vsel %vm5797, %v5799, %v5795
    %v5801 = vmul.f32 1.0, %v5800
    %v5802 = vrcp.pop %v5378
    %v5803 = vmul.f32 %v5378, %v5802
    %v5804 = vsub.f32 1.0, %v5803
    %v5805 = vmul.f32 %v5802, %v5804
    %v5806 = vadd.f32 %v5802, %v5805
    %vm5807 = vweird.f32 %v5378
    %vm5808 = vweird.f32 %v5802
    %vm5809 = vmor %vm5807, %vm5808
    %v5810 = vsel %vm5809, %v5802, %v5806
    %v5811 = vand.u32 2147483647, %v5378
    %vm5812 = vcmp.eq.f32.partialorder %v5811, 8.507059e+37
    %v5813 = vand.u32 %v5378, 2147483648
    %v5814 = vor.u32 1.1754944e-38, %v5813
    %v5815 = vsel %vm5812, %v5814, %v5810
    %v5816 = vmul.f32 1.0, %v5815
    %v5817 = vrcp.pop %v5379
    %v5818 = vmul.f32 %v5379, %v5817
    %v5819 = vsub.f32 1.0, %v5818
    %v5820 = vmul.f32 %v5817, %v5819
    %v5821 = vadd.f32 %v5817, %v5820
    %vm5822 = vweird.f32 %v5379
    %vm5823 = vweird.f32 %v5817
    %vm5824 = vmor %vm5822, %vm5823
    %v5825 = vsel %vm5824, %v5817, %v5821
    %v5826 = vand.u32 2147483647, %v5379
    %vm5827 = vcmp.eq.f32.partialorder %v5826, 8.507059e+37
    %v5828 = vand.u32 %v5379, 2147483648
    %v5829 = vor.u32 1.1754944e-38, %v5828
    %v5830 = vsel %vm5827, %v5829, %v5825
    %v5831 = vmul.f32 1.0, %v5830
    %v5832 = vrcp.pop %v5380
    %v5833 = vmul.f32 %v5380, %v5832
    %v5834 = vsub.f32 1.0, %v5833
    %v5835 = vmul.f32 %v5832, %v5834
    %v5836 = vadd.f32 %v5832, %v5835
    %vm5837 = vweird.f32 %v5380
    %vm5838 = vweird.f32 %v5832
    %vm5839 = vmor %vm5837, %vm5838
    %v5840 = vsel %vm5839, %v5832, %v5836
    %v5841 = vand.u32 2147483647, %v5380
    %vm5842 = vcmp.eq.f32.partialorder %v5841, 8.507059e+37
    %v5843 = vand.u32 %v5380, 2147483648
    %v5844 = vor.u32 1.1754944e-38, %v5843
    %v5845 = vsel %vm5842, %v5844, %v5840
    %v5846 = vmul.f32 1.0, %v5845
    %v5847 = vrcp.pop %v5381
    %v5848 = vmul.f32 %v5381, %v5847
    %v5849 = vsub.f32 1.0, %v5848
    %v5850 = vmul.f32 %v5847, %v5849
    %v5851 = vadd.f32 %v5847, %v5850
    %vm5852 = vweird.f32 %v5381
    %vm5853 = vweird.f32 %v5847
    %vm5854 = vmor %vm5852, %vm5853
    %v5855 = vsel %vm5854, %v5847, %v5851
    %v5856 = vand.u32 2147483647, %v5381
    %vm5857 = vcmp.eq.f32.partialorder %v5856, 8.507059e+37
    %v5858 = vand.u32 %v5381, 2147483648
    %v5859 = vor.u32 1.1754944e-38, %v5858
    %v5860 = vsel %vm5857, %v5859, %v5855
    %v5861 = vmul.f32 1.0, %v5860
    %v5862 = vmul.f32 %v5222, %v5396
    %v5863 = vmul.f32 %v5223, %v5411
    %v5864 = vmul.f32 %v5224, %v5426
    %v5865 = vmul.f32 %v5225, %v5441
    %v5866 = vmul.f32 %v5226, %v5456
    %v5867 = vmul.f32 %v5227, %v5471
    %v5868 = vmul.f32 %v5228, %v5486
    %v5869 = vmul.f32 %v5229, %v5501
    %v5870 = vmul.f32 %v5230, %v5516
    %v5871 = vmul.f32 %v5231, %v5531
    %v5872 = vmul.f32 %v5232, %v5546
    %v5873 = vmul.f32 %v5233, %v5561
    %v5874 = vmul.f32 %v5234, %v5576
    %v5875 = vmul.f32 %v5235, %v5591
    %v5876 = vmul.f32 %v5236, %v5606
    %v5877 = vmul.f32 %v5237, %v5621
    %v5878 = vmul.f32 %v5238, %v5636
    %v5879 = vmul.f32 %v5239, %v5651
    %v5880 = vmul.f32 %v5240, %v5666
    %v5881 = vmul.f32 %v5241, %v5681
    %v5882 = vmul.f32 %v5242, %v5696
    %v5883 = vmul.f32 %v5243, %v5711
    %v5884 = vmul.f32 %v5244, %v5726
    %v5885 = vmul.f32 %v5245, %v5741
    %v5886 = vmul.f32 %v5246, %v5756
    %v5887 = vmul.f32 %v5247, %v5771
    %v5888 = vmul.f32 %v5248, %v5786
    %v5889 = vmul.f32 %v5249, %v5801
    %v5890 = vmul.f32 %v5250, %v5816
    %v5891 = vmul.f32 %v5251, %v5831
    %v5892 = vmul.f32 %v5252, %v5846
    %v5893 = vmul.f32 %v5253, %v5861
    %v5894 = vld [vmem:[%s5] sm:$0x3]
    %v5895 = vld [vmem:[#allocation5] sm:$0x1]
    %5897 = vset.pattern.permute.xlu0 0
    %5898 = vperm.xlu0 %5897, %v5895
    %v5899 = vpop.permute.xlu0 %5898
    %v5901 = vperm.slane %v5899, 0
    %v5903 = vperm.slane %v5894, 0
    %v5904 = vperm.slane %v5894, 1
    %5907 = vmatpush.xpose.msra.mxu0 %v5892
    %5908 = vmatpush.xpose.msra.mxu0 %v5890
    %5909 = vmatpush.xpose.msra.mxu0 %v5888
    %5910 = vmatpush.xpose.msra.mxu0 %v5886
    %5911 = vmatpush.xpose.msra.mxu0 %v5884
    %5912 = vmatpush.xpose.msra.mxu0 %v5882
    %5913 = vmatpush.xpose.msra.mxu0 %v5880
    %5914 = vmatpush.xpose.msra.mxu0 %v5878
    %5915 = vmatpush.xpose.msra.mxu0 %v5876
    %5916 = vmatpush.xpose.msra.mxu0 %v5874
    %5917 = vmatpush.xpose.msra.mxu0 %v5872
    %5918 = vmatpush.xpose.msra.mxu0 %v5870
    %5919 = vmatpush.xpose.msra.mxu0 %v5868
    %5920 = vmatpush.xpose.msra.mxu0 %v5866
    %5921 = vmatpush.xpose.msra.mxu0 %v5864
    %5922 = vmatpush.xpose.msra.mxu0 %v5862
    %5923 = vmatmul.f32.gmra.mxu0 %v5903
    %v5924 = vpop.f32.mrf.mxu0
    %v5925 = vadd.f32 %v5901, %v5924
    %5926 = vdwg.mxu0
    %5927 = vmatpush.xpose.msra.mxu0 %v5893
    %5928 = vmatpush.xpose.msra.mxu0 %v5891
    %5929 = vmatpush.xpose.msra.mxu0 %v5889
    %5930 = vmatpush.xpose.msra.mxu0 %v5887
    %5931 = vmatpush.xpose.msra.mxu0 %v5885
    %5932 = vmatpush.xpose.msra.mxu0 %v5883
    %5933 = vmatpush.xpose.msra.mxu0 %v5881
    %5934 = vmatpush.xpose.msra.mxu0 %v5879
    %5935 = vmatpush.xpose.msra.mxu0 %v5877
    %5936 = vmatpush.xpose.msra.mxu0 %v5875
    %5937 = vmatpush.xpose.msra.mxu0 %v5873
    %5938 = vmatpush.xpose.msra.mxu0 %v5871
    %5939 = vmatpush.xpose.msra.mxu0 %v5869
    %5940 = vmatpush.xpose.msra.mxu0 %v5867
    %5941 = vmatpush.xpose.msra.mxu0 %v5865
    %5942 = vmatpush.xpose.msra.mxu0 %v5863
    %5943 = vmatmul.f32.gmra.mxu0 %v5904
    %v5944 = vpop.f32.mrf.mxu0
    %v5945 = vadd.f32 %v5925, %v5944
    %5946 = vdwg.mxu0
    %v5947 = vlaneseq
    %v5948 = vand.u32 %v5947, 127
    %s5949 = smul.u32 0, 128
    %v5950 = vstv %s5949
    %v5951 = vadd.s32 %v5948, %v5950
    %vm5952 = vcmp.lt.s32.totalorder %v5951, 64
    %v5953 = vsel %vm5952, %v5945, -1e+30
    %s5954 = sshra.s32 %s5949, 7
    %s5955 = sand.u32 %s5949, 127
    %s5956 = scalar_lea.vmem [#allocation9], %s5954
    %5957 = vst [vmem:[%s5956] sm:$0x1] %v5953
    %v5958 = vld [vmem:[#allocation2] sm:$0x1]
    %vm5959 = vcmask 1040384
    %v5960 = vsel %vm5959, %v5953, -inf
    %5961 = vmax.xlane.f32.xlu0 %v5960
    %v5962 = vpop.xlane.xlu0 %5961
    %v5963 = vmax.f32 %v5958, %v5962
    %v5964 = vsub.f32 %v5958, %v5963
    %v5965 = vmul.f32 %v5964, 1.442695
    %v5966 = vpow.pop %v5965
    %5968 = vset.pattern.permute.xlu0 0
    %5969 = vperm.xlu0 %5968, %v5963
    %v5970 = vpop.permute.xlu0 %5969
    %v5972 = vperm.slane %v5970, 0
    %v5973 = vsub.f32 %v5953, %v5972
    %v5974 = vmul.f32 %v5973, 1.442695
    %v5975 = vpow.pop %v5974
    %v5976 = vld [vmem:[#allocation3] sm:$0x1]
    %v5977 = vmul.f32 %v5966, %v5976
    %v5978 = vsel %vm5959, %v5975, 0.0
    %5979 = vadd.xlane.f32.xlu0 %v5978
    %v5980 = vpop.xlane.xlu0 %5979
    %v5981 = vadd.f32 %v5977, %v5980
    %vm5982 = vcmask 0
    %5983 = vst.msk [vmem:[#allocation3] sm:$0x1] %vm5982, %v5981
    %v5984 = vld [vmem:[#allocation4] sm:$0xf]
    %5986 = vset.pattern.permute.xlu0 0
    %5987 = vperm.xlu0 %5986, %v5966
    %v5988 = vpop.permute.xlu0 %5987
    %v5990 = vperm.slane %v5988, 0
    %v5991 = vmul.f32 %v5990, %v5984
    %v5992 = vpack.c.bf16 %v5975, %v5975
    %5993 = vmatpush.bf16.msra.mxu0 %v3656
    %5994 = vmatpush.bf16.msra.mxu0 %v3652
    %5995 = vmatpush.bf16.msra.mxu0 %v3648
    %5996 = vmatpush.bf16.msra.mxu0 %v3644
    %5997 = vmatpush.bf16.msra.mxu0 %v3640
    %5998 = vmatpush.bf16.msra.mxu0 %v3636
    %5999 = vmatpush.bf16.msra.mxu0 %v3632
    %6000 = vmatpush.bf16.msra.mxu0 %v3628
    %6001 = vmatmul.bf16.gmra.mxu0 %v5992
    %v6002 = vpop.f32.mrf.mxu0
    %v6003 = vadd.f32 0.0, %v6002
    %v6004 = vpop.f32.mrf.mxu0
    %6005 = vdwg.mxu0
    %6006 = vmatpush.bf16.msra.mxu0 %v3657
    %6007 = vmatpush.bf16.msra.mxu0 %v3653
    %6008 = vmatpush.bf16.msra.mxu0 %v3649
    %6009 = vmatpush.bf16.msra.mxu0 %v3645
    %6010 = vmatpush.bf16.msra.mxu0 %v3641
    %6011 = vmatpush.bf16.msra.mxu0 %v3637
    %6012 = vmatpush.bf16.msra.mxu0 %v3633
    %6013 = vmatpush.bf16.msra.mxu0 %v3629
    %6014 = vmatmul.bf16.gmra.mxu0 %v5992
    %v6015 = vpop.f32.mrf.mxu0
    %v6016 = vadd.f32 0.0, %v6015
    %v6017 = vpop.f32.mrf.mxu0
    %6018 = vdwg.mxu0
    %6019 = vmatpush.bf16.msra.mxu0 %v3658
    %6020 = vmatpush.bf16.msra.mxu0 %v3654
    %6021 = vmatpush.bf16.msra.mxu0 %v3650
    %6022 = vmatpush.bf16.msra.mxu0 %v3646
    %6023 = vmatpush.bf16.msra.mxu0 %v3642
    %6024 = vmatpush.bf16.msra.mxu0 %v3638
    %6025 = vmatpush.bf16.msra.mxu0 %v3634
    %6026 = vmatpush.bf16.msra.mxu0 %v3630
    %6027 = vmatmul.bf16.gmra.mxu0 %v5992
    %v6028 = vpop.f32.mrf.mxu0
    %v6029 = vadd.f32 0.0, %v6028
    %v6030 = vpop.f32.mrf.mxu0
    %6031 = vdwg.mxu0
    %6032 = vmatpush.bf16.msra.mxu0 %v3659
    %6033 = vmatpush.bf16.msra.mxu0 %v3655
    %6034 = vmatpush.bf16.msra.mxu0 %v3651
    %6035 = vmatpush.bf16.msra.mxu0 %v3647
    %6036 = vmatpush.bf16.msra.mxu0 %v3643
    %6037 = vmatpush.bf16.msra.mxu0 %v3639
    %6038 = vmatpush.bf16.msra.mxu0 %v3635
    %6039 = vmatpush.bf16.msra.mxu0 %v3631
    %6040 = vmatmul.bf16.gmra.mxu0 %v5992
    %v6041 = vpop.f32.mrf.mxu0
    %v6042 = vadd.f32 0.0, %v6041
    %v6043 = vpop.f32.mrf.mxu0
    %6044 = vdwg.mxu0
    %v6049 = vrot.slane %v6016, 7
    %v6050 = vrot.slane %v6029, 6
    %v6051 = vrot.slane %v6042, 5
    %v6052 = vsel %vm5959, %v6003, %v6049
    %vm6053 = vcmask 1042434
    %v6054 = vsel %vm6053, %v6050, %v6051
    %vm6055 = vcmask 1041408
    %v6056 = vsel %vm6055, %v6052, %v6054
    %v6058 = vadd.f32 %v5991, %v6056
    %v6059 = vlaneseq
    %vm6060 = vcmp.ge.s32.totalorder %v6059, 0
    %vm6061 = vcmp.lt.s32.totalorder %v6059, 512
    %vm6062 = vmand %vm6060, %vm6061
    %6063 = vst.msk [vmem:[#allocation4] sm:$0xf] %vm6062, %v6058
    %6064 = vst.msk [vmem:[#allocation2] sm:$0x1] %vm5982, %v5963
    // Predicated region
    $region46: #{bmil_forward.1} parent=1 // pred_check
      %p6065 = pneg %p54
    $region47: #{bmil_forward.1} parent=1 // pred_check_branch
      %6067 = sbr.rel (%p6065) target = $region49
    $region48: #{bmil_forward.1} parent=1 // pred_region
      %v6068 = vld [vmem:[#allocation3] sm:$0x1]
      %v6069 = vrcp.pop %v6068
      %v6070 = vmul.f32 %v6068, %v6069
      %v6071 = vsub.f32 1.0, %v6070
      %v6072 = vmul.f32 %v6069, %v6071
      %v6073 = vadd.f32 %v6069, %v6072
      %vm6074 = vweird.f32 %v6068
      %vm6075 = vweird.f32 %v6069
      %vm6076 = vmor %vm6074, %vm6075
      %v6077 = vsel %vm6076, %v6069, %v6073
      %v6078 = vand.u32 2147483647, %v6068
      %vm6079 = vcmp.eq.f32.partialorder %v6078, 8.507059e+37
      %v6080 = vand.u32 %v6068, 2147483648
      %v6081 = vor.u32 1.1754944e-38, %v6080
      %v6082 = vsel %vm6079, %v6081, %v6077
      %v6083 = vmul.f32 1.0, %v6082
      %v6084 = vld [vmem:[#allocation9] sm:$0x1]
      %v6085 = vld [vmem:[#allocation2] sm:$0x1]
      %6087 = vset.pattern.permute.xlu0 0
      %6088 = vperm.xlu0 %6087, %v6085
      %v6089 = vpop.permute.xlu0 %6088
      %v6091 = vperm.slane %v6089, 0
      %v6092 = vsub.f32 %v6084, %v6091
      %v6093 = vmul.f32 %v6092, 1.442695
      %v6094 = vpow.pop %v6093
      %6096 = vset.pattern.permute.xlu0 0
      %6097 = vperm.xlu0 %6096, %v6083
      %v6098 = vpop.permute.xlu0 %6097
      %v6100 = vperm.slane %v6098, 0
      %v6101 = vmul.f32 %v6094, %v6100
      %6102 = vst [vmem:[#allocation9] sm:$0x1] %v6101
      %v6103 = vld [vmem:[#allocation4] sm:$0xf]
      %v6104 = vmul.f32 %v6103, %v6100
      %v6105 = vld [vmem:[%s7] sm:$0xff]
      %v6106 = vld [vmem:[%s7 + $0x8] sm:$0xff]
      %v6107 = vld [vmem:[%s7 + $0x10] sm:$0xff]
      %v6108 = vld [vmem:[%s7 + $0x18] sm:$0xff]
      %v6109 = vld [vmem:[%s7 + $0x20] sm:$0xff]
      %v6110 = vld [vmem:[%s7 + $0x28] sm:$0xff]
      %v6111 = vld [vmem:[%s7 + $0x30] sm:$0xff]
      %v6112 = vld [vmem:[%s7 + $0x38] sm:$0xff]
      %v6113 = vld [vmem:[%s7 + $0x40] sm:$0xff]
      %v6114 = vld [vmem:[%s7 + $0x48] sm:$0xff]
      %v6115 = vld [vmem:[%s7 + $0x50] sm:$0xff]
      %v6116 = vld [vmem:[%s7 + $0x58] sm:$0xff]
      %v6117 = vld [vmem:[%s7 + $0x60] sm:$0xff]
      %v6118 = vld [vmem:[%s7 + $0x68] sm:$0xff]
      %v6119 = vld [vmem:[%s7 + $0x70] sm:$0xff]
      %v6120 = vld [vmem:[%s7 + $0x78] sm:$0xff]
      %v6121 = vld [vmem:[%s7 + $0x80] sm:$0xff]
      %v6122 = vld [vmem:[%s7 + $0x88] sm:$0xff]
      %v6123 = vld [vmem:[%s7 + $0x90] sm:$0xff]
      %v6124 = vld [vmem:[%s7 + $0x98] sm:$0xff]
      %v6125 = vld [vmem:[%s7 + $0xa0] sm:$0xff]
      %v6126 = vld [vmem:[%s7 + $0xa8] sm:$0xff]
      %v6127 = vld [vmem:[%s7 + $0xb0] sm:$0xff]
      %v6128 = vld [vmem:[%s7 + $0xb8] sm:$0xff]
      %v6129 = vld [vmem:[%s7 + $0xc0] sm:$0xff]
      %v6130 = vld [vmem:[%s7 + $0xc8] sm:$0xff]
      %v6131 = vld [vmem:[%s7 + $0xd0] sm:$0xff]
      %v6132 = vld [vmem:[%s7 + $0xd8] sm:$0xff]
      %v6133 = vld [vmem:[%s7 + $0xe0] sm:$0xff]
      %v6134 = vld [vmem:[%s7 + $0xe8] sm:$0xff]
      %v6135 = vld [vmem:[%s7 + $0xf0] sm:$0xff]
      %v6136 = vld [vmem:[%s7 + $0xf8] sm:$0xff]
      %v6137 = vld [vmem:[%s7 + $0x100] sm:$0xff]
      %v6138 = vld [vmem:[%s7 + $0x108] sm:$0xff]
      %v6139 = vld [vmem:[%s7 + $0x110] sm:$0xff]
      %v6140 = vld [vmem:[%s7 + $0x118] sm:$0xff]
      %v6141 = vld [vmem:[%s7 + $0x120] sm:$0xff]
      %v6142 = vld [vmem:[%s7 + $0x128] sm:$0xff]
      %v6143 = vld [vmem:[%s7 + $0x130] sm:$0xff]
      %v6144 = vld [vmem:[%s7 + $0x138] sm:$0xff]
      %v6145 = vld [vmem:[%s7 + $0x140] sm:$0xff]
      %v6146 = vld [vmem:[%s7 + $0x148] sm:$0xff]
      %v6147 = vld [vmem:[%s7 + $0x150] sm:$0xff]
      %v6148 = vld [vmem:[%s7 + $0x158] sm:$0xff]
      %v6149 = vld [vmem:[%s7 + $0x160] sm:$0xff]
      %v6150 = vld [vmem:[%s7 + $0x168] sm:$0xff]
      %v6151 = vld [vmem:[%s7 + $0x170] sm:$0xff]
      %v6152 = vld [vmem:[%s7 + $0x178] sm:$0xff]
      %v6153 = vld [vmem:[%s7 + $0x180] sm:$0xff]
      %v6154 = vld [vmem:[%s7 + $0x188] sm:$0xff]
      %v6155 = vld [vmem:[%s7 + $0x190] sm:$0xff]
      %v6156 = vld [vmem:[%s7 + $0x198] sm:$0xff]
      %v6157 = vld [vmem:[%s7 + $0x1a0] sm:$0xff]
      %v6158 = vld [vmem:[%s7 + $0x1a8] sm:$0xff]
      %v6159 = vld [vmem:[%s7 + $0x1b0] sm:$0xff]
      %v6160 = vld [vmem:[%s7 + $0x1b8] sm:$0xff]
      %v6161 = vld [vmem:[%s7 + $0x1c0] sm:$0xff]
      %v6162 = vld [vmem:[%s7 + $0x1c8] sm:$0xff]
      %v6163 = vld [vmem:[%s7 + $0x1d0] sm:$0xff]
      %v6164 = vld [vmem:[%s7 + $0x1d8] sm:$0xff]
      %v6165 = vld [vmem:[%s7 + $0x1e0] sm:$0xff]
      %v6166 = vld [vmem:[%s7 + $0x1e8] sm:$0xff]
      %v6167 = vld [vmem:[%s7 + $0x1f0] sm:$0xff]
      %v6168 = vld [vmem:[%s7 + $0x1f8] sm:$0xff]
      %v6169 = vld [vmem:[%s8] sm:$0x1]
      %v6171 = vperm.slane %v6104, 0
      %v6172 = vperm.slane %v6104, 1
      %v6173 = vperm.slane %v6104, 2
      %v6174 = vperm.slane %v6104, 3
      %6179 = vmatpush.msra.mxu0 %v6120
      %6180 = vmatpush.msra.mxu0 %v6119
      %6181 = vmatpush.msra.mxu0 %v6118
      %6182 = vmatpush.msra.mxu0 %v6117
      %6183 = vmatpush.msra.mxu0 %v6116
      %6184 = vmatpush.msra.mxu0 %v6115
      %6185 = vmatpush.msra.mxu0 %v6114
      %6186 = vmatpush.msra.mxu0 %v6113
      %6187 = vmatpush.msra.mxu0 %v6112
      %6188 = vmatpush.msra.mxu0 %v6111
      %6189 = vmatpush.msra.mxu0 %v6110
      %6190 = vmatpush.msra.mxu0 %v6109
      %6191 = vmatpush.msra.mxu0 %v6108
      %6192 = vmatpush.msra.mxu0 %v6107
      %6193 = vmatpush.msra.mxu0 %v6106
      %6194 = vmatpush.msra.mxu0 %v6105
      %6195 = vmatmul.f32.gmra.mxu0 %v6171
      %v6196 = vpop.f32.mrf.mxu0
      %v6197 = vadd.f32 %v6169, %v6196
      %6198 = vdwg.mxu0
      %6199 = vmatpush.msra.mxu0 %v6136
      %6200 = vmatpush.msra.mxu0 %v6135
      %6201 = vmatpush.msra.mxu0 %v6134
      %6202 = vmatpush.msra.mxu0 %v6133
      %6203 = vmatpush.msra.mxu0 %v6132
      %6204 = vmatpush.msra.mxu0 %v6131
      %6205 = vmatpush.msra.mxu0 %v6130
      %6206 = vmatpush.msra.mxu0 %v6129
      %6207 = vmatpush.msra.mxu0 %v6128
      %6208 = vmatpush.msra.mxu0 %v6127
      %6209 = vmatpush.msra.mxu0 %v6126
      %6210 = vmatpush.msra.mxu0 %v6125
      %6211 = vmatpush.msra.mxu0 %v6124
      %6212 = vmatpush.msra.mxu0 %v6123
      %6213 = vmatpush.msra.mxu0 %v6122
      %6214 = vmatpush.msra.mxu0 %v6121
      %6215 = vmatmul.f32.gmra.mxu0 %v6172
      %v6216 = vpop.f32.mrf.mxu0
      %v6217 = vadd.f32 %v6197, %v6216
      %6218 = vdwg.mxu0
      %6219 = vmatpush.msra.mxu0 %v6152
      %6220 = vmatpush.msra.mxu0 %v6151
      %6221 = vmatpush.msra.mxu0 %v6150
      %6222 = vmatpush.msra.mxu0 %v6149
      %6223 = vmatpush.msra.mxu0 %v6148
      %6224 = vmatpush.msra.mxu0 %v6147
      %6225 = vmatpush.msra.mxu0 %v6146
      %6226 = vmatpush.msra.mxu0 %v6145
      %6227 = vmatpush.msra.mxu0 %v6144
      %6228 = vmatpush.msra.mxu0 %v6143
      %6229 = vmatpush.msra.mxu0 %v6142
      %6230 = vmatpush.msra.mxu0 %v6141
      %6231 = vmatpush.msra.mxu0 %v6140
      %6232 = vmatpush.msra.mxu0 %v6139
      %6233 = vmatpush.msra.mxu0 %v6138
      %6234 = vmatpush.msra.mxu0 %v6137
      %6235 = vmatmul.f32.gmra.mxu0 %v6173
      %v6236 = vpop.f32.mrf.mxu0
      %v6237 = vadd.f32 %v6217, %v6236
      %6238 = vdwg.mxu0
      %6239 = vmatpush.msra.mxu0 %v6168
      %6240 = vmatpush.msra.mxu0 %v6167
      %6241 = vmatpush.msra.mxu0 %v6166
      %6242 = vmatpush.msra.mxu0 %v6165
      %6243 = vmatpush.msra.mxu0 %v6164
      %6244 = vmatpush.msra.mxu0 %v6163
      %6245 = vmatpush.msra.mxu0 %v6162
      %6246 = vmatpush.msra.mxu0 %v6161
      %6247 = vmatpush.msra.mxu0 %v6160
      %6248 = vmatpush.msra.mxu0 %v6159
      %6249 = vmatpush.msra.mxu0 %v6158
      %6250 = vmatpush.msra.mxu0 %v6157
      %6251 = vmatpush.msra.mxu0 %v6156
      %6252 = vmatpush.msra.mxu0 %v6155
      %6253 = vmatpush.msra.mxu0 %v6154
      %6254 = vmatpush.msra.mxu0 %v6153
      %6255 = vmatmul.f32.gmra.mxu0 %v6174
      %v6256 = vpop.f32.mrf.mxu0
      %v6257 = vadd.f32 %v6237, %v6256
      %6258 = vdwg.mxu0
      %vm6259 = vcmask 8192
      %6260 = vst.msk [vmem:[%s9] sm:$0x1] %vm6259, %v6257
      %v6261 = vsel %vm6259, %v6257, -inf
      %6262 = vmax.xlane.f32.xlu0 %v6261
      %v6263 = vpop.xlane.xlu0 %6262
      %v6264 = vsub.f32 %v6257, %v6263
      %v6265 = vmul.f32 %v6264, 1.442695
      %v6266 = vpow.pop %v6265
      %v6267 = vsel %vm6259, %v6266, 0.0
      %6268 = vadd.xlane.f32.xlu0 %v6267
      %v6269 = vpop.xlane.xlu0 %6268
      %v6270 = vrcp.pop %v6269
      %v6271 = vmul.f32 %v6269, %v6270
      %v6272 = vsub.f32 1.0, %v6271
      %v6273 = vmul.f32 %v6270, %v6272
      %v6274 = vadd.f32 %v6270, %v6273
      %vm6275 = vweird.f32 %v6269
      %vm6276 = vweird.f32 %v6270
      %vm6277 = vmor %vm6275, %vm6276
      %v6278 = vsel %vm6277, %v6270, %v6274
      %v6279 = vand.u32 2147483647, %v6269
      %vm6280 = vcmp.eq.f32.partialorder %v6279, 8.507059e+37
      %v6281 = vand.u32 %v6269, 2147483648
      %v6282 = vor.u32 1.1754944e-38, %v6281
      %v6283 = vsel %vm6280, %v6282, %v6278
      %v6284 = vmul.f32 %v6266, %v6283
      %6285 = vst.msk [vmem:[%s10] sm:$0x1] %vm6259, %v6284
    $region49: #{bmil_forward.1} parent=1 // pred_fallthru
      _
    // Predicated region
    $region50: #{bmil_forward.1} parent=1 // pred_check
      _
    $region51: #{bmil_forward.1} parent=1 // pred_check_branch
      %6287 = sbr.rel (0) target = $region53
    $region52: #{bmil_forward.1} parent=1 // pred_region
      _
    $region53: #{bmil_forward.1} parent=1 // pred_fallthru
      _
    // Predicated region
    $region54: #{bmil_forward.1} parent=1 // pred_check
      _
    $region55: #{bmil_forward.1} parent=1 // pred_check_branch
      %6289 = sbr.rel (0) target = $region57
    $region56: #{bmil_forward.1} parent=1 // pred_region
      _
    $region57: #{bmil_forward.1} parent=1 // pred_fallthru
      _
    // Predicated region
    $region58: #{bmil_forward.1} parent=1 // pred_check
      _
    $region59: #{bmil_forward.1} parent=1 // pred_check_branch
      %6291 = sbr.rel (0) target = $region61
    $region60: #{bmil_forward.1} parent=1 // pred_region
      %6293 = vsyncadd [#allocation8], 0
      %s6295 = sshll.u32 [#allocation9], 4
      %s6296 = int_to_ptr.vmem [resolvable:$true] %s6295
      %s6297 = sshll.u32 %s11, 4
      %s6298 = int_to_ptr.hbm [resolvable:$true] %s6297
      %6300 = dma.vmem_to_hbm [thread:$0]  %s6296, 16, %s6298, [#allocation8]
    $region61: #{bmil_forward.1} parent=1 // pred_fallthru
      _
    // Predicated region
    $region62: #{bmil_forward.1} parent=1 // pred_check
      _
    $region63: #{bmil_forward.1} parent=1 // pred_check_branch
      %6302 = sbr.rel (0) target = $region65
    $region64: #{bmil_forward.1} parent=1 // pred_region
      _
    $region65: #{bmil_forward.1} parent=1 // pred_fallthru
      _
    // Predicated region
    $region66: #{bmil_forward.1} parent=1 // pred_check
      _
    $region67: #{bmil_forward.1} parent=1 // pred_check_branch
      %6304 = sbr.rel (0) target = $region69
    $region68: #{bmil_forward.1} parent=1 // pred_region
      _
    $region69: #{bmil_forward.1} parent=1 // pred_fallthru
      _
    // Predicated region
    $region70: #{bmil_forward.1} parent=1 // pred_check
      _
    $region71: #{bmil_forward.1} parent=1 // pred_check_branch
      %6306 = sbr.rel (0) target = $region73
    $region72: #{bmil_forward.1} parent=1 // pred_region
      %6308 = dma.done [#allocation8], 16
    $region73: #{bmil_forward.1} parent=1 // pred_fallthru
      _
    %6309 = vsyncpa [#allocation7], 1
    %6310 = vsyncpa [#allocation8], 1

</llo_original>
